<compile_context>
chip_gen: v6e
topology: v6e:2x2x1
jax: 0.10.0
libtpu: 0.0.40
codegen_flags: <defaults>
</compile_context>

<pallas_src>
import jax
import jax.numpy as jnp
from jax.experimental import pallas as pl
from jax.experimental.pallas import tpu as pltpu

# Static shapes implied by the module (fc1 = Linear(64*36, 128) forces L_in = 150).
L_IN, C_IN = 150, 6
C1, C2 = 32, 64
L1 = L_IN - 2          # 148 after conv1 (kernel 3)
P1 = L1 // 2           # 74  after pool1
L2 = P1 - 2            # 72  after conv2
P2 = L2 // 2           # 36  after pool2
FLAT = C2 * P2         # 2304
H, OUT = 128, 6

MAX_BLOCK = 8          # samples processed per grid step


def _make_kernel(batch_block):
    B = batch_block

    def kernel(x_ref, w1_ref, b1_ref, w2_ref, b2_ref,
               wf1_ref, bf1_ref, wf2_ref, bf2_ref,
               o_ref, p1_s, xf_s):
        # x_ref: (B*L_IN, C_IN) f32 -- rows [b*150, (b+1)*150) belong to sample b.
        # Load the tiny conv weights / biases once per grid step.
        w1taps = [w1_ref[k] for k in range(3)]      # each (C_IN, C1)
        w2taps = [w2_ref[k] for k in range(3)]      # each (C1, C2)
        b1v = b1_ref[...]                           # (1, C1)
        b2v = b2_ref[...]                           # (1, C2)

        for b in range(B):
            base = b * L_IN

            # ---- conv1 + ReLU + maxpool fused via even/odd output rows ----
            #   conv_even[p] = sum_k x[2p + k]     @ w1[k]
            #   conv_odd [p] = sum_k x[2p + 1 + k] @ w1[k]
            #   pool1        = relu(max(conv_even, conv_odd) + b1)
            acc_e = jnp.dot(x_ref[pl.ds(base + 0, P1, stride=2), :], w1taps[0],
                            preferred_element_type=jnp.float32)
            acc_o = jnp.dot(x_ref[pl.ds(base + 1, P1, stride=2), :], w1taps[0],
                            preferred_element_type=jnp.float32)
            for k in (1, 2):
                acc_e = acc_e + jnp.dot(x_ref[pl.ds(base + k, P1, stride=2), :],
                                        w1taps[k], preferred_element_type=jnp.float32)
                acc_o = acc_o + jnp.dot(x_ref[pl.ds(base + k + 1, P1, stride=2), :],
                                        w1taps[k], preferred_element_type=jnp.float32)
            p1_s[...] = jnp.maximum(jnp.maximum(acc_e, acc_o) + b1v, 0.0)   # (74, 32)

            # ---- conv2 + ReLU + maxpool (same even/odd trick) ----
            acc2_e = jnp.dot(p1_s[pl.ds(0, P2, stride=2), :], w2taps[0],
                             preferred_element_type=jnp.float32)
            acc2_o = jnp.dot(p1_s[pl.ds(1, P2, stride=2), :], w2taps[0],
                             preferred_element_type=jnp.float32)
            for k in (1, 2):
                acc2_e = acc2_e + jnp.dot(p1_s[pl.ds(k, P2, stride=2), :], w2taps[k],
                                          preferred_element_type=jnp.float32)
                acc2_o = acc2_o + jnp.dot(p1_s[pl.ds(k + 1, P2, stride=2), :], w2taps[k],
                                          preferred_element_type=jnp.float32)
            v = jnp.maximum(jnp.maximum(acc2_e, acc2_o) + b2v, 0.0)         # (36, 64)

            # ---- flatten into the (B, FLAT) scratch; column index = p*64 + c ----
            # (fc1 weight was pre-permuted to match this ordering.)
            for p in range(P2):
                xf_s[b:b + 1, p * C2:(p + 1) * C2] = v[p:p + 1, :]

        # ---- FC stage for the whole block: bf16 MXU operands, f32 accumulate ----
        xf = xf_s[...].astype(jnp.bfloat16)                                  # (B, 2304)
        h = jnp.dot(xf, wf1_ref[...], preferred_element_type=jnp.float32) + bf1_ref[...]
        h = jnp.maximum(h, 0.0)
        out = (jnp.dot(h.astype(jnp.bfloat16), wf2_ref[...],
                       preferred_element_type=jnp.float32) + bf2_ref[...])
        o_ref[...] = out.astype(o_ref.dtype)

    return kernel


def prepare_params(params):
    """One-time weight preprocessing (call once, outside the jitted forward)."""
    (w1, b1, w2, b2, wf1, bf1, wf2, bf2) = params
    w1t = jnp.transpose(w1, (2, 1, 0)).astype(jnp.float32)      # (3, C_IN, C1)
    w2t = jnp.transpose(w2, (2, 1, 0)).astype(jnp.float32)      # (3, C1, C2)
    # PyTorch flatten of (C2, P2) is column c*P2 + p; the kernel flattens as p*C2 + c,
    # so permute fc1's weight accordingly: row p*C2+c  <->  fc1_w[:, c*P2+p].
    wf1p = jnp.transpose(wf1.reshape(H, C2, P2), (2, 1, 0)).reshape(FLAT, H)
    wf1p = wf1p.astype(jnp.bfloat16)                            # (2304, 128)
    wf2t = wf2.T.astype(jnp.bfloat16)                           # (128, 6)
    return (w1t, b1.reshape(1, C1).astype(jnp.float32),
            w2t, b2.reshape(1, C2).astype(jnp.float32),
            wf1p, bf1.reshape(1, H).astype(jnp.float32),
            wf2t, bf2.reshape(1, OUT).astype(jnp.float32))


def convnet_forward(x, prepped):
    """x: (N, 6, 150) f32, prepped: output of prepare_params."""
    (w1t, b1r, w2t, b2r, wf1p, bf1r, wf2t, bf2r) = prepped
    n = x.shape[0]
    B = n if n < MAX_BLOCK else MAX_BLOCK
    n_pad = ((n + B - 1) // B) * B

    # Layout plumbing only: NCL -> (N*L, C); length on sublanes, channels on lanes.
    xt = jnp.transpose(x, (0, 2, 1)).astype(jnp.float32)        # (N, 150, 6)
    if n_pad != n:
        xt = jnp.pad(xt, ((0, n_pad - n), (0, 0), (0, 0)))
    xt = xt.reshape(n_pad * L_IN, C_IN)                         # free reshape

    out = pl.pallas_call(
        _make_kernel(B),
        out_shape=jax.ShapeDtypeStruct((n_pad, OUT), jnp.float32),
        grid=(n_pad // B,),
        in_specs=[
            pl.BlockSpec((B * L_IN, C_IN), lambda i: (i, 0)),
            pl.BlockSpec((3, C_IN, C1), lambda i: (0, 0, 0)),
            pl.BlockSpec((1, C1), lambda i: (0, 0)),
            pl.BlockSpec((3, C1, C2), lambda i: (0, 0, 0)),
            pl.BlockSpec((1, C2), lambda i: (0, 0)),
            pl.BlockSpec((FLAT, H), lambda i: (0, 0)),
            pl.BlockSpec((1, H), lambda i: (0, 0)),
            pl.BlockSpec((H, OUT), lambda i: (0, 0)),
            pl.BlockSpec((1, OUT), lambda i: (0, 0)),
        ],
        out_specs=pl.BlockSpec((B, OUT), lambda i: (i, 0)),
        scratch_shapes=[
            pltpu.VMEM((P1, C1), jnp.float32),      # pooled conv1 activations (per sample)
            pltpu.VMEM((B, FLAT), jnp.float32),     # flattened features for the FC stage
        ],
        compiler_params=pltpu.CompilerParams(dimension_semantics=("parallel",)),
    )(xt, w1t, b1r, w2t, b2r, wf1p, bf1r, wf2t, bf2r)

    return out[:n] if n_pad != n else out


def ref_forward(x, params):
    """Pure-JAX reference matching PyTorch semantics."""
    (w1, b1, w2, b2, wf1, bf1, wf2, bf2) = params
    hp = jax.lax.Precision.HIGHEST

    def conv1d(a, w, b):                       # a: (N, Ci, L), w: (Co, Ci, K)
        lout = a.shape[2] - w.shape[2] + 1
        out = jnp.broadcast_to(b[None, :, None], (a.shape[0], w.shape[0], lout))
        for k in range(w.shape[2]):
            out = out + jnp.einsum('ncl,oc->nol', a[:, :, k:k + lout], w[:, :, k],
                                   precision=hp)
        return out

    def pool(a):                               # MaxPool1d(kernel=2), floor
        L = (a.shape[2] // 2) * 2
        return jnp.maximum(a[:, :, 0:L:2], a[:, :, 1:L:2])

    a = pool(jax.nn.relu(conv1d(x, w1, b1)))
    a = pool(jax.nn.relu(conv1d(a, w2, b2)))
    a = a.reshape(a.shape[0], -1)
    a = jax.nn.relu(jnp.dot(a, wf1.T, precision=hp) + bf1)
    return jnp.dot(a, wf2.T, precision=hp) + bf2


if __name__ == "__main__":
    key = jax.random.PRNGKey(0)
    ks = jax.random.split(key, 9)

    # Deterministic synthetic parameters (PyTorch parameter layouts).
    params = (
        0.10 * jax.random.normal(ks[0], (C1, C_IN, 3), jnp.float32),   # conv1.weight
        0.10 * jax.random.normal(ks[1], (C1,), jnp.float32),           # conv1.bias
        0.05 * jax.random.normal(ks[2], (C2, C1, 3), jnp.float32),     # conv2.weight
        0.05 * jax.random.normal(ks[3], (C2,), jnp.float32),           # conv2.bias
        0.02 * jax.random.normal(ks[4], (H, FLAT), jnp.float32),       # fc1.weight
        0.02 * jax.random.normal(ks[5], (H,), jnp.float32),            # fc1.bias
        0.10 * jax.random.normal(ks[6], (OUT, H), jnp.float32),        # fc2.weight
        0.10 * jax.random.normal(ks[7], (OUT,), jnp.float32),          # fc2.bias
    )

    x = jax.random.normal(ks[8], (2, C_IN, L_IN), jnp.float32)          # (N, 6, 150)

    prepped = prepare_params(params)            # one-time weight prep (outside jit)
    out = jax.jit(convnet_forward)(x, prepped)
    out = jax.block_until_ready(out)

    ref = ref_forward(x, params)
    assert out.shape == (2, OUT), out.shape
    assert bool(jnp.all(jnp.isfinite(out)))
    assert bool(jnp.allclose(out, ref, rtol=2e-2, atol=2e-2)), (
        "max abs diff %e" % float(jnp.max(jnp.abs(out - ref))))

    print("KERNEL_OK")
</pallas_src>

<mosaic_0001>
module attributes {stable_mosaic.version = 11 : i64} {
  func.func @kernel(%arg0: i32, %arg1: memref<300x6xf32, #tpu.memory_space<vmem>>, %arg2: memref<3x6x32xf32, #tpu.memory_space<vmem>>, %arg3: memref<1x32xf32, #tpu.memory_space<vmem>>, %arg4: memref<3x32x64xf32, #tpu.memory_space<vmem>>, %arg5: memref<1x64xf32, #tpu.memory_space<vmem>>, %arg6: memref<2304x128xbf16, #tpu.memory_space<vmem>>, %arg7: memref<1x128xf32, #tpu.memory_space<vmem>>, %arg8: memref<128x6xbf16, #tpu.memory_space<vmem>>, %arg9: memref<1x6xf32, #tpu.memory_space<vmem>>, %arg10: memref<2x6xf32, #tpu.memory_space<vmem>>, %arg11: memref<74x32xf32, #tpu.memory_space<vmem>>, %arg12: memref<2x2304xf32, #tpu.memory_space<vmem>>) attributes {dimension_semantics = [#tpu.dimension_semantics<parallel>], iteration_bounds = array<i64: 1>, scalar_prefetch = 0 : i64, scratch_operands = 2 : i64, tpu.core_type = #tpu.core_type<tc>, window_params = [{transform_indices = @transform_0, window_bounds = array<i64: 300, 6>}, {pipeline_mode = #tpu.pipeline_mode<synchronous>, transform_indices = @transform_1, window_bounds = array<i64: 3, 6, 32>}, {pipeline_mode = #tpu.pipeline_mode<synchronous>, transform_indices = @transform_2, window_bounds = array<i64: 1, 32>}, {pipeline_mode = #tpu.pipeline_mode<synchronous>, transform_indices = @transform_3, window_bounds = array<i64: 3, 32, 64>}, {pipeline_mode = #tpu.pipeline_mode<synchronous>, transform_indices = @transform_4, window_bounds = array<i64: 1, 64>}, {pipeline_mode = #tpu.pipeline_mode<synchronous>, transform_indices = @transform_5, window_bounds = array<i64: 2304, 128>}, {pipeline_mode = #tpu.pipeline_mode<synchronous>, transform_indices = @transform_6, window_bounds = array<i64: 1, 128>}, {pipeline_mode = #tpu.pipeline_mode<synchronous>, transform_indices = @transform_7, window_bounds = array<i64: 128, 6>}, {pipeline_mode = #tpu.pipeline_mode<synchronous>, transform_indices = @transform_8, window_bounds = array<i64: 1, 6>}, {transform_indices = @transform_9, window_bounds = array<i64: 2, 6>}]} {
    %c0 = arith.constant 0 : index
    %c0_0 = arith.constant 0 : index
    %c0_1 = arith.constant 0 : index
    %0 = vector.load %arg2[%c0, %c0_0, %c0_1] : memref<3x6x32xf32, #tpu.memory_space<vmem>>, vector<1x6x32xf32>
    %1 = vector.shape_cast %0 : vector<1x6x32xf32> to vector<6x32xf32>
    %c1 = arith.constant 1 : index
    %c0_2 = arith.constant 0 : index
    %c0_3 = arith.constant 0 : index
    %2 = vector.load %arg2[%c1, %c0_2, %c0_3] : memref<3x6x32xf32, #tpu.memory_space<vmem>>, vector<1x6x32xf32>
    %3 = vector.shape_cast %2 : vector<1x6x32xf32> to vector<6x32xf32>
    %c2 = arith.constant 2 : index
    %c0_4 = arith.constant 0 : index
    %c0_5 = arith.constant 0 : index
    %4 = vector.load %arg2[%c2, %c0_4, %c0_5] : memref<3x6x32xf32, #tpu.memory_space<vmem>>, vector<1x6x32xf32>
    %5 = vector.shape_cast %4 : vector<1x6x32xf32> to vector<6x32xf32>
    %c0_6 = arith.constant 0 : index
    %c0_7 = arith.constant 0 : index
    %c0_8 = arith.constant 0 : index
    %6 = vector.load %arg4[%c0_6, %c0_7, %c0_8] : memref<3x32x64xf32, #tpu.memory_space<vmem>>, vector<1x32x64xf32>
    %7 = vector.shape_cast %6 : vector<1x32x64xf32> to vector<32x64xf32>
    %c1_9 = arith.constant 1 : index
    %c0_10 = arith.constant 0 : index
    %c0_11 = arith.constant 0 : index
    %8 = vector.load %arg4[%c1_9, %c0_10, %c0_11] : memref<3x32x64xf32, #tpu.memory_space<vmem>>, vector<1x32x64xf32>
    %9 = vector.shape_cast %8 : vector<1x32x64xf32> to vector<32x64xf32>
    %c2_12 = arith.constant 2 : index
    %c0_13 = arith.constant 0 : index
    %c0_14 = arith.constant 0 : index
    %10 = vector.load %arg4[%c2_12, %c0_13, %c0_14] : memref<3x32x64xf32, #tpu.memory_space<vmem>>, vector<1x32x64xf32>
    %11 = vector.shape_cast %10 : vector<1x32x64xf32> to vector<32x64xf32>
    %c0_15 = arith.constant 0 : index
    %c0_16 = arith.constant 0 : index
    %12 = vector.load %arg3[%c0_15, %c0_16] : memref<1x32xf32, #tpu.memory_space<vmem>>, vector<1x32xf32>
    %c0_17 = arith.constant 0 : index
    %c0_18 = arith.constant 0 : index
    %13 = vector.load %arg5[%c0_17, %c0_18] : memref<1x64xf32, #tpu.memory_space<vmem>>, vector<1x64xf32>
    %c0_19 = arith.constant 0 : index
    %c0_20 = arith.constant 0 : index
    %14 = tpu.strided_load %arg1[%c0_19, %c0_20] {strides = array<i32: 2, 1>} : memref<300x6xf32, #tpu.memory_space<vmem>>, vector<74x6xf32>
    %cst = arith.constant dense<0.000000e+00> : vector<74x32xf32>
    %15 = tpu.matmul %14, %1, %cst {dimension_numbers = #tpu.dot_dimension_numbers<[1], [0], [0], [1], [0, 0, 1, 1], [], []>} : vector<74x6xf32>, vector<6x32xf32>, vector<74x32xf32> -> vector<74x32xf32>
    %c1_21 = arith.constant 1 : index
    %c0_22 = arith.constant 0 : index
    %16 = tpu.strided_load %arg1[%c1_21, %c0_22] {strides = array<i32: 2, 1>} : memref<300x6xf32, #tpu.memory_space<vmem>>, vector<74x6xf32>
    %cst_23 = arith.constant dense<0.000000e+00> : vector<74x32xf32>
    %17 = tpu.matmul %16, %1, %cst_23 {dimension_numbers = #tpu.dot_dimension_numbers<[1], [0], [0], [1], [0, 0, 1, 1], [], []>} : vector<74x6xf32>, vector<6x32xf32>, vector<74x32xf32> -> vector<74x32xf32>
    %c1_24 = arith.constant 1 : index
    %c0_25 = arith.constant 0 : index
    %18 = tpu.strided_load %arg1[%c1_24, %c0_25] {strides = array<i32: 2, 1>} : memref<300x6xf32, #tpu.memory_space<vmem>>, vector<74x6xf32>
    %cst_26 = arith.constant dense<0.000000e+00> : vector<74x32xf32>
    %19 = tpu.matmul %18, %3, %cst_26 {dimension_numbers = #tpu.dot_dimension_numbers<[1], [0], [0], [1], [0, 0, 1, 1], [], []>} : vector<74x6xf32>, vector<6x32xf32>, vector<74x32xf32> -> vector<74x32xf32>
    %20 = arith.addf %15, %19 : vector<74x32xf32>
    %c2_27 = arith.constant 2 : index
    %c0_28 = arith.constant 0 : index
    %21 = tpu.strided_load %arg1[%c2_27, %c0_28] {strides = array<i32: 2, 1>} : memref<300x6xf32, #tpu.memory_space<vmem>>, vector<74x6xf32>
    %cst_29 = arith.constant dense<0.000000e+00> : vector<74x32xf32>
    %22 = tpu.matmul %21, %3, %cst_29 {dimension_numbers = #tpu.dot_dimension_numbers<[1], [0], [0], [1], [0, 0, 1, 1], [], []>} : vector<74x6xf32>, vector<6x32xf32>, vector<74x32xf32> -> vector<74x32xf32>
    %23 = arith.addf %17, %22 : vector<74x32xf32>
    %c2_30 = arith.constant 2 : index
    %c0_31 = arith.constant 0 : index
    %24 = tpu.strided_load %arg1[%c2_30, %c0_31] {strides = array<i32: 2, 1>} : memref<300x6xf32, #tpu.memory_space<vmem>>, vector<74x6xf32>
    %cst_32 = arith.constant dense<0.000000e+00> : vector<74x32xf32>
    %25 = tpu.matmul %24, %5, %cst_32 {dimension_numbers = #tpu.dot_dimension_numbers<[1], [0], [0], [1], [0, 0, 1, 1], [], []>} : vector<74x6xf32>, vector<6x32xf32>, vector<74x32xf32> -> vector<74x32xf32>
    %26 = arith.addf %20, %25 : vector<74x32xf32>
    %c3 = arith.constant 3 : index
    %c0_33 = arith.constant 0 : index
    %27 = tpu.strided_load %arg1[%c3, %c0_33] {strides = array<i32: 2, 1>} : memref<300x6xf32, #tpu.memory_space<vmem>>, vector<74x6xf32>
    %cst_34 = arith.constant dense<0.000000e+00> : vector<74x32xf32>
    %28 = tpu.matmul %27, %5, %cst_34 {dimension_numbers = #tpu.dot_dimension_numbers<[1], [0], [0], [1], [0, 0, 1, 1], [], []>} : vector<74x6xf32>, vector<6x32xf32>, vector<74x32xf32> -> vector<74x32xf32>
    %29 = arith.addf %23, %28 : vector<74x32xf32>
    %30 = arith.maximumf %26, %29 : vector<74x32xf32>
    %31 = vector.broadcast %12 : vector<1x32xf32> to vector<74x32xf32>
    %32 = arith.addf %30, %31 : vector<74x32xf32>
    %cst_35 = arith.constant 0.000000e+00 : f32
    %33 = vector.broadcast %cst_35 : f32 to vector<74x32xf32>
    %34 = arith.maximumf %32, %33 : vector<74x32xf32>
    %c0_36 = arith.constant 0 : index
    %c0_37 = arith.constant 0 : index
    %35 = vector.load %arg11[%c0_36, %c0_37] : memref<74x32xf32, #tpu.memory_space<vmem>>, vector<74x32xf32>
    tpu.vector_store %arg11[%c0_36, %c0_37], %34 {strides = array<i32>} : memref<74x32xf32, #tpu.memory_space<vmem>>, vector<74x32xf32>,
    %c0_38 = arith.constant 0 : index
    %c0_39 = arith.constant 0 : index
    %36 = tpu.strided_load %arg11[%c0_38, %c0_39] {strides = array<i32: 2, 1>} : memref<74x32xf32, #tpu.memory_space<vmem>>, vector<36x32xf32>
    %cst_40 = arith.constant dense<0.000000e+00> : vector<36x64xf32>
    %37 = tpu.matmul %36, %7, %cst_40 {dimension_numbers = #tpu.dot_dimension_numbers<[1], [0], [0], [1], [0, 0, 1, 1], [], []>} : vector<36x32xf32>, vector<32x64xf32>, vector<36x64xf32> -> vector<36x64xf32>
    %c1_41 = arith.constant 1 : index
    %c0_42 = arith.constant 0 : index
    %38 = tpu.strided_load %arg11[%c1_41, %c0_42] {strides = array<i32: 2, 1>} : memref<74x32xf32, #tpu.memory_space<vmem>>, vector<36x32xf32>
    %cst_43 = arith.constant dense<0.000000e+00> : vector<36x64xf32>
    %39 = tpu.matmul %38, %7, %cst_43 {dimension_numbers = #tpu.dot_dimension_numbers<[1], [0], [0], [1], [0, 0, 1, 1], [], []>} : vector<36x32xf32>, vector<32x64xf32>, vector<36x64xf32> -> vector<36x64xf32>
    %c1_44 = arith.constant 1 : index
    %c0_45 = arith.constant 0 : index
    %40 = tpu.strided_load %arg11[%c1_44, %c0_45] {strides = array<i32: 2, 1>} : memref<74x32xf32, #tpu.memory_space<vmem>>, vector<36x32xf32>
    %cst_46 = arith.constant dense<0.000000e+00> : vector<36x64xf32>
    %41 = tpu.matmul %40, %9, %cst_46 {dimension_numbers = #tpu.dot_dimension_numbers<[1], [0], [0], [1], [0, 0, 1, 1], [], []>} : vector<36x32xf32>, vector<32x64xf32>, vector<36x64xf32> -> vector<36x64xf32>
    %42 = arith.addf %37, %41 : vector<36x64xf32>
    %c2_47 = arith.constant 2 : index
    %c0_48 = arith.constant 0 : index
    %43 = tpu.strided_load %arg11[%c2_47, %c0_48] {strides = array<i32: 2, 1>} : memref<74x32xf32, #tpu.memory_space<vmem>>, vector<36x32xf32>
    %cst_49 = arith.constant dense<0.000000e+00> : vector<36x64xf32>
    %44 = tpu.matmul %43, %9, %cst_49 {dimension_numbers = #tpu.dot_dimension_numbers<[1], [0], [0], [1], [0, 0, 1, 1], [], []>} : vector<36x32xf32>, vector<32x64xf32>, vector<36x64xf32> -> vector<36x64xf32>
    %45 = arith.addf %39, %44 : vector<36x64xf32>
    %c2_50 = arith.constant 2 : index
    %c0_51 = arith.constant 0 : index
    %46 = tpu.strided_load %arg11[%c2_50, %c0_51] {strides = array<i32: 2, 1>} : memref<74x32xf32, #tpu.memory_space<vmem>>, vector<36x32xf32>
    %cst_52 = arith.constant dense<0.000000e+00> : vector<36x64xf32>
    %47 = tpu.matmul %46, %11, %cst_52 {dimension_numbers = #tpu.dot_dimension_numbers<[1], [0], [0], [1], [0, 0, 1, 1], [], []>} : vector<36x32xf32>, vector<32x64xf32>, vector<36x64xf32> -> vector<36x64xf32>
    %48 = arith.addf %42, %47 : vector<36x64xf32>
    %c3_53 = arith.constant 3 : index
    %c0_54 = arith.constant 0 : index
    %49 = tpu.strided_load %arg11[%c3_53, %c0_54] {strides = array<i32: 2, 1>} : memref<74x32xf32, #tpu.memory_space<vmem>>, vector<36x32xf32>
    %cst_55 = arith.constant dense<0.000000e+00> : vector<36x64xf32>
    %50 = tpu.matmul %49, %11, %cst_55 {dimension_numbers = #tpu.dot_dimension_numbers<[1], [0], [0], [1], [0, 0, 1, 1], [], []>} : vector<36x32xf32>, vector<32x64xf32>, vector<36x64xf32> -> vector<36x64xf32>
    %51 = arith.addf %45, %50 : vector<36x64xf32>
    %52 = arith.maximumf %48, %51 : vector<36x64xf32>
    %53 = vector.broadcast %13 : vector<1x64xf32> to vector<36x64xf32>
    %54 = arith.addf %52, %53 : vector<36x64xf32>
    %cst_56 = arith.constant 0.000000e+00 : f32
    %55 = vector.broadcast %cst_56 : f32 to vector<36x64xf32>
    %56 = arith.maximumf %54, %55 : vector<36x64xf32>
    %57 = vector.extract_strided_slice %56 {offsets = [0, 0], sizes = [1, 64], strides = [1, 1]} : vector<36x64xf32> to vector<1x64xf32>
    %c0_57 = arith.constant 0 : index
    %c0_58 = arith.constant 0 : index
    %58 = vector.load %arg12[%c0_57, %c0_58] : memref<2x2304xf32, #tpu.memory_space<vmem>>, vector<1x64xf32>
    tpu.vector_store %arg12[%c0_57, %c0_58], %57 {strides = array<i32>} : memref<2x2304xf32, #tpu.memory_space<vmem>>, vector<1x64xf32>,
    %59 = vector.extract_strided_slice %56 {offsets = [1, 0], sizes = [1, 64], strides = [1, 1]} : vector<36x64xf32> to vector<1x64xf32>
    %c0_59 = arith.constant 0 : index
    %c64 = arith.constant 64 : index
    %60 = vector.load %arg12[%c0_59, %c64] : memref<2x2304xf32, #tpu.memory_space<vmem>>, vector<1x64xf32>
    tpu.vector_store %arg12[%c0_59, %c64], %59 {strides = array<i32>} : memref<2x2304xf32, #tpu.memory_space<vmem>>, vector<1x64xf32>,
    %61 = vector.extract_strided_slice %56 {offsets = [2, 0], sizes = [1, 64], strides = [1, 1]} : vector<36x64xf32> to vector<1x64xf32>
    %c0_60 = arith.constant 0 : index
    %c128 = arith.constant 128 : index
    %62 = vector.load %arg12[%c0_60, %c128] : memref<2x2304xf32, #tpu.memory_space<vmem>>, vector<1x64xf32>
    tpu.vector_store %arg12[%c0_60, %c128], %61 {strides = array<i32>} : memref<2x2304xf32, #tpu.memory_space<vmem>>, vector<1x64xf32>,
    %63 = vector.extract_strided_slice %56 {offsets = [3, 0], sizes = [1, 64], strides = [1, 1]} : vector<36x64xf32> to vector<1x64xf32>
    %c0_61 = arith.constant 0 : index
    %c192 = arith.constant 192 : index
    %64 = vector.load %arg12[%c0_61, %c192] : memref<2x2304xf32, #tpu.memory_space<vmem>>, vector<1x64xf32>
    tpu.vector_store %arg12[%c0_61, %c192], %63 {strides = array<i32>} : memref<2x2304xf32, #tpu.memory_space<vmem>>, vector<1x64xf32>,
    %65 = vector.extract_strided_slice %56 {offsets = [4, 0], sizes = [1, 64], strides = [1, 1]} : vector<36x64xf32> to vector<1x64xf32>
    %c0_62 = arith.constant 0 : index
    %c256 = arith.constant 256 : index
    %66 = vector.load %arg12[%c0_62, %c256] : memref<2x2304xf32, #tpu.memory_space<vmem>>, vector<1x64xf32>
    tpu.vector_store %arg12[%c0_62, %c256], %65 {strides = array<i32>} : memref<2x2304xf32, #tpu.memory_space<vmem>>, vector<1x64xf32>,
    %67 = vector.extract_strided_slice %56 {offsets = [5, 0], sizes = [1, 64], strides = [1, 1]} : vector<36x64xf32> to vector<1x64xf32>
    %c0_63 = arith.constant 0 : index
    %c320 = arith.constant 320 : index
    %68 = vector.load %arg12[%c0_63, %c320] : memref<2x2304xf32, #tpu.memory_space<vmem>>, vector<1x64xf32>
    tpu.vector_store %arg12[%c0_63, %c320], %67 {strides = array<i32>} : memref<2x2304xf32, #tpu.memory_space<vmem>>, vector<1x64xf32>,
    %69 = vector.extract_strided_slice %56 {offsets = [6, 0], sizes = [1, 64], strides = [1, 1]} : vector<36x64xf32> to vector<1x64xf32>
    %c0_64 = arith.constant 0 : index
    %c384 = arith.constant 384 : index
    %70 = vector.load %arg12[%c0_64, %c384] : memref<2x2304xf32, #tpu.memory_space<vmem>>, vector<1x64xf32>
    tpu.vector_store %arg12[%c0_64, %c384], %69 {strides = array<i32>} : memref<2x2304xf32, #tpu.memory_space<vmem>>, vector<1x64xf32>,
    %71 = vector.extract_strided_slice %56 {offsets = [7, 0], sizes = [1, 64], strides = [1, 1]} : vector<36x64xf32> to vector<1x64xf32>
    %c0_65 = arith.constant 0 : index
    %c448 = arith.constant 448 : index
    %72 = vector.load %arg12[%c0_65, %c448] : memref<2x2304xf32, #tpu.memory_space<vmem>>, vector<1x64xf32>
    tpu.vector_store %arg12[%c0_65, %c448], %71 {strides = array<i32>} : memref<2x2304xf32, #tpu.memory_space<vmem>>, vector<1x64xf32>,
    %73 = vector.extract_strided_slice %56 {offsets = [8, 0], sizes = [1, 64], strides = [1, 1]} : vector<36x64xf32> to vector<1x64xf32>
    %c0_66 = arith.constant 0 : index
    %c512 = arith.constant 512 : index
    %74 = vector.load %arg12[%c0_66, %c512] : memref<2x2304xf32, #tpu.memory_space<vmem>>, vector<1x64xf32>
    tpu.vector_store %arg12[%c0_66, %c512], %73 {strides = array<i32>} : memref<2x2304xf32, #tpu.memory_space<vmem>>, vector<1x64xf32>,
    %75 = vector.extract_strided_slice %56 {offsets = [9, 0], sizes = [1, 64], strides = [1, 1]} : vector<36x64xf32> to vector<1x64xf32>
    %c0_67 = arith.constant 0 : index
    %c576 = arith.constant 576 : index
    %76 = vector.load %arg12[%c0_67, %c576] : memref<2x2304xf32, #tpu.memory_space<vmem>>, vector<1x64xf32>
    tpu.vector_store %arg12[%c0_67, %c576], %75 {strides = array<i32>} : memref<2x2304xf32, #tpu.memory_space<vmem>>, vector<1x64xf32>,
    %77 = vector.extract_strided_slice %56 {offsets = [10, 0], sizes = [1, 64], strides = [1, 1]} : vector<36x64xf32> to vector<1x64xf32>
    %c0_68 = arith.constant 0 : index
    %c640 = arith.constant 640 : index
    %78 = vector.load %arg12[%c0_68, %c640] : memref<2x2304xf32, #tpu.memory_space<vmem>>, vector<1x64xf32>
    tpu.vector_store %arg12[%c0_68, %c640], %77 {strides = array<i32>} : memref<2x2304xf32, #tpu.memory_space<vmem>>, vector<1x64xf32>,
    %79 = vector.extract_strided_slice %56 {offsets = [11, 0], sizes = [1, 64], strides = [1, 1]} : vector<36x64xf32> to vector<1x64xf32>
    %c0_69 = arith.constant 0 : index
    %c704 = arith.constant 704 : index
    %80 = vector.load %arg12[%c0_69, %c704] : memref<2x2304xf32, #tpu.memory_space<vmem>>, vector<1x64xf32>
    tpu.vector_store %arg12[%c0_69, %c704], %79 {strides = array<i32>} : memref<2x2304xf32, #tpu.memory_space<vmem>>, vector<1x64xf32>,
    %81 = vector.extract_strided_slice %56 {offsets = [12, 0], sizes = [1, 64], strides = [1, 1]} : vector<36x64xf32> to vector<1x64xf32>
    %c0_70 = arith.constant 0 : index
    %c768 = arith.constant 768 : index
    %82 = vector.load %arg12[%c0_70, %c768] : memref<2x2304xf32, #tpu.memory_space<vmem>>, vector<1x64xf32>
    tpu.vector_store %arg12[%c0_70, %c768], %81 {strides = array<i32>} : memref<2x2304xf32, #tpu.memory_space<vmem>>, vector<1x64xf32>,
    %83 = vector.extract_strided_slice %56 {offsets = [13, 0], sizes = [1, 64], strides = [1, 1]} : vector<36x64xf32> to vector<1x64xf32>
    %c0_71 = arith.constant 0 : index
    %c832 = arith.constant 832 : index
    %84 = vector.load %arg12[%c0_71, %c832] : memref<2x2304xf32, #tpu.memory_space<vmem>>, vector<1x64xf32>
    tpu.vector_store %arg12[%c0_71, %c832], %83 {strides = array<i32>} : memref<2x2304xf32, #tpu.memory_space<vmem>>, vector<1x64xf32>,
    %85 = vector.extract_strided_slice %56 {offsets = [14, 0], sizes = [1, 64], strides = [1, 1]} : vector<36x64xf32> to vector<1x64xf32>
    %c0_72 = arith.constant 0 : index
    %c896 = arith.constant 896 : index
    %86 = vector.load %arg12[%c0_72, %c896] : memref<2x2304xf32, #tpu.memory_space<vmem>>, vector<1x64xf32>
    tpu.vector_store %arg12[%c0_72, %c896], %85 {strides = array<i32>} : memref<2x2304xf32, #tpu.memory_space<vmem>>, vector<1x64xf32>,
    %87 = vector.extract_strided_slice %56 {offsets = [15, 0], sizes = [1, 64], strides = [1, 1]} : vector<36x64xf32> to vector<1x64xf32>
    %c0_73 = arith.constant 0 : index
    %c960 = arith.constant 960 : index
    %88 = vector.load %arg12[%c0_73, %c960] : memref<2x2304xf32, #tpu.memory_space<vmem>>, vector<1x64xf32>
    tpu.vector_store %arg12[%c0_73, %c960], %87 {strides = array<i32>} : memref<2x2304xf32, #tpu.memory_space<vmem>>, vector<1x64xf32>,
    %89 = vector.extract_strided_slice %56 {offsets = [16, 0], sizes = [1, 64], strides = [1, 1]} : vector<36x64xf32> to vector<1x64xf32>
    %c0_74 = arith.constant 0 : index
    %c1024 = arith.constant 1024 : index
    %90 = vector.load %arg12[%c0_74, %c1024] : memref<2x2304xf32, #tpu.memory_space<vmem>>, vector<1x64xf32>
    tpu.vector_store %arg12[%c0_74, %c1024], %89 {strides = array<i32>} : memref<2x2304xf32, #tpu.memory_space<vmem>>, vector<1x64xf32>,
    %91 = vector.extract_strided_slice %56 {offsets = [17, 0], sizes = [1, 64], strides = [1, 1]} : vector<36x64xf32> to vector<1x64xf32>
    %c0_75 = arith.constant 0 : index
    %c1088 = arith.constant 1088 : index
    %92 = vector.load %arg12[%c0_75, %c1088] : memref<2x2304xf32, #tpu.memory_space<vmem>>, vector<1x64xf32>
    tpu.vector_store %arg12[%c0_75, %c1088], %91 {strides = array<i32>} : memref<2x2304xf32, #tpu.memory_space<vmem>>, vector<1x64xf32>,
    %93 = vector.extract_strided_slice %56 {offsets = [18, 0], sizes = [1, 64], strides = [1, 1]} : vector<36x64xf32> to vector<1x64xf32>
    %c0_76 = arith.constant 0 : index
    %c1152 = arith.constant 1152 : index
    %94 = vector.load %arg12[%c0_76, %c1152] : memref<2x2304xf32, #tpu.memory_space<vmem>>, vector<1x64xf32>
    tpu.vector_store %arg12[%c0_76, %c1152], %93 {strides = array<i32>} : memref<2x2304xf32, #tpu.memory_space<vmem>>, vector<1x64xf32>,
    %95 = vector.extract_strided_slice %56 {offsets = [19, 0], sizes = [1, 64], strides = [1, 1]} : vector<36x64xf32> to vector<1x64xf32>
    %c0_77 = arith.constant 0 : index
    %c1216 = arith.constant 1216 : index
    %96 = vector.load %arg12[%c0_77, %c1216] : memref<2x2304xf32, #tpu.memory_space<vmem>>, vector<1x64xf32>
    tpu.vector_store %arg12[%c0_77, %c1216], %95 {strides = array<i32>} : memref<2x2304xf32, #tpu.memory_space<vmem>>, vector<1x64xf32>,
    %97 = vector.extract_strided_slice %56 {offsets = [20, 0], sizes = [1, 64], strides = [1, 1]} : vector<36x64xf32> to vector<1x64xf32>
    %c0_78 = arith.constant 0 : index
    %c1280 = arith.constant 1280 : index
    %98 = vector.load %arg12[%c0_78, %c1280] : memref<2x2304xf32, #tpu.memory_space<vmem>>, vector<1x64xf32>
    tpu.vector_store %arg12[%c0_78, %c1280], %97 {strides = array<i32>} : memref<2x2304xf32, #tpu.memory_space<vmem>>, vector<1x64xf32>,
    %99 = vector.extract_strided_slice %56 {offsets = [21, 0], sizes = [1, 64], strides = [1, 1]} : vector<36x64xf32> to vector<1x64xf32>
    %c0_79 = arith.constant 0 : index
    %c1344 = arith.constant 1344 : index
    %100 = vector.load %arg12[%c0_79, %c1344] : memref<2x2304xf32, #tpu.memory_space<vmem>>, vector<1x64xf32>
    tpu.vector_store %arg12[%c0_79, %c1344], %99 {strides = array<i32>} : memref<2x2304xf32, #tpu.memory_space<vmem>>, vector<1x64xf32>,
    %101 = vector.extract_strided_slice %56 {offsets = [22, 0], sizes = [1, 64], strides = [1, 1]} : vector<36x64xf32> to vector<1x64xf32>
    %c0_80 = arith.constant 0 : index
    %c1408 = arith.constant 1408 : index
    %102 = vector.load %arg12[%c0_80, %c1408] : memref<2x2304xf32, #tpu.memory_space<vmem>>, vector<1x64xf32>
    tpu.vector_store %arg12[%c0_80, %c1408], %101 {strides = array<i32>} : memref<2x2304xf32, #tpu.memory_space<vmem>>, vector<1x64xf32>,
    %103 = vector.extract_strided_slice %56 {offsets = [23, 0], sizes = [1, 64], strides = [1, 1]} : vector<36x64xf32> to vector<1x64xf32>
    %c0_81 = arith.constant 0 : index
    %c1472 = arith.constant 1472 : index
    %104 = vector.load %arg12[%c0_81, %c1472] : memref<2x2304xf32, #tpu.memory_space<vmem>>, vector<1x64xf32>
    tpu.vector_store %arg12[%c0_81, %c1472], %103 {strides = array<i32>} : memref<2x2304xf32, #tpu.memory_space<vmem>>, vector<1x64xf32>,
    %105 = vector.extract_strided_slice %56 {offsets = [24, 0], sizes = [1, 64], strides = [1, 1]} : vector<36x64xf32> to vector<1x64xf32>
    %c0_82 = arith.constant 0 : index
    %c1536 = arith.constant 1536 : index
    %106 = vector.load %arg12[%c0_82, %c1536] : memref<2x2304xf32, #tpu.memory_space<vmem>>, vector<1x64xf32>
    tpu.vector_store %arg12[%c0_82, %c1536], %105 {strides = array<i32>} : memref<2x2304xf32, #tpu.memory_space<vmem>>, vector<1x64xf32>,
    %107 = vector.extract_strided_slice %56 {offsets = [25, 0], sizes = [1, 64], strides = [1, 1]} : vector<36x64xf32> to vector<1x64xf32>
    %c0_83 = arith.constant 0 : index
    %c1600 = arith.constant 1600 : index
    %108 = vector.load %arg12[%c0_83, %c1600] : memref<2x2304xf32, #tpu.memory_space<vmem>>, vector<1x64xf32>
    tpu.vector_store %arg12[%c0_83, %c1600], %107 {strides = array<i32>} : memref<2x2304xf32, #tpu.memory_space<vmem>>, vector<1x64xf32>,
    %109 = vector.extract_strided_slice %56 {offsets = [26, 0], sizes = [1, 64], strides = [1, 1]} : vector<36x64xf32> to vector<1x64xf32>
    %c0_84 = arith.constant 0 : index
    %c1664 = arith.constant 1664 : index
    %110 = vector.load %arg12[%c0_84, %c1664] : memref<2x2304xf32, #tpu.memory_space<vmem>>, vector<1x64xf32>
    tpu.vector_store %arg12[%c0_84, %c1664], %109 {strides = array<i32>} : memref<2x2304xf32, #tpu.memory_space<vmem>>, vector<1x64xf32>,
    %111 = vector.extract_strided_slice %56 {offsets = [27, 0], sizes = [1, 64], strides = [1, 1]} : vector<36x64xf32> to vector<1x64xf32>
    %c0_85 = arith.constant 0 : index
    %c1728 = arith.constant 1728 : index
    %112 = vector.load %arg12[%c0_85, %c1728] : memref<2x2304xf32, #tpu.memory_space<vmem>>, vector<1x64xf32>
    tpu.vector_store %arg12[%c0_85, %c1728], %111 {strides = array<i32>} : memref<2x2304xf32, #tpu.memory_space<vmem>>, vector<1x64xf32>,
    %113 = vector.extract_strided_slice %56 {offsets = [28, 0], sizes = [1, 64], strides = [1, 1]} : vector<36x64xf32> to vector<1x64xf32>
    %c0_86 = arith.constant 0 : index
    %c1792 = arith.constant 1792 : index
    %114 = vector.load %arg12[%c0_86, %c1792] : memref<2x2304xf32, #tpu.memory_space<vmem>>, vector<1x64xf32>
    tpu.vector_store %arg12[%c0_86, %c1792], %113 {strides = array<i32>} : memref<2x2304xf32, #tpu.memory_space<vmem>>, vector<1x64xf32>,
    %115 = vector.extract_strided_slice %56 {offsets = [29, 0], sizes = [1, 64], strides = [1, 1]} : vector<36x64xf32> to vector<1x64xf32>
    %c0_87 = arith.constant 0 : index
    %c1856 = arith.constant 1856 : index
    %116 = vector.load %arg12[%c0_87, %c1856] : memref<2x2304xf32, #tpu.memory_space<vmem>>, vector<1x64xf32>
    tpu.vector_store %arg12[%c0_87, %c1856], %115 {strides = array<i32>} : memref<2x2304xf32, #tpu.memory_space<vmem>>, vector<1x64xf32>,
    %117 = vector.extract_strided_slice %56 {offsets = [30, 0], sizes = [1, 64], strides = [1, 1]} : vector<36x64xf32> to vector<1x64xf32>
    %c0_88 = arith.constant 0 : index
    %c1920 = arith.constant 1920 : index
    %118 = vector.load %arg12[%c0_88, %c1920] : memref<2x2304xf32, #tpu.memory_space<vmem>>, vector<1x64xf32>
    tpu.vector_store %arg12[%c0_88, %c1920], %117 {strides = array<i32>} : memref<2x2304xf32, #tpu.memory_space<vmem>>, vector<1x64xf32>,
    %119 = vector.extract_strided_slice %56 {offsets = [31, 0], sizes = [1, 64], strides = [1, 1]} : vector<36x64xf32> to vector<1x64xf32>
    %c0_89 = arith.constant 0 : index
    %c1984 = arith.constant 1984 : index
    %120 = vector.load %arg12[%c0_89, %c1984] : memref<2x2304xf32, #tpu.memory_space<vmem>>, vector<1x64xf32>
    tpu.vector_store %arg12[%c0_89, %c1984], %119 {strides = array<i32>} : memref<2x2304xf32, #tpu.memory_space<vmem>>, vector<1x64xf32>,
    %121 = vector.extract_strided_slice %56 {offsets = [32, 0], sizes = [1, 64], strides = [1, 1]} : vector<36x64xf32> to vector<1x64xf32>
    %c0_90 = arith.constant 0 : index
    %c2048 = arith.constant 2048 : index
    %122 = vector.load %arg12[%c0_90, %c2048] : memref<2x2304xf32, #tpu.memory_space<vmem>>, vector<1x64xf32>
    tpu.vector_store %arg12[%c0_90, %c2048], %121 {strides = array<i32>} : memref<2x2304xf32, #tpu.memory_space<vmem>>, vector<1x64xf32>,
    %123 = vector.extract_strided_slice %56 {offsets = [33, 0], sizes = [1, 64], strides = [1, 1]} : vector<36x64xf32> to vector<1x64xf32>
    %c0_91 = arith.constant 0 : index
    %c2112 = arith.constant 2112 : index
    %124 = vector.load %arg12[%c0_91, %c2112] : memref<2x2304xf32, #tpu.memory_space<vmem>>, vector<1x64xf32>
    tpu.vector_store %arg12[%c0_91, %c2112], %123 {strides = array<i32>} : memref<2x2304xf32, #tpu.memory_space<vmem>>, vector<1x64xf32>,
    %125 = vector.extract_strided_slice %56 {offsets = [34, 0], sizes = [1, 64], strides = [1, 1]} : vector<36x64xf32> to vector<1x64xf32>
    %c0_92 = arith.constant 0 : index
    %c2176 = arith.constant 2176 : index
    %126 = vector.load %arg12[%c0_92, %c2176] : memref<2x2304xf32, #tpu.memory_space<vmem>>, vector<1x64xf32>
    tpu.vector_store %arg12[%c0_92, %c2176], %125 {strides = array<i32>} : memref<2x2304xf32, #tpu.memory_space<vmem>>, vector<1x64xf32>,
    %127 = vector.extract_strided_slice %56 {offsets = [35, 0], sizes = [1, 64], strides = [1, 1]} : vector<36x64xf32> to vector<1x64xf32>
    %c0_93 = arith.constant 0 : index
    %c2240 = arith.constant 2240 : index
    %128 = vector.load %arg12[%c0_93, %c2240] : memref<2x2304xf32, #tpu.memory_space<vmem>>, vector<1x64xf32>
    tpu.vector_store %arg12[%c0_93, %c2240], %127 {strides = array<i32>} : memref<2x2304xf32, #tpu.memory_space<vmem>>, vector<1x64xf32>,
    %c150 = arith.constant 150 : index
    %c0_94 = arith.constant 0 : index
    %129 = tpu.strided_load %arg1[%c150, %c0_94] {strides = array<i32: 2, 1>} : memref<300x6xf32, #tpu.memory_space<vmem>>, vector<74x6xf32>
    %cst_95 = arith.constant dense<0.000000e+00> : vector<74x32xf32>
    %130 = tpu.matmul %129, %1, %cst_95 {dimension_numbers = #tpu.dot_dimension_numbers<[1], [0], [0], [1], [0, 0, 1, 1], [], []>} : vector<74x6xf32>, vector<6x32xf32>, vector<74x32xf32> -> vector<74x32xf32>
    %c151 = arith.constant 151 : index
    %c0_96 = arith.constant 0 : index
    %131 = tpu.strided_load %arg1[%c151, %c0_96] {strides = array<i32: 2, 1>} : memref<300x6xf32, #tpu.memory_space<vmem>>, vector<74x6xf32>
    %cst_97 = arith.constant dense<0.000000e+00> : vector<74x32xf32>
    %132 = tpu.matmul %131, %1, %cst_97 {dimension_numbers = #tpu.dot_dimension_numbers<[1], [0], [0], [1], [0, 0, 1, 1], [], []>} : vector<74x6xf32>, vector<6x32xf32>, vector<74x32xf32> -> vector<74x32xf32>
    %c151_98 = arith.constant 151 : index
    %c0_99 = arith.constant 0 : index
    %133 = tpu.strided_load %arg1[%c151_98, %c0_99] {strides = array<i32: 2, 1>} : memref<300x6xf32, #tpu.memory_space<vmem>>, vector<74x6xf32>
    %cst_100 = arith.constant dense<0.000000e+00> : vector<74x32xf32>
    %134 = tpu.matmul %133, %3, %cst_100 {dimension_numbers = #tpu.dot_dimension_numbers<[1], [0], [0], [1], [0, 0, 1, 1], [], []>} : vector<74x6xf32>, vector<6x32xf32>, vector<74x32xf32> -> vector<74x32xf32>
    %135 = arith.addf %130, %134 : vector<74x32xf32>
    %c152 = arith.constant 152 : index
    %c0_101 = arith.constant 0 : index
    %136 = tpu.strided_load %arg1[%c152, %c0_101] {strides = array<i32: 2, 1>} : memref<300x6xf32, #tpu.memory_space<vmem>>, vector<74x6xf32>
    %cst_102 = arith.constant dense<0.000000e+00> : vector<74x32xf32>
    %137 = tpu.matmul %136, %3, %cst_102 {dimension_numbers = #tpu.dot_dimension_numbers<[1], [0], [0], [1], [0, 0, 1, 1], [], []>} : vector<74x6xf32>, vector<6x32xf32>, vector<74x32xf32> -> vector<74x32xf32>
    %138 = arith.addf %132, %137 : vector<74x32xf32>
    %c152_103 = arith.constant 152 : index
    %c0_104 = arith.constant 0 : index
    %139 = tpu.strided_load %arg1[%c152_103, %c0_104] {strides = array<i32: 2, 1>} : memref<300x6xf32, #tpu.memory_space<vmem>>, vector<74x6xf32>
    %cst_105 = arith.constant dense<0.000000e+00> : vector<74x32xf32>
    %140 = tpu.matmul %139, %5, %cst_105 {dimension_numbers = #tpu.dot_dimension_numbers<[1], [0], [0], [1], [0, 0, 1, 1], [], []>} : vector<74x6xf32>, vector<6x32xf32>, vector<74x32xf32> -> vector<74x32xf32>
    %141 = arith.addf %135, %140 : vector<74x32xf32>
    %c153 = arith.constant 153 : index
    %c0_106 = arith.constant 0 : index
    %142 = tpu.strided_load %arg1[%c153, %c0_106] {strides = array<i32: 2, 1>} : memref<300x6xf32, #tpu.memory_space<vmem>>, vector<74x6xf32>
    %cst_107 = arith.constant dense<0.000000e+00> : vector<74x32xf32>
    %143 = tpu.matmul %142, %5, %cst_107 {dimension_numbers = #tpu.dot_dimension_numbers<[1], [0], [0], [1], [0, 0, 1, 1], [], []>} : vector<74x6xf32>, vector<6x32xf32>, vector<74x32xf32> -> vector<74x32xf32>
    %144 = arith.addf %138, %143 : vector<74x32xf32>
    %145 = arith.maximumf %141, %144 : vector<74x32xf32>
    %146 = vector.broadcast %12 : vector<1x32xf32> to vector<74x32xf32>
    %147 = arith.addf %145, %146 : vector<74x32xf32>
    %cst_108 = arith.constant 0.000000e+00 : f32
    %148 = vector.broadcast %cst_108 : f32 to vector<74x32xf32>
    %149 = arith.maximumf %147, %148 : vector<74x32xf32>
    %c0_109 = arith.constant 0 : index
    %c0_110 = arith.constant 0 : index
    %150 = vector.load %arg11[%c0_109, %c0_110] : memref<74x32xf32, #tpu.memory_space<vmem>>, vector<74x32xf32>
    tpu.vector_store %arg11[%c0_109, %c0_110], %149 {strides = array<i32>} : memref<74x32xf32, #tpu.memory_space<vmem>>, vector<74x32xf32>,
    %c0_111 = arith.constant 0 : index
    %c0_112 = arith.constant 0 : index
    %151 = tpu.strided_load %arg11[%c0_111, %c0_112] {strides = array<i32: 2, 1>} : memref<74x32xf32, #tpu.memory_space<vmem>>, vector<36x32xf32>
    %cst_113 = arith.constant dense<0.000000e+00> : vector<36x64xf32>
    %152 = tpu.matmul %151, %7, %cst_113 {dimension_numbers = #tpu.dot_dimension_numbers<[1], [0], [0], [1], [0, 0, 1, 1], [], []>} : vector<36x32xf32>, vector<32x64xf32>, vector<36x64xf32> -> vector<36x64xf32>
    %c1_114 = arith.constant 1 : index
    %c0_115 = arith.constant 0 : index
    %153 = tpu.strided_load %arg11[%c1_114, %c0_115] {strides = array<i32: 2, 1>} : memref<74x32xf32, #tpu.memory_space<vmem>>, vector<36x32xf32>
    %cst_116 = arith.constant dense<0.000000e+00> : vector<36x64xf32>
    %154 = tpu.matmul %153, %7, %cst_116 {dimension_numbers = #tpu.dot_dimension_numbers<[1], [0], [0], [1], [0, 0, 1, 1], [], []>} : vector<36x32xf32>, vector<32x64xf32>, vector<36x64xf32> -> vector<36x64xf32>
    %c1_117 = arith.constant 1 : index
    %c0_118 = arith.constant 0 : index
    %155 = tpu.strided_load %arg11[%c1_117, %c0_118] {strides = array<i32: 2, 1>} : memref<74x32xf32, #tpu.memory_space<vmem>>, vector<36x32xf32>
    %cst_119 = arith.constant dense<0.000000e+00> : vector<36x64xf32>
    %156 = tpu.matmul %155, %9, %cst_119 {dimension_numbers = #tpu.dot_dimension_numbers<[1], [0], [0], [1], [0, 0, 1, 1], [], []>} : vector<36x32xf32>, vector<32x64xf32>, vector<36x64xf32> -> vector<36x64xf32>
    %157 = arith.addf %152, %156 : vector<36x64xf32>
    %c2_120 = arith.constant 2 : index
    %c0_121 = arith.constant 0 : index
    %158 = tpu.strided_load %arg11[%c2_120, %c0_121] {strides = array<i32: 2, 1>} : memref<74x32xf32, #tpu.memory_space<vmem>>, vector<36x32xf32>
    %cst_122 = arith.constant dense<0.000000e+00> : vector<36x64xf32>
    %159 = tpu.matmul %158, %9, %cst_122 {dimension_numbers = #tpu.dot_dimension_numbers<[1], [0], [0], [1], [0, 0, 1, 1], [], []>} : vector<36x32xf32>, vector<32x64xf32>, vector<36x64xf32> -> vector<36x64xf32>
    %160 = arith.addf %154, %159 : vector<36x64xf32>
    %c2_123 = arith.constant 2 : index
    %c0_124 = arith.constant 0 : index
    %161 = tpu.strided_load %arg11[%c2_123, %c0_124] {strides = array<i32: 2, 1>} : memref<74x32xf32, #tpu.memory_space<vmem>>, vector<36x32xf32>
    %cst_125 = arith.constant dense<0.000000e+00> : vector<36x64xf32>
    %162 = tpu.matmul %161, %11, %cst_125 {dimension_numbers = #tpu.dot_dimension_numbers<[1], [0], [0], [1], [0, 0, 1, 1], [], []>} : vector<36x32xf32>, vector<32x64xf32>, vector<36x64xf32> -> vector<36x64xf32>
    %163 = arith.addf %157, %162 : vector<36x64xf32>
    %c3_126 = arith.constant 3 : index
    %c0_127 = arith.constant 0 : index
    %164 = tpu.strided_load %arg11[%c3_126, %c0_127] {strides = array<i32: 2, 1>} : memref<74x32xf32, #tpu.memory_space<vmem>>, vector<36x32xf32>
    %cst_128 = arith.constant dense<0.000000e+00> : vector<36x64xf32>
    %165 = tpu.matmul %164, %11, %cst_128 {dimension_numbers = #tpu.dot_dimension_numbers<[1], [0], [0], [1], [0, 0, 1, 1], [], []>} : vector<36x32xf32>, vector<32x64xf32>, vector<36x64xf32> -> vector<36x64xf32>
    %166 = arith.addf %160, %165 : vector<36x64xf32>
    %167 = arith.maximumf %163, %166 : vector<36x64xf32>
    %168 = vector.broadcast %13 : vector<1x64xf32> to vector<36x64xf32>
    %169 = arith.addf %167, %168 : vector<36x64xf32>
    %cst_129 = arith.constant 0.000000e+00 : f32
    %170 = vector.broadcast %cst_129 : f32 to vector<36x64xf32>
    %171 = arith.maximumf %169, %170 : vector<36x64xf32>
    %172 = vector.extract_strided_slice %171 {offsets = [0, 0], sizes = [1, 64], strides = [1, 1]} : vector<36x64xf32> to vector<1x64xf32>
    %c1_130 = arith.constant 1 : index
    %c0_131 = arith.constant 0 : index
    %173 = vector.load %arg12[%c1_130, %c0_131] : memref<2x2304xf32, #tpu.memory_space<vmem>>, vector<1x64xf32>
    tpu.vector_store %arg12[%c1_130, %c0_131], %172 {strides = array<i32>} : memref<2x2304xf32, #tpu.memory_space<vmem>>, vector<1x64xf32>,
    %174 = vector.extract_strided_slice %171 {offsets = [1, 0], sizes = [1, 64], strides = [1, 1]} : vector<36x64xf32> to vector<1x64xf32>
    %c1_132 = arith.constant 1 : index
    %c64_133 = arith.constant 64 : index
    %175 = vector.load %arg12[%c1_132, %c64_133] : memref<2x2304xf32, #tpu.memory_space<vmem>>, vector<1x64xf32>
    tpu.vector_store %arg12[%c1_132, %c64_133], %174 {strides = array<i32>} : memref<2x2304xf32, #tpu.memory_space<vmem>>, vector<1x64xf32>,
    %176 = vector.extract_strided_slice %171 {offsets = [2, 0], sizes = [1, 64], strides = [1, 1]} : vector<36x64xf32> to vector<1x64xf32>
    %c1_134 = arith.constant 1 : index
    %c128_135 = arith.constant 128 : index
    %177 = vector.load %arg12[%c1_134, %c128_135] : memref<2x2304xf32, #tpu.memory_space<vmem>>, vector<1x64xf32>
    tpu.vector_store %arg12[%c1_134, %c128_135], %176 {strides = array<i32>} : memref<2x2304xf32, #tpu.memory_space<vmem>>, vector<1x64xf32>,
    %178 = vector.extract_strided_slice %171 {offsets = [3, 0], sizes = [1, 64], strides = [1, 1]} : vector<36x64xf32> to vector<1x64xf32>
    %c1_136 = arith.constant 1 : index
    %c192_137 = arith.constant 192 : index
    %179 = vector.load %arg12[%c1_136, %c192_137] : memref<2x2304xf32, #tpu.memory_space<vmem>>, vector<1x64xf32>
    tpu.vector_store %arg12[%c1_136, %c192_137], %178 {strides = array<i32>} : memref<2x2304xf32, #tpu.memory_space<vmem>>, vector<1x64xf32>,
    %180 = vector.extract_strided_slice %171 {offsets = [4, 0], sizes = [1, 64], strides = [1, 1]} : vector<36x64xf32> to vector<1x64xf32>
    %c1_138 = arith.constant 1 : index
    %c256_139 = arith.constant 256 : index
    %181 = vector.load %arg12[%c1_138, %c256_139] : memref<2x2304xf32, #tpu.memory_space<vmem>>, vector<1x64xf32>
    tpu.vector_store %arg12[%c1_138, %c256_139], %180 {strides = array<i32>} : memref<2x2304xf32, #tpu.memory_space<vmem>>, vector<1x64xf32>,
    %182 = vector.extract_strided_slice %171 {offsets = [5, 0], sizes = [1, 64], strides = [1, 1]} : vector<36x64xf32> to vector<1x64xf32>
    %c1_140 = arith.constant 1 : index
    %c320_141 = arith.constant 320 : index
    %183 = vector.load %arg12[%c1_140, %c320_141] : memref<2x2304xf32, #tpu.memory_space<vmem>>, vector<1x64xf32>
    tpu.vector_store %arg12[%c1_140, %c320_141], %182 {strides = array<i32>} : memref<2x2304xf32, #tpu.memory_space<vmem>>, vector<1x64xf32>,
    %184 = vector.extract_strided_slice %171 {offsets = [6, 0], sizes = [1, 64], strides = [1, 1]} : vector<36x64xf32> to vector<1x64xf32>
    %c1_142 = arith.constant 1 : index
    %c384_143 = arith.constant 384 : index
    %185 = vector.load %arg12[%c1_142, %c384_143] : memref<2x2304xf32, #tpu.memory_space<vmem>>, vector<1x64xf32>
    tpu.vector_store %arg12[%c1_142, %c384_143], %184 {strides = array<i32>} : memref<2x2304xf32, #tpu.memory_space<vmem>>, vector<1x64xf32>,
    %186 = vector.extract_strided_slice %171 {offsets = [7, 0], sizes = [1, 64], strides = [1, 1]} : vector<36x64xf32> to vector<1x64xf32>
    %c1_144 = arith.constant 1 : index
    %c448_145 = arith.constant 448 : index
    %187 = vector.load %arg12[%c1_144, %c448_145] : memref<2x2304xf32, #tpu.memory_space<vmem>>, vector<1x64xf32>
    tpu.vector_store %arg12[%c1_144, %c448_145], %186 {strides = array<i32>} : memref<2x2304xf32, #tpu.memory_space<vmem>>, vector<1x64xf32>,
    %188 = vector.extract_strided_slice %171 {offsets = [8, 0], sizes = [1, 64], strides = [1, 1]} : vector<36x64xf32> to vector<1x64xf32>
    %c1_146 = arith.constant 1 : index
    %c512_147 = arith.constant 512 : index
    %189 = vector.load %arg12[%c1_146, %c512_147] : memref<2x2304xf32, #tpu.memory_space<vmem>>, vector<1x64xf32>
    tpu.vector_store %arg12[%c1_146, %c512_147], %188 {strides = array<i32>} : memref<2x2304xf32, #tpu.memory_space<vmem>>, vector<1x64xf32>,
    %190 = vector.extract_strided_slice %171 {offsets = [9, 0], sizes = [1, 64], strides = [1, 1]} : vector<36x64xf32> to vector<1x64xf32>
    %c1_148 = arith.constant 1 : index
    %c576_149 = arith.constant 576 : index
    %191 = vector.load %arg12[%c1_148, %c576_149] : memref<2x2304xf32, #tpu.memory_space<vmem>>, vector<1x64xf32>
    tpu.vector_store %arg12[%c1_148, %c576_149], %190 {strides = array<i32>} : memref<2x2304xf32, #tpu.memory_space<vmem>>, vector<1x64xf32>,
    %192 = vector.extract_strided_slice %171 {offsets = [10, 0], sizes = [1, 64], strides = [1, 1]} : vector<36x64xf32> to vector<1x64xf32>
    %c1_150 = arith.constant 1 : index
    %c640_151 = arith.constant 640 : index
    %193 = vector.load %arg12[%c1_150, %c640_151] : memref<2x2304xf32, #tpu.memory_space<vmem>>, vector<1x64xf32>
    tpu.vector_store %arg12[%c1_150, %c640_151], %192 {strides = array<i32>} : memref<2x2304xf32, #tpu.memory_space<vmem>>, vector<1x64xf32>,
    %194 = vector.extract_strided_slice %171 {offsets = [11, 0], sizes = [1, 64], strides = [1, 1]} : vector<36x64xf32> to vector<1x64xf32>
    %c1_152 = arith.constant 1 : index
    %c704_153 = arith.constant 704 : index
    %195 = vector.load %arg12[%c1_152, %c704_153] : memref<2x2304xf32, #tpu.memory_space<vmem>>, vector<1x64xf32>
    tpu.vector_store %arg12[%c1_152, %c704_153], %194 {strides = array<i32>} : memref<2x2304xf32, #tpu.memory_space<vmem>>, vector<1x64xf32>,
    %196 = vector.extract_strided_slice %171 {offsets = [12, 0], sizes = [1, 64], strides = [1, 1]} : vector<36x64xf32> to vector<1x64xf32>
    %c1_154 = arith.constant 1 : index
    %c768_155 = arith.constant 768 : index
    %197 = vector.load %arg12[%c1_154, %c768_155] : memref<2x2304xf32, #tpu.memory_space<vmem>>, vector<1x64xf32>
    tpu.vector_store %arg12[%c1_154, %c768_155], %196 {strides = array<i32>} : memref<2x2304xf32, #tpu.memory_space<vmem>>, vector<1x64xf32>,
    %198 = vector.extract_strided_slice %171 {offsets = [13, 0], sizes = [1, 64], strides = [1, 1]} : vector<36x64xf32> to vector<1x64xf32>
    %c1_156 = arith.constant 1 : index
    %c832_157 = arith.constant 832 : index
    %199 = vector.load %arg12[%c1_156, %c832_157] : memref<2x2304xf32, #tpu.memory_space<vmem>>, vector<1x64xf32>
    tpu.vector_store %arg12[%c1_156, %c832_157], %198 {strides = array<i32>} : memref<2x2304xf32, #tpu.memory_space<vmem>>, vector<1x64xf32>,
    %200 = vector.extract_strided_slice %171 {offsets = [14, 0], sizes = [1, 64], strides = [1, 1]} : vector<36x64xf32> to vector<1x64xf32>
    %c1_158 = arith.constant 1 : index
    %c896_159 = arith.constant 896 : index
    %201 = vector.load %arg12[%c1_158, %c896_159] : memref<2x2304xf32, #tpu.memory_space<vmem>>, vector<1x64xf32>
    tpu.vector_store %arg12[%c1_158, %c896_159], %200 {strides = array<i32>} : memref<2x2304xf32, #tpu.memory_space<vmem>>, vector<1x64xf32>,
    %202 = vector.extract_strided_slice %171 {offsets = [15, 0], sizes = [1, 64], strides = [1, 1]} : vector<36x64xf32> to vector<1x64xf32>
    %c1_160 = arith.constant 1 : index
    %c960_161 = arith.constant 960 : index
    %203 = vector.load %arg12[%c1_160, %c960_161] : memref<2x2304xf32, #tpu.memory_space<vmem>>, vector<1x64xf32>
    tpu.vector_store %arg12[%c1_160, %c960_161], %202 {strides = array<i32>} : memref<2x2304xf32, #tpu.memory_space<vmem>>, vector<1x64xf32>,
    %204 = vector.extract_strided_slice %171 {offsets = [16, 0], sizes = [1, 64], strides = [1, 1]} : vector<36x64xf32> to vector<1x64xf32>
    %c1_162 = arith.constant 1 : index
    %c1024_163 = arith.constant 1024 : index
    %205 = vector.load %arg12[%c1_162, %c1024_163] : memref<2x2304xf32, #tpu.memory_space<vmem>>, vector<1x64xf32>
    tpu.vector_store %arg12[%c1_162, %c1024_163], %204 {strides = array<i32>} : memref<2x2304xf32, #tpu.memory_space<vmem>>, vector<1x64xf32>,
    %206 = vector.extract_strided_slice %171 {offsets = [17, 0], sizes = [1, 64], strides = [1, 1]} : vector<36x64xf32> to vector<1x64xf32>
    %c1_164 = arith.constant 1 : index
    %c1088_165 = arith.constant 1088 : index
    %207 = vector.load %arg12[%c1_164, %c1088_165] : memref<2x2304xf32, #tpu.memory_space<vmem>>, vector<1x64xf32>
    tpu.vector_store %arg12[%c1_164, %c1088_165], %206 {strides = array<i32>} : memref<2x2304xf32, #tpu.memory_space<vmem>>, vector<1x64xf32>,
    %208 = vector.extract_strided_slice %171 {offsets = [18, 0], sizes = [1, 64], strides = [1, 1]} : vector<36x64xf32> to vector<1x64xf32>
    %c1_166 = arith.constant 1 : index
    %c1152_167 = arith.constant 1152 : index
    %209 = vector.load %arg12[%c1_166, %c1152_167] : memref<2x2304xf32, #tpu.memory_space<vmem>>, vector<1x64xf32>
    tpu.vector_store %arg12[%c1_166, %c1152_167], %208 {strides = array<i32>} : memref<2x2304xf32, #tpu.memory_space<vmem>>, vector<1x64xf32>,
    %210 = vector.extract_strided_slice %171 {offsets = [19, 0], sizes = [1, 64], strides = [1, 1]} : vector<36x64xf32> to vector<1x64xf32>
    %c1_168 = arith.constant 1 : index
    %c1216_169 = arith.constant 1216 : index
    %211 = vector.load %arg12[%c1_168, %c1216_169] : memref<2x2304xf32, #tpu.memory_space<vmem>>, vector<1x64xf32>
    tpu.vector_store %arg12[%c1_168, %c1216_169], %210 {strides = array<i32>} : memref<2x2304xf32, #tpu.memory_space<vmem>>, vector<1x64xf32>,
    %212 = vector.extract_strided_slice %171 {offsets = [20, 0], sizes = [1, 64], strides = [1, 1]} : vector<36x64xf32> to vector<1x64xf32>
    %c1_170 = arith.constant 1 : index
    %c1280_171 = arith.constant 1280 : index
    %213 = vector.load %arg12[%c1_170, %c1280_171] : memref<2x2304xf32, #tpu.memory_space<vmem>>, vector<1x64xf32>
    tpu.vector_store %arg12[%c1_170, %c1280_171], %212 {strides = array<i32>} : memref<2x2304xf32, #tpu.memory_space<vmem>>, vector<1x64xf32>,
    %214 = vector.extract_strided_slice %171 {offsets = [21, 0], sizes = [1, 64], strides = [1, 1]} : vector<36x64xf32> to vector<1x64xf32>
    %c1_172 = arith.constant 1 : index
    %c1344_173 = arith.constant 1344 : index
    %215 = vector.load %arg12[%c1_172, %c1344_173] : memref<2x2304xf32, #tpu.memory_space<vmem>>, vector<1x64xf32>
    tpu.vector_store %arg12[%c1_172, %c1344_173], %214 {strides = array<i32>} : memref<2x2304xf32, #tpu.memory_space<vmem>>, vector<1x64xf32>,
    %216 = vector.extract_strided_slice %171 {offsets = [22, 0], sizes = [1, 64], strides = [1, 1]} : vector<36x64xf32> to vector<1x64xf32>
    %c1_174 = arith.constant 1 : index
    %c1408_175 = arith.constant 1408 : index
    %217 = vector.load %arg12[%c1_174, %c1408_175] : memref<2x2304xf32, #tpu.memory_space<vmem>>, vector<1x64xf32>
    tpu.vector_store %arg12[%c1_174, %c1408_175], %216 {strides = array<i32>} : memref<2x2304xf32, #tpu.memory_space<vmem>>, vector<1x64xf32>,
    %218 = vector.extract_strided_slice %171 {offsets = [23, 0], sizes = [1, 64], strides = [1, 1]} : vector<36x64xf32> to vector<1x64xf32>
    %c1_176 = arith.constant 1 : index
    %c1472_177 = arith.constant 1472 : index
    %219 = vector.load %arg12[%c1_176, %c1472_177] : memref<2x2304xf32, #tpu.memory_space<vmem>>, vector<1x64xf32>
    tpu.vector_store %arg12[%c1_176, %c1472_177], %218 {strides = array<i32>} : memref<2x2304xf32, #tpu.memory_space<vmem>>, vector<1x64xf32>,
    %220 = vector.extract_strided_slice %171 {offsets = [24, 0], sizes = [1, 64], strides = [1, 1]} : vector<36x64xf32> to vector<1x64xf32>
    %c1_178 = arith.constant 1 : index
    %c1536_179 = arith.constant 1536 : index
    %221 = vector.load %arg12[%c1_178, %c1536_179] : memref<2x2304xf32, #tpu.memory_space<vmem>>, vector<1x64xf32>
    tpu.vector_store %arg12[%c1_178, %c1536_179], %220 {strides = array<i32>} : memref<2x2304xf32, #tpu.memory_space<vmem>>, vector<1x64xf32>,
    %222 = vector.extract_strided_slice %171 {offsets = [25, 0], sizes = [1, 64], strides = [1, 1]} : vector<36x64xf32> to vector<1x64xf32>
    %c1_180 = arith.constant 1 : index
    %c1600_181 = arith.constant 1600 : index
    %223 = vector.load %arg12[%c1_180, %c1600_181] : memref<2x2304xf32, #tpu.memory_space<vmem>>, vector<1x64xf32>
    tpu.vector_store %arg12[%c1_180, %c1600_181], %222 {strides = array<i32>} : memref<2x2304xf32, #tpu.memory_space<vmem>>, vector<1x64xf32>,
    %224 = vector.extract_strided_slice %171 {offsets = [26, 0], sizes = [1, 64], strides = [1, 1]} : vector<36x64xf32> to vector<1x64xf32>
    %c1_182 = arith.constant 1 : index
    %c1664_183 = arith.constant 1664 : index
    %225 = vector.load %arg12[%c1_182, %c1664_183] : memref<2x2304xf32, #tpu.memory_space<vmem>>, vector<1x64xf32>
    tpu.vector_store %arg12[%c1_182, %c1664_183], %224 {strides = array<i32>} : memref<2x2304xf32, #tpu.memory_space<vmem>>, vector<1x64xf32>,
    %226 = vector.extract_strided_slice %171 {offsets = [27, 0], sizes = [1, 64], strides = [1, 1]} : vector<36x64xf32> to vector<1x64xf32>
    %c1_184 = arith.constant 1 : index
    %c1728_185 = arith.constant 1728 : index
    %227 = vector.load %arg12[%c1_184, %c1728_185] : memref<2x2304xf32, #tpu.memory_space<vmem>>, vector<1x64xf32>
    tpu.vector_store %arg12[%c1_184, %c1728_185], %226 {strides = array<i32>} : memref<2x2304xf32, #tpu.memory_space<vmem>>, vector<1x64xf32>,
    %228 = vector.extract_strided_slice %171 {offsets = [28, 0], sizes = [1, 64], strides = [1, 1]} : vector<36x64xf32> to vector<1x64xf32>
    %c1_186 = arith.constant 1 : index
    %c1792_187 = arith.constant 1792 : index
    %229 = vector.load %arg12[%c1_186, %c1792_187] : memref<2x2304xf32, #tpu.memory_space<vmem>>, vector<1x64xf32>
    tpu.vector_store %arg12[%c1_186, %c1792_187], %228 {strides = array<i32>} : memref<2x2304xf32, #tpu.memory_space<vmem>>, vector<1x64xf32>,
    %230 = vector.extract_strided_slice %171 {offsets = [29, 0], sizes = [1, 64], strides = [1, 1]} : vector<36x64xf32> to vector<1x64xf32>
    %c1_188 = arith.constant 1 : index
    %c1856_189 = arith.constant 1856 : index
    %231 = vector.load %arg12[%c1_188, %c1856_189] : memref<2x2304xf32, #tpu.memory_space<vmem>>, vector<1x64xf32>
    tpu.vector_store %arg12[%c1_188, %c1856_189], %230 {strides = array<i32>} : memref<2x2304xf32, #tpu.memory_space<vmem>>, vector<1x64xf32>,
    %232 = vector.extract_strided_slice %171 {offsets = [30, 0], sizes = [1, 64], strides = [1, 1]} : vector<36x64xf32> to vector<1x64xf32>
    %c1_190 = arith.constant 1 : index
    %c1920_191 = arith.constant 1920 : index
    %233 = vector.load %arg12[%c1_190, %c1920_191] : memref<2x2304xf32, #tpu.memory_space<vmem>>, vector<1x64xf32>
    tpu.vector_store %arg12[%c1_190, %c1920_191], %232 {strides = array<i32>} : memref<2x2304xf32, #tpu.memory_space<vmem>>, vector<1x64xf32>,
    %234 = vector.extract_strided_slice %171 {offsets = [31, 0], sizes = [1, 64], strides = [1, 1]} : vector<36x64xf32> to vector<1x64xf32>
    %c1_192 = arith.constant 1 : index
    %c1984_193 = arith.constant 1984 : index
    %235 = vector.load %arg12[%c1_192, %c1984_193] : memref<2x2304xf32, #tpu.memory_space<vmem>>, vector<1x64xf32>
    tpu.vector_store %arg12[%c1_192, %c1984_193], %234 {strides = array<i32>} : memref<2x2304xf32, #tpu.memory_space<vmem>>, vector<1x64xf32>,
    %236 = vector.extract_strided_slice %171 {offsets = [32, 0], sizes = [1, 64], strides = [1, 1]} : vector<36x64xf32> to vector<1x64xf32>
    %c1_194 = arith.constant 1 : index
    %c2048_195 = arith.constant 2048 : index
    %237 = vector.load %arg12[%c1_194, %c2048_195] : memref<2x2304xf32, #tpu.memory_space<vmem>>, vector<1x64xf32>
    tpu.vector_store %arg12[%c1_194, %c2048_195], %236 {strides = array<i32>} : memref<2x2304xf32, #tpu.memory_space<vmem>>, vector<1x64xf32>,
    %238 = vector.extract_strided_slice %171 {offsets = [33, 0], sizes = [1, 64], strides = [1, 1]} : vector<36x64xf32> to vector<1x64xf32>
    %c1_196 = arith.constant 1 : index
    %c2112_197 = arith.constant 2112 : index
    %239 = vector.load %arg12[%c1_196, %c2112_197] : memref<2x2304xf32, #tpu.memory_space<vmem>>, vector<1x64xf32>
    tpu.vector_store %arg12[%c1_196, %c2112_197], %238 {strides = array<i32>} : memref<2x2304xf32, #tpu.memory_space<vmem>>, vector<1x64xf32>,
    %240 = vector.extract_strided_slice %171 {offsets = [34, 0], sizes = [1, 64], strides = [1, 1]} : vector<36x64xf32> to vector<1x64xf32>
    %c1_198 = arith.constant 1 : index
    %c2176_199 = arith.constant 2176 : index
    %241 = vector.load %arg12[%c1_198, %c2176_199] : memref<2x2304xf32, #tpu.memory_space<vmem>>, vector<1x64xf32>
    tpu.vector_store %arg12[%c1_198, %c2176_199], %240 {strides = array<i32>} : memref<2x2304xf32, #tpu.memory_space<vmem>>, vector<1x64xf32>,
    %242 = vector.extract_strided_slice %171 {offsets = [35, 0], sizes = [1, 64], strides = [1, 1]} : vector<36x64xf32> to vector<1x64xf32>
    %c1_200 = arith.constant 1 : index
    %c2240_201 = arith.constant 2240 : index
    %243 = vector.load %arg12[%c1_200, %c2240_201] : memref<2x2304xf32, #tpu.memory_space<vmem>>, vector<1x64xf32>
    tpu.vector_store %arg12[%c1_200, %c2240_201], %242 {strides = array<i32>} : memref<2x2304xf32, #tpu.memory_space<vmem>>, vector<1x64xf32>,
    %c0_202 = arith.constant 0 : index
    %c0_203 = arith.constant 0 : index
    %244 = vector.load %arg12[%c0_202, %c0_203] : memref<2x2304xf32, #tpu.memory_space<vmem>>, vector<2x2304xf32>
    %245 = arith.truncf %244 : vector<2x2304xf32> to vector<2x2304xbf16>
    %c0_204 = arith.constant 0 : index
    %c0_205 = arith.constant 0 : index
    %246 = vector.load %arg6[%c0_204, %c0_205] : memref<2304x128xbf16, #tpu.memory_space<vmem>>, vector<2304x128xbf16>
    %cst_206 = arith.constant dense<0.000000e+00> : vector<2x128xf32>
    %247 = tpu.matmul %245, %246, %cst_206 {dimension_numbers = #tpu.dot_dimension_numbers<[1], [0], [0], [1], [0, 0, 1, 1], [], []>} : vector<2x2304xbf16>, vector<2304x128xbf16>, vector<2x128xf32> -> vector<2x128xf32>
    %c0_207 = arith.constant 0 : index
    %c0_208 = arith.constant 0 : index
    %248 = vector.load %arg7[%c0_207, %c0_208] : memref<1x128xf32, #tpu.memory_space<vmem>>, vector<1x128xf32>
    %249 = vector.broadcast %248 : vector<1x128xf32> to vector<2x128xf32>
    %250 = arith.addf %247, %249 : vector<2x128xf32>
    %cst_209 = arith.constant 0.000000e+00 : f32
    %251 = vector.broadcast %cst_209 : f32 to vector<2x128xf32>
    %252 = arith.maximumf %250, %251 : vector<2x128xf32>
    %253 = arith.truncf %252 : vector<2x128xf32> to vector<2x128xbf16>
    %c0_210 = arith.constant 0 : index
    %c0_211 = arith.constant 0 : index
    %254 = vector.load %arg8[%c0_210, %c0_211] : memref<128x6xbf16, #tpu.memory_space<vmem>>, vector<128x6xbf16>
    %cst_212 = arith.constant dense<0.000000e+00> : vector<2x6xf32>
    %255 = tpu.matmul %253, %254, %cst_212 {dimension_numbers = #tpu.dot_dimension_numbers<[1], [0], [0], [1], [0, 0, 1, 1], [], []>} : vector<2x128xbf16>, vector<128x6xbf16>, vector<2x6xf32> -> vector<2x6xf32>
    %c0_213 = arith.constant 0 : index
    %c0_214 = arith.constant 0 : index
    %256 = vector.load %arg9[%c0_213, %c0_214] : memref<1x6xf32, #tpu.memory_space<vmem>>, vector<1x6xf32>
    %257 = vector.broadcast %256 : vector<1x6xf32> to vector<2x6xf32>
    %258 = arith.addf %255, %257 : vector<2x6xf32>
    %c0_215 = arith.constant 0 : index
    %c0_216 = arith.constant 0 : index
    %259 = vector.load %arg10[%c0_215, %c0_216] : memref<2x6xf32, #tpu.memory_space<vmem>>, vector<2x6xf32>
    tpu.vector_store %arg10[%c0_215, %c0_216], %258 {strides = array<i32>} : memref<2x6xf32, #tpu.memory_space<vmem>>, vector<2x6xf32>,
    return
  }
  func.func @transform_0(%arg0: i32) -> (i32, i32) {
    %c0_i32 = arith.constant 0 : i32
    %c0_i32_0 = arith.constant 0 : i32
    return %arg0, %c0_i32 : i32, i32
  }
  func.func @transform_1(%arg0: i32) -> (i32, i32, i32) {
    %c0_i32 = arith.constant 0 : i32
    %c0_i32_0 = arith.constant 0 : i32
    %c0_i32_1 = arith.constant 0 : i32
    %c0_i32_2 = arith.constant 0 : i32
    return %c0_i32, %c0_i32_0, %c0_i32_1 : i32, i32, i32
  }
  func.func @transform_2(%arg0: i32) -> (i32, i32) {
    %c0_i32 = arith.constant 0 : i32
    %c0_i32_0 = arith.constant 0 : i32
    %c0_i32_1 = arith.constant 0 : i32
    return %c0_i32, %c0_i32_0 : i32, i32
  }
  func.func @transform_3(%arg0: i32) -> (i32, i32, i32) {
    %c0_i32 = arith.constant 0 : i32
    %c0_i32_0 = arith.constant 0 : i32
    %c0_i32_1 = arith.constant 0 : i32
    %c0_i32_2 = arith.constant 0 : i32
    return %c0_i32, %c0_i32_0, %c0_i32_1 : i32, i32, i32
  }
  func.func @transform_4(%arg0: i32) -> (i32, i32) {
    %c0_i32 = arith.constant 0 : i32
    %c0_i32_0 = arith.constant 0 : i32
    %c0_i32_1 = arith.constant 0 : i32
    return %c0_i32, %c0_i32_0 : i32, i32
  }
  func.func @transform_5(%arg0: i32) -> (i32, i32) {
    %c0_i32 = arith.constant 0 : i32
    %c0_i32_0 = arith.constant 0 : i32
    %c0_i32_1 = arith.constant 0 : i32
    return %c0_i32, %c0_i32_0 : i32, i32
  }
  func.func @transform_6(%arg0: i32) -> (i32, i32) {
    %c0_i32 = arith.constant 0 : i32
    %c0_i32_0 = arith.constant 0 : i32
    %c0_i32_1 = arith.constant 0 : i32
    return %c0_i32, %c0_i32_0 : i32, i32
  }
  func.func @transform_7(%arg0: i32) -> (i32, i32) {
    %c0_i32 = arith.constant 0 : i32
    %c0_i32_0 = arith.constant 0 : i32
    %c0_i32_1 = arith.constant 0 : i32
    return %c0_i32, %c0_i32_0 : i32, i32
  }
  func.func @transform_8(%arg0: i32) -> (i32, i32) {
    %c0_i32 = arith.constant 0 : i32
    %c0_i32_0 = arith.constant 0 : i32
    %c0_i32_1 = arith.constant 0 : i32
    return %c0_i32, %c0_i32_0 : i32, i32
  }
  func.func @transform_9(%arg0: i32) -> (i32, i32) {
    %c0_i32 = arith.constant 0 : i32
    %c0_i32_0 = arith.constant 0 : i32
    return %arg0, %c0_i32 : i32, i32
  }
}

</mosaic_0001>

<llo_original>
// kernel: convnet_forward.1
$region0: #{convnet_forward.1}
  #allocation0 [shape = 'u32[]', space=smem, size = 0x4, offset = 0x4, fixed_abs, tag = 'smem constant byte address 0x4 - core index']
  #allocation1 [shape = 'u32[144,128]{1,0:T(1,128)}', space=vmem, size = 0x12000, scoped, tag = 'internal scratch']
  #allocation2 [shape = 'f32[74,32]{1,0:T(8,128)}', space=vmem, size = 0xa000, scoped, tag = 'scratch operand']
  #allocation3 [shape = 'f32[2,2304]{1,0:T(2,128)}', space=vmem, size = 0x4800, scoped, tag = 'scratch operand']
  %s0 = inlined_call_operand.vmem [shape: f32[300,6], index: 0, kind: input, shape index: {}]
  %s1 = inlined_call_operand.vmem [shape: f32[3,6,32], index: 1, kind: input, shape index: {}]
  %s2 = inlined_call_operand.vmem [shape: f32[1,32], index: 2, kind: input, shape index: {}]
  %s3 = inlined_call_operand.vmem [shape: f32[3,32,64], index: 3, kind: input, shape index: {}]
  %s4 = inlined_call_operand.vmem [shape: f32[1,64], index: 4, kind: input, shape index: {}]
  %s5 = inlined_call_operand.hbm [shape: bf16[2304,128], index: 5, kind: input, shape index: {}]
  %s6 = inlined_call_operand.vmem [shape: f32[1,128], index: 6, kind: input, shape index: {}]
  %s7 = inlined_call_operand.vmem [shape: bf16[128,6], index: 7, kind: input, shape index: {}]
  %s8 = inlined_call_operand.vmem [shape: f32[1,6], index: 8, kind: input, shape index: {}]
  %s9 = inlined_call_operand.hbm [shape: f32[2,6], index: 9, kind: output, shape index: {}]
  %s10 = sld [smem:[#allocation0]]
  $region50: #{convnet_forward.1} parent=0
    _
  %s12 = ssub.s32 1, %s10
  %s13 = scalar_select 0, %s12, %s10
  $region1: #{convnet_forward.1} parent=0
    #allocation4 [shape = 'u8[589824]{0}', space=vmem, size = 0x90000, scoped, tag = 'input window, operand 5, single buffered']
    #allocation5 [shape = 's32[1]{0}', space=sflag, size = 0x4, scoped, tag = 'scoped memory for convnet_forward.1']
    #allocation6 [shape = 's32[1]{0}', space=sflag, size = 0x4, scoped, tag = 'scoped memory for convnet_forward.1']
    #allocation7 [shape = 'u8[1024]{0}', space=vmem, size = 0x400, scoped, tag = 'output window, operand 0, single buffered']
    %14 = vsyncpa [#allocation5], 0
    %15 = vsyncpa [#allocation6], 0
    // Predicated region
    $region2: #{convnet_forward.1} parent=1 // pred_check
      _
    $region3: #{convnet_forward.1} parent=1 // pred_check_branch
      %17 = sbr.rel (0) target = $region5
    $region4: #{convnet_forward.1} parent=1 // pred_region
      _
    $region5: #{convnet_forward.1} parent=1 // pred_fallthru
      _
    // Predicated region
    $region6: #{convnet_forward.1} parent=1 // pred_check
      _
    $region7: #{convnet_forward.1} parent=1 // pred_check_branch
      %19 = sbr.rel (0) target = $region9
    $region8: #{convnet_forward.1} parent=1 // pred_region
      _
    $region9: #{convnet_forward.1} parent=1 // pred_fallthru
      _
    // Predicated region
    $region10: #{convnet_forward.1} parent=1 // pred_check
      _
    $region11: #{convnet_forward.1} parent=1 // pred_check_branch
      %21 = sbr.rel (0) target = $region13
    $region12: #{convnet_forward.1} parent=1 // pred_region
      _
    $region13: #{convnet_forward.1} parent=1 // pred_fallthru
      _
    // Predicated region
    $region14: #{convnet_forward.1} parent=1 // pred_check
      _
    $region15: #{convnet_forward.1} parent=1 // pred_check_branch
      %23 = sbr.rel (0) target = $region17
    $region16: #{convnet_forward.1} parent=1 // pred_region
      _
    $region17: #{convnet_forward.1} parent=1 // pred_fallthru
      _
    // Predicated region
    $region18: #{convnet_forward.1} parent=1 // pred_check
      _
    $region19: #{convnet_forward.1} parent=1 // pred_check_branch
      %25 = sbr.rel (0) target = $region21
    $region20: #{convnet_forward.1} parent=1 // pred_region
      _
    $region21: #{convnet_forward.1} parent=1 // pred_fallthru
      _
    // Predicated region
    $region22: #{convnet_forward.1} parent=1 // pred_check
      _
    $region23: #{convnet_forward.1} parent=1 // pred_check_branch
      %27 = sbr.rel (0) target = $region25
    $region24: #{convnet_forward.1} parent=1 // pred_region
      %s29 = ssub.s32 18432, 18432
      %30 = vsyncadd [#allocation5], %s29
      %s31 = sshll.u32 [#allocation4], 4
      %s32 = int_to_ptr.vmem [resolvable:$true] %s31
      %37 = dma.hbm_to_vmem [thread:$0]  %s5, 18432, %s32, [#allocation5], 64, 64, 4
    $region25: #{convnet_forward.1} parent=1 // pred_fallthru
      _
    // Predicated region
    $region26: #{convnet_forward.1} parent=1 // pred_check
      _
    $region27: #{convnet_forward.1} parent=1 // pred_check_branch
      %39 = sbr.rel (0) target = $region29
    $region28: #{convnet_forward.1} parent=1 // pred_region
      _
    $region29: #{convnet_forward.1} parent=1 // pred_fallthru
      _
    // Predicated region
    $region30: #{convnet_forward.1} parent=1 // pred_check
      _
    $region31: #{convnet_forward.1} parent=1 // pred_check_branch
      %41 = sbr.rel (0) target = $region33
    $region32: #{convnet_forward.1} parent=1 // pred_region
      _
    $region33: #{convnet_forward.1} parent=1 // pred_fallthru
      _
    // Predicated region
    $region34: #{convnet_forward.1} parent=1 // pred_check
      _
    $region35: #{convnet_forward.1} parent=1 // pred_check_branch
      %43 = sbr.rel (0) target = $region37
    $region36: #{convnet_forward.1} parent=1 // pred_region
      _
    $region37: #{convnet_forward.1} parent=1 // pred_fallthru
      _
    // Predicated region
    $region38: #{convnet_forward.1} parent=1 // pred_check
      _
    $region39: #{convnet_forward.1} parent=1 // pred_check_branch
      %45 = sbr.rel (0) target = $region41
    $region40: #{convnet_forward.1} parent=1 // pred_region
      %46 = dma.done [#allocation5], 18432
    $region41: #{convnet_forward.1} parent=1 // pred_fallthru
      _
    %v48 = vld [vmem:[%s1] sm:$0x3f]
    %s49 = scalar_lea.vmem %s1, 8
    %v50 = vld [vmem:[%s49] sm:$0x3f]
    %s51 = scalar_lea.vmem %s1, 16
    %v52 = vld [vmem:[%s51] sm:$0x3f]
    %v53 = vld [vmem:[%s3] sm:$0xff]
    %v54 = vld [vmem:[%s3 + $0x8] sm:$0xff]
    %v55 = vld [vmem:[%s3 + $0x10] sm:$0xff]
    %v56 = vld [vmem:[%s3 + $0x18] sm:$0xff]
    %s57 = scalar_lea.vmem %s3, 32
    %v58 = vld [vmem:[%s57] sm:$0xff]
    %v59 = vld [vmem:[%s57 + $0x8] sm:$0xff]
    %v60 = vld [vmem:[%s57 + $0x10] sm:$0xff]
    %v61 = vld [vmem:[%s57 + $0x18] sm:$0xff]
    %s62 = scalar_lea.vmem %s3, 64
    %v63 = vld [vmem:[%s62] sm:$0xff]
    %v64 = vld [vmem:[%s62 + $0x8] sm:$0xff]
    %v65 = vld [vmem:[%s62 + $0x10] sm:$0xff]
    %v66 = vld [vmem:[%s62 + $0x18] sm:$0xff]
    %v67 = vld [vmem:[%s2] sm:$0x1]
    %v68 = vld [vmem:[%s4] sm:$0x1]
    %v69 = vld [vmem:[%s0] ss:$2 sm:$0xff]
    %s70 = scalar_lea.vmem %s0, 16
    %v71 = vld [vmem:[%s70] ss:$2 sm:$0xff]
    %s72 = scalar_lea.vmem %s0, 32
    %v73 = vld [vmem:[%s72] ss:$2 sm:$0xff]
    %s74 = scalar_lea.vmem %s0, 48
    %v75 = vld [vmem:[%s74] ss:$2 sm:$0xff]
    %s76 = scalar_lea.vmem %s0, 64
    %v77 = vld [vmem:[%s76] ss:$2 sm:$0xff]
    %s78 = scalar_lea.vmem %s0, 80
    %v79 = vld [vmem:[%s78] ss:$2 sm:$0xff]
    %s80 = scalar_lea.vmem %s0, 96
    %v81 = vld [vmem:[%s80] ss:$2 sm:$0xff]
    %s82 = scalar_lea.vmem %s0, 112
    %v83 = vld [vmem:[%s82] ss:$2 sm:$0xff]
    %s84 = scalar_lea.vmem %s0, 128
    %v85 = vld [vmem:[%s84] ss:$2 sm:$0xff]
    %s86 = scalar_lea.vmem %s0, 144
    %v87 = vld [vmem:[%s86] ss:$2 sm:$0x3]
    %s88 = scalar_lea.vmem %s0, 1
    %v89 = vld [vmem:[%s88] ss:$2 sm:$0xff]
    %s90 = scalar_lea.vmem %s0, 17
    %v91 = vld [vmem:[%s90] ss:$2 sm:$0xff]
    %s92 = scalar_lea.vmem %s0, 33
    %v93 = vld [vmem:[%s92] ss:$2 sm:$0xff]
    %s94 = scalar_lea.vmem %s0, 49
    %v95 = vld [vmem:[%s94] ss:$2 sm:$0xff]
    %s96 = scalar_lea.vmem %s0, 65
    %v97 = vld [vmem:[%s96] ss:$2 sm:$0xff]
    %s98 = scalar_lea.vmem %s0, 81
    %v99 = vld [vmem:[%s98] ss:$2 sm:$0xff]
    %s100 = scalar_lea.vmem %s0, 97
    %v101 = vld [vmem:[%s100] ss:$2 sm:$0xff]
    %s102 = scalar_lea.vmem %s0, 113
    %v103 = vld [vmem:[%s102] ss:$2 sm:$0xff]
    %s104 = scalar_lea.vmem %s0, 129
    %v105 = vld [vmem:[%s104] ss:$2 sm:$0xff]
    %s106 = scalar_lea.vmem %s0, 145
    %v107 = vld [vmem:[%s106] ss:$2 sm:$0x3]
    %vm108 = vcmask 48128
    %v110 = vsel %vm108, %v89, 0
    %v113 = vsel %vm108, %v91, 0
    %v116 = vsel %vm108, %v93, 0
    %v119 = vsel %vm108, %v95, 0
    %v122 = vsel %vm108, %v97, 0
    %v125 = vsel %vm108, %v99, 0
    %v128 = vsel %vm108, %v101, 0
    %v131 = vsel %vm108, %v103, 0
    %v134 = vsel %vm108, %v105, 0
    %v137 = vsel %vm108, %v107, 0
    %vm139 = vcmask 1045504
    %v141 = vsel %vm139, %v50, 0
    %143 = vmatprep.subr.mxu0 0.0
    %144 = vmatpush1.msra.mxu0 0.0
    %145 = vmatprep.subr.mxu0 0.0
    %146 = vmatpush1.msra.mxu0 0.0
    %147 = vmatprep.subr.mxu0 0.0
    %148 = vmatpush1.msra.mxu0 0.0
    %149 = vmatprep.subr.mxu0 0.0
    %150 = vmatpush1.msra.mxu0 0.0
    %151 = vmatprep.subr.mxu0 0.0
    %152 = vmatpush1.msra.mxu0 0.0
    %153 = vmatprep.subr.mxu0 0.0
    %154 = vmatpush1.msra.mxu0 0.0
    %155 = vmatprep.subr.mxu0 0.0
    %156 = vmatpush1.msra.mxu0 0.0
    %157 = vmatprep.subr.mxu0 0.0
    %158 = vmatpush1.msra.mxu0 0.0
    %159 = vmatprep.subr.mxu0 0.0
    %160 = vmatpush1.msra.mxu0 0.0
    %161 = vmatprep.subr.mxu0 0.0
    %162 = vmatpush1.msra.mxu0 0.0
    %163 = vmatprep.subr.mxu0 0.0
    %164 = vmatpush1.msra.mxu0 0.0
    %165 = vmatprep.subr.mxu0 0.0
    %166 = vmatpush1.msra.mxu0 0.0
    %167 = vmatprep.subr.mxu0 0.0
    %168 = vmatpush1.msra.mxu0 0.0
    %169 = vmatprep.subr.mxu0 0.0
    %170 = vmatpush1.msra.mxu0 0.0
    %171 = vmatprep.subr.mxu0 0.0
    %172 = vmatpush1.msra.mxu0 0.0
    %173 = vmatprep.subr.mxu0 0.0
    %174 = vmatpush1.msra.mxu0 %v141
    %175 = vmatprep.subr.mxu0 0.0
    %176 = vmatpush2.msra.mxu0 0.0
    %177 = vmatprep.subr.mxu0 0.0
    %178 = vmatpush2.msra.mxu0 0.0
    %179 = vmatprep.subr.mxu0 0.0
    %180 = vmatpush2.msra.mxu0 0.0
    %181 = vmatprep.subr.mxu0 0.0
    %182 = vmatpush2.msra.mxu0 0.0
    %183 = vmatprep.subr.mxu0 0.0
    %184 = vmatpush2.msra.mxu0 0.0
    %185 = vmatprep.subr.mxu0 0.0
    %186 = vmatpush2.msra.mxu0 0.0
    %187 = vmatprep.subr.mxu0 0.0
    %188 = vmatpush2.msra.mxu0 0.0
    %189 = vmatprep.subr.mxu0 0.0
    %190 = vmatpush2.msra.mxu0 0.0
    %191 = vmatprep.subr.mxu0 0.0
    %192 = vmatpush2.msra.mxu0 0.0
    %193 = vmatprep.subr.mxu0 0.0
    %194 = vmatpush2.msra.mxu0 0.0
    %195 = vmatprep.subr.mxu0 0.0
    %196 = vmatpush2.msra.mxu0 0.0
    %197 = vmatprep.subr.mxu0 0.0
    %198 = vmatpush2.msra.mxu0 0.0
    %199 = vmatprep.subr.mxu0 0.0
    %200 = vmatpush2.msra.mxu0 0.0
    %201 = vmatprep.subr.mxu0 0.0
    %202 = vmatpush2.msra.mxu0 0.0
    %203 = vmatprep.subr.mxu0 0.0
    %204 = vmatpush2.msra.mxu0 0.0
    %205 = vmatprep.subr.mxu0 0.0
    %206 = vmatpush2.msra.mxu0 0.0
    %207 = vmatprep.mubr.f32.mxu0 0.0
    %208 = vmatmul.mubr.f32.gmra.mxu0 %v110
    %v209 = vpop.f32.mrf.mxu0
    %v210 = vadd.f32 0.0, %v209
    %v211 = vpop.f32.mrf.mxu0
    %212 = vmatprep.mubr.f32.mxu0 0.0
    %213 = vmatmul.mubr.f32.gmra.mxu0 %v113
    %v214 = vpop.f32.mrf.mxu0
    %v215 = vadd.f32 0.0, %v214
    %v216 = vpop.f32.mrf.mxu0
    %217 = vmatprep.mubr.f32.mxu0 0.0
    %218 = vmatmul.mubr.f32.gmra.mxu0 %v116
    %v219 = vpop.f32.mrf.mxu0
    %v220 = vadd.f32 0.0, %v219
    %v221 = vpop.f32.mrf.mxu0
    %222 = vmatprep.mubr.f32.mxu0 0.0
    %223 = vmatmul.mubr.f32.gmra.mxu0 %v119
    %v224 = vpop.f32.mrf.mxu0
    %v225 = vadd.f32 0.0, %v224
    %v226 = vpop.f32.mrf.mxu0
    %227 = vmatprep.mubr.f32.mxu0 0.0
    %228 = vmatmul.mubr.f32.gmra.mxu0 %v122
    %v229 = vpop.f32.mrf.mxu0
    %v230 = vadd.f32 0.0, %v229
    %v231 = vpop.f32.mrf.mxu0
    %232 = vmatprep.mubr.f32.mxu0 0.0
    %233 = vmatmul.mubr.f32.gmra.mxu0 %v125
    %v234 = vpop.f32.mrf.mxu0
    %v235 = vadd.f32 0.0, %v234
    %v236 = vpop.f32.mrf.mxu0
    %237 = vmatprep.mubr.f32.mxu0 0.0
    %238 = vmatmul.mubr.f32.gmra.mxu0 %v128
    %v239 = vpop.f32.mrf.mxu0
    %v240 = vadd.f32 0.0, %v239
    %v241 = vpop.f32.mrf.mxu0
    %242 = vmatprep.mubr.f32.mxu0 0.0
    %243 = vmatmul.mubr.f32.gmra.mxu0 %v131
    %v244 = vpop.f32.mrf.mxu0
    %v245 = vadd.f32 0.0, %v244
    %v246 = vpop.f32.mrf.mxu0
    %247 = vmatprep.mubr.f32.mxu0 0.0
    %248 = vmatmul.mubr.f32.gmra.mxu0 %v134
    %v249 = vpop.f32.mrf.mxu0
    %v250 = vadd.f32 0.0, %v249
    %v251 = vpop.f32.mrf.mxu0
    %252 = vmatprep.mubr.f32.mxu0 0.0
    %253 = vmatmul.mubr.f32.gmra.mxu0 %v137
    %v254 = vpop.f32.mrf.mxu0
    %v255 = vadd.f32 0.0, %v254
    %v256 = vpop.f32.mrf.mxu0
    %257 = vdwg.mxu0
    %v259 = vsel %vm108, %v69, 0
    %v262 = vsel %vm108, %v71, 0
    %v265 = vsel %vm108, %v73, 0
    %v268 = vsel %vm108, %v75, 0
    %v271 = vsel %vm108, %v77, 0
    %v274 = vsel %vm108, %v79, 0
    %v277 = vsel %vm108, %v81, 0
    %v280 = vsel %vm108, %v83, 0
    %v283 = vsel %vm108, %v85, 0
    %v286 = vsel %vm108, %v87, 0
    %v289 = vsel %vm139, %v48, 0
    %291 = vmatprep.subr.mxu0 0.0
    %292 = vmatpush1.msra.mxu0 0.0
    %293 = vmatprep.subr.mxu0 0.0
    %294 = vmatpush1.msra.mxu0 0.0
    %295 = vmatprep.subr.mxu0 0.0
    %296 = vmatpush1.msra.mxu0 0.0
    %297 = vmatprep.subr.mxu0 0.0
    %298 = vmatpush1.msra.mxu0 0.0
    %299 = vmatprep.subr.mxu0 0.0
    %300 = vmatpush1.msra.mxu0 0.0
    %301 = vmatprep.subr.mxu0 0.0
    %302 = vmatpush1.msra.mxu0 0.0
    %303 = vmatprep.subr.mxu0 0.0
    %304 = vmatpush1.msra.mxu0 0.0
    %305 = vmatprep.subr.mxu0 0.0
    %306 = vmatpush1.msra.mxu0 0.0
    %307 = vmatprep.subr.mxu0 0.0
    %308 = vmatpush1.msra.mxu0 0.0
    %309 = vmatprep.subr.mxu0 0.0
    %310 = vmatpush1.msra.mxu0 0.0
    %311 = vmatprep.subr.mxu0 0.0
    %312 = vmatpush1.msra.mxu0 0.0
    %313 = vmatprep.subr.mxu0 0.0
    %314 = vmatpush1.msra.mxu0 0.0
    %315 = vmatprep.subr.mxu0 0.0
    %316 = vmatpush1.msra.mxu0 0.0
    %317 = vmatprep.subr.mxu0 0.0
    %318 = vmatpush1.msra.mxu0 0.0
    %319 = vmatprep.subr.mxu0 0.0
    %320 = vmatpush1.msra.mxu0 0.0
    %321 = vmatprep.subr.mxu0 0.0
    %322 = vmatpush1.msra.mxu0 %v289
    %323 = vmatprep.subr.mxu0 0.0
    %324 = vmatpush2.msra.mxu0 0.0
    %325 = vmatprep.subr.mxu0 0.0
    %326 = vmatpush2.msra.mxu0 0.0
    %327 = vmatprep.subr.mxu0 0.0
    %328 = vmatpush2.msra.mxu0 0.0
    %329 = vmatprep.subr.mxu0 0.0
    %330 = vmatpush2.msra.mxu0 0.0
    %331 = vmatprep.subr.mxu0 0.0
    %332 = vmatpush2.msra.mxu0 0.0
    %333 = vmatprep.subr.mxu0 0.0
    %334 = vmatpush2.msra.mxu0 0.0
    %335 = vmatprep.subr.mxu0 0.0
    %336 = vmatpush2.msra.mxu0 0.0
    %337 = vmatprep.subr.mxu0 0.0
    %338 = vmatpush2.msra.mxu0 0.0
    %339 = vmatprep.subr.mxu0 0.0
    %340 = vmatpush2.msra.mxu0 0.0
    %341 = vmatprep.subr.mxu0 0.0
    %342 = vmatpush2.msra.mxu0 0.0
    %343 = vmatprep.subr.mxu0 0.0
    %344 = vmatpush2.msra.mxu0 0.0
    %345 = vmatprep.subr.mxu0 0.0
    %346 = vmatpush2.msra.mxu0 0.0
    %347 = vmatprep.subr.mxu0 0.0
    %348 = vmatpush2.msra.mxu0 0.0
    %349 = vmatprep.subr.mxu0 0.0
    %350 = vmatpush2.msra.mxu0 0.0
    %351 = vmatprep.subr.mxu0 0.0
    %352 = vmatpush2.msra.mxu0 0.0
    %353 = vmatprep.subr.mxu0 0.0
    %354 = vmatpush2.msra.mxu0 0.0
    %355 = vmatprep.mubr.f32.mxu0 0.0
    %356 = vmatmul.mubr.f32.gmra.mxu0 %v259
    %v357 = vpop.f32.mrf.mxu0
    %v358 = vadd.f32 %v210, %v357
    %v359 = vpop.f32.mrf.mxu0
    %360 = vmatprep.mubr.f32.mxu0 0.0
    %361 = vmatmul.mubr.f32.gmra.mxu0 %v262
    %v362 = vpop.f32.mrf.mxu0
    %v363 = vadd.f32 %v215, %v362
    %v364 = vpop.f32.mrf.mxu0
    %365 = vmatprep.mubr.f32.mxu0 0.0
    %366 = vmatmul.mubr.f32.gmra.mxu0 %v265
    %v367 = vpop.f32.mrf.mxu0
    %v368 = vadd.f32 %v220, %v367
    %v369 = vpop.f32.mrf.mxu0
    %370 = vmatprep.mubr.f32.mxu0 0.0
    %371 = vmatmul.mubr.f32.gmra.mxu0 %v268
    %v372 = vpop.f32.mrf.mxu0
    %v373 = vadd.f32 %v225, %v372
    %v374 = vpop.f32.mrf.mxu0
    %375 = vmatprep.mubr.f32.mxu0 0.0
    %376 = vmatmul.mubr.f32.gmra.mxu0 %v271
    %v377 = vpop.f32.mrf.mxu0
    %v378 = vadd.f32 %v230, %v377
    %v379 = vpop.f32.mrf.mxu0
    %380 = vmatprep.mubr.f32.mxu0 0.0
    %381 = vmatmul.mubr.f32.gmra.mxu0 %v274
    %v382 = vpop.f32.mrf.mxu0
    %v383 = vadd.f32 %v235, %v382
    %v384 = vpop.f32.mrf.mxu0
    %385 = vmatprep.mubr.f32.mxu0 0.0
    %386 = vmatmul.mubr.f32.gmra.mxu0 %v277
    %v387 = vpop.f32.mrf.mxu0
    %v388 = vadd.f32 %v240, %v387
    %v389 = vpop.f32.mrf.mxu0
    %390 = vmatprep.mubr.f32.mxu0 0.0
    %391 = vmatmul.mubr.f32.gmra.mxu0 %v280
    %v392 = vpop.f32.mrf.mxu0
    %v393 = vadd.f32 %v245, %v392
    %v394 = vpop.f32.mrf.mxu0
    %395 = vmatprep.mubr.f32.mxu0 0.0
    %396 = vmatmul.mubr.f32.gmra.mxu0 %v283
    %v397 = vpop.f32.mrf.mxu0
    %v398 = vadd.f32 %v250, %v397
    %v399 = vpop.f32.mrf.mxu0
    %400 = vmatprep.mubr.f32.mxu0 0.0
    %401 = vmatmul.mubr.f32.gmra.mxu0 %v286
    %v402 = vpop.f32.mrf.mxu0
    %v403 = vadd.f32 %v255, %v402
    %v404 = vpop.f32.mrf.mxu0
    %405 = vdwg.mxu0
    %s406 = scalar_lea.vmem %s0, 2
    %v407 = vld [vmem:[%s406] ss:$2 sm:$0xff]
    %s408 = scalar_lea.vmem %s0, 18
    %v409 = vld [vmem:[%s408] ss:$2 sm:$0xff]
    %s410 = scalar_lea.vmem %s0, 34
    %v411 = vld [vmem:[%s410] ss:$2 sm:$0xff]
    %s412 = scalar_lea.vmem %s0, 50
    %v413 = vld [vmem:[%s412] ss:$2 sm:$0xff]
    %s414 = scalar_lea.vmem %s0, 66
    %v415 = vld [vmem:[%s414] ss:$2 sm:$0xff]
    %s416 = scalar_lea.vmem %s0, 82
    %v417 = vld [vmem:[%s416] ss:$2 sm:$0xff]
    %s418 = scalar_lea.vmem %s0, 98
    %v419 = vld [vmem:[%s418] ss:$2 sm:$0xff]
    %s420 = scalar_lea.vmem %s0, 114
    %v421 = vld [vmem:[%s420] ss:$2 sm:$0xff]
    %s422 = scalar_lea.vmem %s0, 130
    %v423 = vld [vmem:[%s422] ss:$2 sm:$0xff]
    %s424 = scalar_lea.vmem %s0, 146
    %v425 = vld [vmem:[%s424] ss:$2 sm:$0x3]
    %v427 = vsel %vm108, %v407, 0
    %v430 = vsel %vm108, %v409, 0
    %v433 = vsel %vm108, %v411, 0
    %v436 = vsel %vm108, %v413, 0
    %v439 = vsel %vm108, %v415, 0
    %v442 = vsel %vm108, %v417, 0
    %v445 = vsel %vm108, %v419, 0
    %v448 = vsel %vm108, %v421, 0
    %v451 = vsel %vm108, %v423, 0
    %v454 = vsel %vm108, %v425, 0
    %456 = vmatprep.subr.mxu0 0.0
    %457 = vmatpush1.msra.mxu0 0.0
    %458 = vmatprep.subr.mxu0 0.0
    %459 = vmatpush1.msra.mxu0 0.0
    %460 = vmatprep.subr.mxu0 0.0
    %461 = vmatpush1.msra.mxu0 0.0
    %462 = vmatprep.subr.mxu0 0.0
    %463 = vmatpush1.msra.mxu0 0.0
    %464 = vmatprep.subr.mxu0 0.0
    %465 = vmatpush1.msra.mxu0 0.0
    %466 = vmatprep.subr.mxu0 0.0
    %467 = vmatpush1.msra.mxu0 0.0
    %468 = vmatprep.subr.mxu0 0.0
    %469 = vmatpush1.msra.mxu0 0.0
    %470 = vmatprep.subr.mxu0 0.0
    %471 = vmatpush1.msra.mxu0 0.0
    %472 = vmatprep.subr.mxu0 0.0
    %473 = vmatpush1.msra.mxu0 0.0
    %474 = vmatprep.subr.mxu0 0.0
    %475 = vmatpush1.msra.mxu0 0.0
    %476 = vmatprep.subr.mxu0 0.0
    %477 = vmatpush1.msra.mxu0 0.0
    %478 = vmatprep.subr.mxu0 0.0
    %479 = vmatpush1.msra.mxu0 0.0
    %480 = vmatprep.subr.mxu0 0.0
    %481 = vmatpush1.msra.mxu0 0.0
    %482 = vmatprep.subr.mxu0 0.0
    %483 = vmatpush1.msra.mxu0 0.0
    %484 = vmatprep.subr.mxu0 0.0
    %485 = vmatpush1.msra.mxu0 0.0
    %486 = vmatprep.subr.mxu0 0.0
    %487 = vmatpush1.msra.mxu0 %v141
    %488 = vmatprep.subr.mxu0 0.0
    %489 = vmatpush2.msra.mxu0 0.0
    %490 = vmatprep.subr.mxu0 0.0
    %491 = vmatpush2.msra.mxu0 0.0
    %492 = vmatprep.subr.mxu0 0.0
    %493 = vmatpush2.msra.mxu0 0.0
    %494 = vmatprep.subr.mxu0 0.0
    %495 = vmatpush2.msra.mxu0 0.0
    %496 = vmatprep.subr.mxu0 0.0
    %497 = vmatpush2.msra.mxu0 0.0
    %498 = vmatprep.subr.mxu0 0.0
    %499 = vmatpush2.msra.mxu0 0.0
    %500 = vmatprep.subr.mxu0 0.0
    %501 = vmatpush2.msra.mxu0 0.0
    %502 = vmatprep.subr.mxu0 0.0
    %503 = vmatpush2.msra.mxu0 0.0
    %504 = vmatprep.subr.mxu0 0.0
    %505 = vmatpush2.msra.mxu0 0.0
    %506 = vmatprep.subr.mxu0 0.0
    %507 = vmatpush2.msra.mxu0 0.0
    %508 = vmatprep.subr.mxu0 0.0
    %509 = vmatpush2.msra.mxu0 0.0
    %510 = vmatprep.subr.mxu0 0.0
    %511 = vmatpush2.msra.mxu0 0.0
    %512 = vmatprep.subr.mxu0 0.0
    %513 = vmatpush2.msra.mxu0 0.0
    %514 = vmatprep.subr.mxu0 0.0
    %515 = vmatpush2.msra.mxu0 0.0
    %516 = vmatprep.subr.mxu0 0.0
    %517 = vmatpush2.msra.mxu0 0.0
    %518 = vmatprep.subr.mxu0 0.0
    %519 = vmatpush2.msra.mxu0 0.0
    %520 = vmatprep.mubr.f32.mxu0 0.0
    %521 = vmatmul.mubr.f32.gmra.mxu0 %v427
    %v522 = vpop.f32.mrf.mxu0
    %v523 = vadd.f32 0.0, %v522
    %v524 = vpop.f32.mrf.mxu0
    %525 = vmatprep.mubr.f32.mxu0 0.0
    %526 = vmatmul.mubr.f32.gmra.mxu0 %v430
    %v527 = vpop.f32.mrf.mxu0
    %v528 = vadd.f32 0.0, %v527
    %v529 = vpop.f32.mrf.mxu0
    %530 = vmatprep.mubr.f32.mxu0 0.0
    %531 = vmatmul.mubr.f32.gmra.mxu0 %v433
    %v532 = vpop.f32.mrf.mxu0
    %v533 = vadd.f32 0.0, %v532
    %v534 = vpop.f32.mrf.mxu0
    %535 = vmatprep.mubr.f32.mxu0 0.0
    %536 = vmatmul.mubr.f32.gmra.mxu0 %v436
    %v537 = vpop.f32.mrf.mxu0
    %v538 = vadd.f32 0.0, %v537
    %v539 = vpop.f32.mrf.mxu0
    %540 = vmatprep.mubr.f32.mxu0 0.0
    %541 = vmatmul.mubr.f32.gmra.mxu0 %v439
    %v542 = vpop.f32.mrf.mxu0
    %v543 = vadd.f32 0.0, %v542
    %v544 = vpop.f32.mrf.mxu0
    %545 = vmatprep.mubr.f32.mxu0 0.0
    %546 = vmatmul.mubr.f32.gmra.mxu0 %v442
    %v547 = vpop.f32.mrf.mxu0
    %v548 = vadd.f32 0.0, %v547
    %v549 = vpop.f32.mrf.mxu0
    %550 = vmatprep.mubr.f32.mxu0 0.0
    %551 = vmatmul.mubr.f32.gmra.mxu0 %v445
    %v552 = vpop.f32.mrf.mxu0
    %v553 = vadd.f32 0.0, %v552
    %v554 = vpop.f32.mrf.mxu0
    %555 = vmatprep.mubr.f32.mxu0 0.0
    %556 = vmatmul.mubr.f32.gmra.mxu0 %v448
    %v557 = vpop.f32.mrf.mxu0
    %v558 = vadd.f32 0.0, %v557
    %v559 = vpop.f32.mrf.mxu0
    %560 = vmatprep.mubr.f32.mxu0 0.0
    %561 = vmatmul.mubr.f32.gmra.mxu0 %v451
    %v562 = vpop.f32.mrf.mxu0
    %v563 = vadd.f32 0.0, %v562
    %v564 = vpop.f32.mrf.mxu0
    %565 = vmatprep.mubr.f32.mxu0 0.0
    %566 = vmatmul.mubr.f32.gmra.mxu0 %v454
    %v567 = vpop.f32.mrf.mxu0
    %v568 = vadd.f32 0.0, %v567
    %v569 = vpop.f32.mrf.mxu0
    %570 = vdwg.mxu0
    %571 = vmatprep.subr.mxu0 0.0
    %572 = vmatpush1.msra.mxu0 0.0
    %573 = vmatprep.subr.mxu0 0.0
    %574 = vmatpush1.msra.mxu0 0.0
    %575 = vmatprep.subr.mxu0 0.0
    %576 = vmatpush1.msra.mxu0 0.0
    %577 = vmatprep.subr.mxu0 0.0
    %578 = vmatpush1.msra.mxu0 0.0
    %579 = vmatprep.subr.mxu0 0.0
    %580 = vmatpush1.msra.mxu0 0.0
    %581 = vmatprep.subr.mxu0 0.0
    %582 = vmatpush1.msra.mxu0 0.0
    %583 = vmatprep.subr.mxu0 0.0
    %584 = vmatpush1.msra.mxu0 0.0
    %585 = vmatprep.subr.mxu0 0.0
    %586 = vmatpush1.msra.mxu0 0.0
    %587 = vmatprep.subr.mxu0 0.0
    %588 = vmatpush1.msra.mxu0 0.0
    %589 = vmatprep.subr.mxu0 0.0
    %590 = vmatpush1.msra.mxu0 0.0
    %591 = vmatprep.subr.mxu0 0.0
    %592 = vmatpush1.msra.mxu0 0.0
    %593 = vmatprep.subr.mxu0 0.0
    %594 = vmatpush1.msra.mxu0 0.0
    %595 = vmatprep.subr.mxu0 0.0
    %596 = vmatpush1.msra.mxu0 0.0
    %597 = vmatprep.subr.mxu0 0.0
    %598 = vmatpush1.msra.mxu0 0.0
    %599 = vmatprep.subr.mxu0 0.0
    %600 = vmatpush1.msra.mxu0 0.0
    %601 = vmatprep.subr.mxu0 0.0
    %602 = vmatpush1.msra.mxu0 %v289
    %603 = vmatprep.subr.mxu0 0.0
    %604 = vmatpush2.msra.mxu0 0.0
    %605 = vmatprep.subr.mxu0 0.0
    %606 = vmatpush2.msra.mxu0 0.0
    %607 = vmatprep.subr.mxu0 0.0
    %608 = vmatpush2.msra.mxu0 0.0
    %609 = vmatprep.subr.mxu0 0.0
    %610 = vmatpush2.msra.mxu0 0.0
    %611 = vmatprep.subr.mxu0 0.0
    %612 = vmatpush2.msra.mxu0 0.0
    %613 = vmatprep.subr.mxu0 0.0
    %614 = vmatpush2.msra.mxu0 0.0
    %615 = vmatprep.subr.mxu0 0.0
    %616 = vmatpush2.msra.mxu0 0.0
    %617 = vmatprep.subr.mxu0 0.0
    %618 = vmatpush2.msra.mxu0 0.0
    %619 = vmatprep.subr.mxu0 0.0
    %620 = vmatpush2.msra.mxu0 0.0
    %621 = vmatprep.subr.mxu0 0.0
    %622 = vmatpush2.msra.mxu0 0.0
    %623 = vmatprep.subr.mxu0 0.0
    %624 = vmatpush2.msra.mxu0 0.0
    %625 = vmatprep.subr.mxu0 0.0
    %626 = vmatpush2.msra.mxu0 0.0
    %627 = vmatprep.subr.mxu0 0.0
    %628 = vmatpush2.msra.mxu0 0.0
    %629 = vmatprep.subr.mxu0 0.0
    %630 = vmatpush2.msra.mxu0 0.0
    %631 = vmatprep.subr.mxu0 0.0
    %632 = vmatpush2.msra.mxu0 0.0
    %633 = vmatprep.subr.mxu0 0.0
    %634 = vmatpush2.msra.mxu0 0.0
    %635 = vmatprep.mubr.f32.mxu0 0.0
    %636 = vmatmul.mubr.f32.gmra.mxu0 %v110
    %v637 = vpop.f32.mrf.mxu0
    %v638 = vadd.f32 %v523, %v637
    %v639 = vpop.f32.mrf.mxu0
    %640 = vmatprep.mubr.f32.mxu0 0.0
    %641 = vmatmul.mubr.f32.gmra.mxu0 %v113
    %v642 = vpop.f32.mrf.mxu0
    %v643 = vadd.f32 %v528, %v642
    %v644 = vpop.f32.mrf.mxu0
    %645 = vmatprep.mubr.f32.mxu0 0.0
    %646 = vmatmul.mubr.f32.gmra.mxu0 %v116
    %v647 = vpop.f32.mrf.mxu0
    %v648 = vadd.f32 %v533, %v647
    %v649 = vpop.f32.mrf.mxu0
    %650 = vmatprep.mubr.f32.mxu0 0.0
    %651 = vmatmul.mubr.f32.gmra.mxu0 %v119
    %v652 = vpop.f32.mrf.mxu0
    %v653 = vadd.f32 %v538, %v652
    %v654 = vpop.f32.mrf.mxu0
    %655 = vmatprep.mubr.f32.mxu0 0.0
    %656 = vmatmul.mubr.f32.gmra.mxu0 %v122
    %v657 = vpop.f32.mrf.mxu0
    %v658 = vadd.f32 %v543, %v657
    %v659 = vpop.f32.mrf.mxu0
    %660 = vmatprep.mubr.f32.mxu0 0.0
    %661 = vmatmul.mubr.f32.gmra.mxu0 %v125
    %v662 = vpop.f32.mrf.mxu0
    %v663 = vadd.f32 %v548, %v662
    %v664 = vpop.f32.mrf.mxu0
    %665 = vmatprep.mubr.f32.mxu0 0.0
    %666 = vmatmul.mubr.f32.gmra.mxu0 %v128
    %v667 = vpop.f32.mrf.mxu0
    %v668 = vadd.f32 %v553, %v667
    %v669 = vpop.f32.mrf.mxu0
    %670 = vmatprep.mubr.f32.mxu0 0.0
    %671 = vmatmul.mubr.f32.gmra.mxu0 %v131
    %v672 = vpop.f32.mrf.mxu0
    %v673 = vadd.f32 %v558, %v672
    %v674 = vpop.f32.mrf.mxu0
    %675 = vmatprep.mubr.f32.mxu0 0.0
    %676 = vmatmul.mubr.f32.gmra.mxu0 %v134
    %v677 = vpop.f32.mrf.mxu0
    %v678 = vadd.f32 %v563, %v677
    %v679 = vpop.f32.mrf.mxu0
    %680 = vmatprep.mubr.f32.mxu0 0.0
    %681 = vmatmul.mubr.f32.gmra.mxu0 %v137
    %v682 = vpop.f32.mrf.mxu0
    %v683 = vadd.f32 %v568, %v682
    %v684 = vpop.f32.mrf.mxu0
    %685 = vdwg.mxu0
    %v687 = vsel %vm139, %v52, 0
    %689 = vmatprep.subr.mxu0 0.0
    %690 = vmatpush1.msra.mxu0 0.0
    %691 = vmatprep.subr.mxu0 0.0
    %692 = vmatpush1.msra.mxu0 0.0
    %693 = vmatprep.subr.mxu0 0.0
    %694 = vmatpush1.msra.mxu0 0.0
    %695 = vmatprep.subr.mxu0 0.0
    %696 = vmatpush1.msra.mxu0 0.0
    %697 = vmatprep.subr.mxu0 0.0
    %698 = vmatpush1.msra.mxu0 0.0
    %699 = vmatprep.subr.mxu0 0.0
    %700 = vmatpush1.msra.mxu0 0.0
    %701 = vmatprep.subr.mxu0 0.0
    %702 = vmatpush1.msra.mxu0 0.0
    %703 = vmatprep.subr.mxu0 0.0
    %704 = vmatpush1.msra.mxu0 0.0
    %705 = vmatprep.subr.mxu0 0.0
    %706 = vmatpush1.msra.mxu0 0.0
    %707 = vmatprep.subr.mxu0 0.0
    %708 = vmatpush1.msra.mxu0 0.0
    %709 = vmatprep.subr.mxu0 0.0
    %710 = vmatpush1.msra.mxu0 0.0
    %711 = vmatprep.subr.mxu0 0.0
    %712 = vmatpush1.msra.mxu0 0.0
    %713 = vmatprep.subr.mxu0 0.0
    %714 = vmatpush1.msra.mxu0 0.0
    %715 = vmatprep.subr.mxu0 0.0
    %716 = vmatpush1.msra.mxu0 0.0
    %717 = vmatprep.subr.mxu0 0.0
    %718 = vmatpush1.msra.mxu0 0.0
    %719 = vmatprep.subr.mxu0 0.0
    %720 = vmatpush1.msra.mxu0 %v687
    %721 = vmatprep.subr.mxu0 0.0
    %722 = vmatpush2.msra.mxu0 0.0
    %723 = vmatprep.subr.mxu0 0.0
    %724 = vmatpush2.msra.mxu0 0.0
    %725 = vmatprep.subr.mxu0 0.0
    %726 = vmatpush2.msra.mxu0 0.0
    %727 = vmatprep.subr.mxu0 0.0
    %728 = vmatpush2.msra.mxu0 0.0
    %729 = vmatprep.subr.mxu0 0.0
    %730 = vmatpush2.msra.mxu0 0.0
    %731 = vmatprep.subr.mxu0 0.0
    %732 = vmatpush2.msra.mxu0 0.0
    %733 = vmatprep.subr.mxu0 0.0
    %734 = vmatpush2.msra.mxu0 0.0
    %735 = vmatprep.subr.mxu0 0.0
    %736 = vmatpush2.msra.mxu0 0.0
    %737 = vmatprep.subr.mxu0 0.0
    %738 = vmatpush2.msra.mxu0 0.0
    %739 = vmatprep.subr.mxu0 0.0
    %740 = vmatpush2.msra.mxu0 0.0
    %741 = vmatprep.subr.mxu0 0.0
    %742 = vmatpush2.msra.mxu0 0.0
    %743 = vmatprep.subr.mxu0 0.0
    %744 = vmatpush2.msra.mxu0 0.0
    %745 = vmatprep.subr.mxu0 0.0
    %746 = vmatpush2.msra.mxu0 0.0
    %747 = vmatprep.subr.mxu0 0.0
    %748 = vmatpush2.msra.mxu0 0.0
    %749 = vmatprep.subr.mxu0 0.0
    %750 = vmatpush2.msra.mxu0 0.0
    %751 = vmatprep.subr.mxu0 0.0
    %752 = vmatpush2.msra.mxu0 0.0
    %753 = vmatprep.mubr.f32.mxu0 0.0
    %754 = vmatmul.mubr.f32.gmra.mxu0 %v427
    %v755 = vpop.f32.mrf.mxu0
    %v756 = vadd.f32 0.0, %v755
    %v757 = vpop.f32.mrf.mxu0
    %758 = vmatprep.mubr.f32.mxu0 0.0
    %759 = vmatmul.mubr.f32.gmra.mxu0 %v430
    %v760 = vpop.f32.mrf.mxu0
    %v761 = vadd.f32 0.0, %v760
    %v762 = vpop.f32.mrf.mxu0
    %763 = vmatprep.mubr.f32.mxu0 0.0
    %764 = vmatmul.mubr.f32.gmra.mxu0 %v433
    %v765 = vpop.f32.mrf.mxu0
    %v766 = vadd.f32 0.0, %v765
    %v767 = vpop.f32.mrf.mxu0
    %768 = vmatprep.mubr.f32.mxu0 0.0
    %769 = vmatmul.mubr.f32.gmra.mxu0 %v436
    %v770 = vpop.f32.mrf.mxu0
    %v771 = vadd.f32 0.0, %v770
    %v772 = vpop.f32.mrf.mxu0
    %773 = vmatprep.mubr.f32.mxu0 0.0
    %774 = vmatmul.mubr.f32.gmra.mxu0 %v439
    %v775 = vpop.f32.mrf.mxu0
    %v776 = vadd.f32 0.0, %v775
    %v777 = vpop.f32.mrf.mxu0
    %778 = vmatprep.mubr.f32.mxu0 0.0
    %779 = vmatmul.mubr.f32.gmra.mxu0 %v442
    %v780 = vpop.f32.mrf.mxu0
    %v781 = vadd.f32 0.0, %v780
    %v782 = vpop.f32.mrf.mxu0
    %783 = vmatprep.mubr.f32.mxu0 0.0
    %784 = vmatmul.mubr.f32.gmra.mxu0 %v445
    %v785 = vpop.f32.mrf.mxu0
    %v786 = vadd.f32 0.0, %v785
    %v787 = vpop.f32.mrf.mxu0
    %788 = vmatprep.mubr.f32.mxu0 0.0
    %789 = vmatmul.mubr.f32.gmra.mxu0 %v448
    %v790 = vpop.f32.mrf.mxu0
    %v791 = vadd.f32 0.0, %v790
    %v792 = vpop.f32.mrf.mxu0
    %793 = vmatprep.mubr.f32.mxu0 0.0
    %794 = vmatmul.mubr.f32.gmra.mxu0 %v451
    %v795 = vpop.f32.mrf.mxu0
    %v796 = vadd.f32 0.0, %v795
    %v797 = vpop.f32.mrf.mxu0
    %798 = vmatprep.mubr.f32.mxu0 0.0
    %799 = vmatmul.mubr.f32.gmra.mxu0 %v454
    %v800 = vpop.f32.mrf.mxu0
    %v801 = vadd.f32 0.0, %v800
    %v802 = vpop.f32.mrf.mxu0
    %803 = vdwg.mxu0
    %v804 = vadd.f32 %v358, %v756
    %v805 = vadd.f32 %v363, %v761
    %v806 = vadd.f32 %v368, %v766
    %v807 = vadd.f32 %v373, %v771
    %v808 = vadd.f32 %v378, %v776
    %v809 = vadd.f32 %v383, %v781
    %v810 = vadd.f32 %v388, %v786
    %v811 = vadd.f32 %v393, %v791
    %v812 = vadd.f32 %v398, %v796
    %v813 = vadd.f32 %v403, %v801
    %s814 = scalar_lea.vmem %s0, 3
    %v815 = vld [vmem:[%s814] ss:$2 sm:$0xff]
    %s816 = scalar_lea.vmem %s0, 19
    %v817 = vld [vmem:[%s816] ss:$2 sm:$0xff]
    %s818 = scalar_lea.vmem %s0, 35
    %v819 = vld [vmem:[%s818] ss:$2 sm:$0xff]
    %s820 = scalar_lea.vmem %s0, 51
    %v821 = vld [vmem:[%s820] ss:$2 sm:$0xff]
    %s822 = scalar_lea.vmem %s0, 67
    %v823 = vld [vmem:[%s822] ss:$2 sm:$0xff]
    %s824 = scalar_lea.vmem %s0, 83
    %v825 = vld [vmem:[%s824] ss:$2 sm:$0xff]
    %s826 = scalar_lea.vmem %s0, 99
    %v827 = vld [vmem:[%s826] ss:$2 sm:$0xff]
    %s828 = scalar_lea.vmem %s0, 115
    %v829 = vld [vmem:[%s828] ss:$2 sm:$0xff]
    %s830 = scalar_lea.vmem %s0, 131
    %v831 = vld [vmem:[%s830] ss:$2 sm:$0xff]
    %s832 = scalar_lea.vmem %s0, 147
    %v833 = vld [vmem:[%s832] ss:$2 sm:$0x3]
    %v835 = vsel %vm108, %v815, 0
    %v838 = vsel %vm108, %v817, 0
    %v841 = vsel %vm108, %v819, 0
    %v844 = vsel %vm108, %v821, 0
    %v847 = vsel %vm108, %v823, 0
    %v850 = vsel %vm108, %v825, 0
    %v853 = vsel %vm108, %v827, 0
    %v856 = vsel %vm108, %v829, 0
    %v859 = vsel %vm108, %v831, 0
    %v862 = vsel %vm108, %v833, 0
    %864 = vmatprep.subr.mxu0 0.0
    %865 = vmatpush1.msra.mxu0 0.0
    %866 = vmatprep.subr.mxu0 0.0
    %867 = vmatpush1.msra.mxu0 0.0
    %868 = vmatprep.subr.mxu0 0.0
    %869 = vmatpush1.msra.mxu0 0.0
    %870 = vmatprep.subr.mxu0 0.0
    %871 = vmatpush1.msra.mxu0 0.0
    %872 = vmatprep.subr.mxu0 0.0
    %873 = vmatpush1.msra.mxu0 0.0
    %874 = vmatprep.subr.mxu0 0.0
    %875 = vmatpush1.msra.mxu0 0.0
    %876 = vmatprep.subr.mxu0 0.0
    %877 = vmatpush1.msra.mxu0 0.0
    %878 = vmatprep.subr.mxu0 0.0
    %879 = vmatpush1.msra.mxu0 0.0
    %880 = vmatprep.subr.mxu0 0.0
    %881 = vmatpush1.msra.mxu0 0.0
    %882 = vmatprep.subr.mxu0 0.0
    %883 = vmatpush1.msra.mxu0 0.0
    %884 = vmatprep.subr.mxu0 0.0
    %885 = vmatpush1.msra.mxu0 0.0
    %886 = vmatprep.subr.mxu0 0.0
    %887 = vmatpush1.msra.mxu0 0.0
    %888 = vmatprep.subr.mxu0 0.0
    %889 = vmatpush1.msra.mxu0 0.0
    %890 = vmatprep.subr.mxu0 0.0
    %891 = vmatpush1.msra.mxu0 0.0
    %892 = vmatprep.subr.mxu0 0.0
    %893 = vmatpush1.msra.mxu0 0.0
    %894 = vmatprep.subr.mxu0 0.0
    %895 = vmatpush1.msra.mxu0 %v687
    %896 = vmatprep.subr.mxu0 0.0
    %897 = vmatpush2.msra.mxu0 0.0
    %898 = vmatprep.subr.mxu0 0.0
    %899 = vmatpush2.msra.mxu0 0.0
    %900 = vmatprep.subr.mxu0 0.0
    %901 = vmatpush2.msra.mxu0 0.0
    %902 = vmatprep.subr.mxu0 0.0
    %903 = vmatpush2.msra.mxu0 0.0
    %904 = vmatprep.subr.mxu0 0.0
    %905 = vmatpush2.msra.mxu0 0.0
    %906 = vmatprep.subr.mxu0 0.0
    %907 = vmatpush2.msra.mxu0 0.0
    %908 = vmatprep.subr.mxu0 0.0
    %909 = vmatpush2.msra.mxu0 0.0
    %910 = vmatprep.subr.mxu0 0.0
    %911 = vmatpush2.msra.mxu0 0.0
    %912 = vmatprep.subr.mxu0 0.0
    %913 = vmatpush2.msra.mxu0 0.0
    %914 = vmatprep.subr.mxu0 0.0
    %915 = vmatpush2.msra.mxu0 0.0
    %916 = vmatprep.subr.mxu0 0.0
    %917 = vmatpush2.msra.mxu0 0.0
    %918 = vmatprep.subr.mxu0 0.0
    %919 = vmatpush2.msra.mxu0 0.0
    %920 = vmatprep.subr.mxu0 0.0
    %921 = vmatpush2.msra.mxu0 0.0
    %922 = vmatprep.subr.mxu0 0.0
    %923 = vmatpush2.msra.mxu0 0.0
    %924 = vmatprep.subr.mxu0 0.0
    %925 = vmatpush2.msra.mxu0 0.0
    %926 = vmatprep.subr.mxu0 0.0
    %927 = vmatpush2.msra.mxu0 0.0
    %928 = vmatprep.mubr.f32.mxu0 0.0
    %929 = vmatmul.mubr.f32.gmra.mxu0 %v835
    %v930 = vpop.f32.mrf.mxu0
    %v931 = vadd.f32 0.0, %v930
    %v932 = vpop.f32.mrf.mxu0
    %933 = vmatprep.mubr.f32.mxu0 0.0
    %934 = vmatmul.mubr.f32.gmra.mxu0 %v838
    %v935 = vpop.f32.mrf.mxu0
    %v936 = vadd.f32 0.0, %v935
    %v937 = vpop.f32.mrf.mxu0
    %938 = vmatprep.mubr.f32.mxu0 0.0
    %939 = vmatmul.mubr.f32.gmra.mxu0 %v841
    %v940 = vpop.f32.mrf.mxu0
    %v941 = vadd.f32 0.0, %v940
    %v942 = vpop.f32.mrf.mxu0
    %943 = vmatprep.mubr.f32.mxu0 0.0
    %944 = vmatmul.mubr.f32.gmra.mxu0 %v844
    %v945 = vpop.f32.mrf.mxu0
    %v946 = vadd.f32 0.0, %v945
    %v947 = vpop.f32.mrf.mxu0
    %948 = vmatprep.mubr.f32.mxu0 0.0
    %949 = vmatmul.mubr.f32.gmra.mxu0 %v847
    %v950 = vpop.f32.mrf.mxu0
    %v951 = vadd.f32 0.0, %v950
    %v952 = vpop.f32.mrf.mxu0
    %953 = vmatprep.mubr.f32.mxu0 0.0
    %954 = vmatmul.mubr.f32.gmra.mxu0 %v850
    %v955 = vpop.f32.mrf.mxu0
    %v956 = vadd.f32 0.0, %v955
    %v957 = vpop.f32.mrf.mxu0
    %958 = vmatprep.mubr.f32.mxu0 0.0
    %959 = vmatmul.mubr.f32.gmra.mxu0 %v853
    %v960 = vpop.f32.mrf.mxu0
    %v961 = vadd.f32 0.0, %v960
    %v962 = vpop.f32.mrf.mxu0
    %963 = vmatprep.mubr.f32.mxu0 0.0
    %964 = vmatmul.mubr.f32.gmra.mxu0 %v856
    %v965 = vpop.f32.mrf.mxu0
    %v966 = vadd.f32 0.0, %v965
    %v967 = vpop.f32.mrf.mxu0
    %968 = vmatprep.mubr.f32.mxu0 0.0
    %969 = vmatmul.mubr.f32.gmra.mxu0 %v859
    %v970 = vpop.f32.mrf.mxu0
    %v971 = vadd.f32 0.0, %v970
    %v972 = vpop.f32.mrf.mxu0
    %973 = vmatprep.mubr.f32.mxu0 0.0
    %974 = vmatmul.mubr.f32.gmra.mxu0 %v862
    %v975 = vpop.f32.mrf.mxu0
    %v976 = vadd.f32 0.0, %v975
    %v977 = vpop.f32.mrf.mxu0
    %978 = vdwg.mxu0
    %v979 = vadd.f32 %v638, %v931
    %v980 = vadd.f32 %v643, %v936
    %v981 = vadd.f32 %v648, %v941
    %v982 = vadd.f32 %v653, %v946
    %v983 = vadd.f32 %v658, %v951
    %v984 = vadd.f32 %v663, %v956
    %v985 = vadd.f32 %v668, %v961
    %v986 = vadd.f32 %v673, %v966
    %v987 = vadd.f32 %v678, %v971
    %v988 = vadd.f32 %v683, %v976
    %v989 = vmax.f32 %v804, %v979
    %v990 = vmax.f32 %v805, %v980
    %v991 = vmax.f32 %v806, %v981
    %v992 = vmax.f32 %v807, %v982
    %v993 = vmax.f32 %v808, %v983
    %v994 = vmax.f32 %v809, %v984
    %v995 = vmax.f32 %v810, %v985
    %v996 = vmax.f32 %v811, %v986
    %v997 = vmax.f32 %v812, %v987
    %v998 = vmax.f32 %v813, %v988
    %v1000 = vlaneseq
    %v1001 = vshrl.u32 %v1000, 7
    %v1002 = vsub.s32 0, %v1001
    %v1003 = vrot.slane %v67, %v1002
    %v1005 = vadd.f32 %v989, %v1003
    %v1006 = vadd.f32 %v990, %v1003
    %v1007 = vadd.f32 %v991, %v1003
    %v1008 = vadd.f32 %v992, %v1003
    %v1009 = vadd.f32 %v993, %v1003
    %v1010 = vadd.f32 %v994, %v1003
    %v1011 = vadd.f32 %v995, %v1003
    %v1012 = vadd.f32 %v996, %v1003
    %v1013 = vadd.f32 %v997, %v1003
    %v1014 = vadd.f32 %v998, %v1003
    %v1015 = vmax.f32 %v1005, 0.0
    %v1016 = vmax.f32 %v1006, 0.0
    %v1017 = vmax.f32 %v1007, 0.0
    %v1018 = vmax.f32 %v1008, 0.0
    %v1019 = vmax.f32 %v1009, 0.0
    %v1020 = vmax.f32 %v1010, 0.0
    %v1021 = vmax.f32 %v1011, 0.0
    %v1022 = vmax.f32 %v1012, 0.0
    %v1023 = vmax.f32 %v1013, 0.0
    %v1024 = vmax.f32 %v1014, 0.0
    %vm1025 = vcmask 261120
    %1026 = vst.msk [vmem:[#allocation2] sm:$0xff] %vm1025, %v1015
    %1027 = vst.msk [vmem:[#allocation2 + $0x8] sm:$0xff] %vm1025, %v1016
    %1028 = vst.msk [vmem:[#allocation2 + $0x10] sm:$0xff] %vm1025, %v1017
    %1029 = vst.msk [vmem:[#allocation2 + $0x18] sm:$0xff] %vm1025, %v1018
    %1030 = vst.msk [vmem:[#allocation2 + $0x20] sm:$0xff] %vm1025, %v1019
    %1031 = vst.msk [vmem:[#allocation2 + $0x28] sm:$0xff] %vm1025, %v1020
    %1032 = vst.msk [vmem:[#allocation2 + $0x30] sm:$0xff] %vm1025, %v1021
    %1033 = vst.msk [vmem:[#allocation2 + $0x38] sm:$0xff] %vm1025, %v1022
    %1034 = vst.msk [vmem:[#allocation2 + $0x40] sm:$0xff] %vm1025, %v1023
    %vm1035 = vcmask 254976
    %1036 = vst.msk [vmem:[#allocation2 + $0x48] sm:$0x3] %vm1035, %v1024
    %v1037 = vld [vmem:[#allocation2] ss:$2 sm:$0xff]
    %s1038 = scalar_lea.vmem [#allocation2], 16
    %v1039 = vld [vmem:[%s1038] ss:$2 sm:$0xff]
    %s1040 = scalar_lea.vmem [#allocation2], 32
    %v1041 = vld [vmem:[%s1040] ss:$2 sm:$0xff]
    %s1042 = scalar_lea.vmem [#allocation2], 48
    %v1043 = vld [vmem:[%s1042] ss:$2 sm:$0xff]
    %s1044 = scalar_lea.vmem [#allocation2], 64
    %v1045 = vld [vmem:[%s1044] ss:$2 sm:$0xf]
    %s1046 = scalar_lea.vmem [#allocation2], 1
    %v1047 = vld [vmem:[%s1046] ss:$2 sm:$0xff]
    %s1048 = scalar_lea.vmem [#allocation2], 17
    %v1049 = vld [vmem:[%s1048] ss:$2 sm:$0xff]
    %s1050 = scalar_lea.vmem [#allocation2], 33
    %v1051 = vld [vmem:[%s1050] ss:$2 sm:$0xff]
    %s1052 = scalar_lea.vmem [#allocation2], 49
    %v1053 = vld [vmem:[%s1052] ss:$2 sm:$0xff]
    %s1054 = scalar_lea.vmem [#allocation2], 65
    %v1055 = vld [vmem:[%s1054] ss:$2 sm:$0xf]
    %v1057 = vsel %vm1025, %v1047, 0
    %v1060 = vsel %vm1025, %v1049, 0
    %v1063 = vsel %vm1025, %v1051, 0
    %v1066 = vsel %vm1025, %v1053, 0
    %v1069 = vsel %vm1025, %v1055, 0
    %1071 = vmatprep.subr.mxu0 0.0
    %1072 = vmatpush1.msra.mxu0 0.0
    %1073 = vmatprep.subr.mxu0 0.0
    %1074 = vmatpush1.msra.mxu0 0.0
    %1075 = vmatprep.subr.mxu0 0.0
    %1076 = vmatpush1.msra.mxu0 0.0
    %1077 = vmatprep.subr.mxu0 0.0
    %1078 = vmatpush1.msra.mxu0 0.0
    %1079 = vmatprep.subr.mxu0 0.0
    %1080 = vmatpush1.msra.mxu0 0.0
    %1081 = vmatprep.subr.mxu0 0.0
    %1082 = vmatpush1.msra.mxu0 0.0
    %1083 = vmatprep.subr.mxu0 0.0
    %1084 = vmatpush1.msra.mxu0 0.0
    %1085 = vmatprep.subr.mxu0 0.0
    %1086 = vmatpush1.msra.mxu0 0.0
    %1087 = vmatprep.subr.mxu0 0.0
    %1088 = vmatpush1.msra.mxu0 0.0
    %1089 = vmatprep.subr.mxu0 0.0
    %1090 = vmatpush1.msra.mxu0 0.0
    %1091 = vmatprep.subr.mxu0 0.0
    %1092 = vmatpush1.msra.mxu0 0.0
    %1093 = vmatprep.subr.mxu0 0.0
    %1094 = vmatpush1.msra.mxu0 0.0
    %1095 = vmatprep.subr.mxu0 0.0
    %1096 = vmatpush1.msra.mxu0 %v61
    %1097 = vmatprep.subr.mxu0 0.0
    %1098 = vmatpush1.msra.mxu0 %v60
    %1099 = vmatprep.subr.mxu0 0.0
    %1100 = vmatpush1.msra.mxu0 %v59
    %1101 = vmatprep.subr.mxu0 0.0
    %1102 = vmatpush1.msra.mxu0 %v58
    %1103 = vmatprep.subr.mxu0 0.0
    %1104 = vmatpush2.msra.mxu0 0.0
    %1105 = vmatprep.subr.mxu0 0.0
    %1106 = vmatpush2.msra.mxu0 0.0
    %1107 = vmatprep.subr.mxu0 0.0
    %1108 = vmatpush2.msra.mxu0 0.0
    %1109 = vmatprep.subr.mxu0 0.0
    %1110 = vmatpush2.msra.mxu0 0.0
    %1111 = vmatprep.subr.mxu0 0.0
    %1112 = vmatpush2.msra.mxu0 0.0
    %1113 = vmatprep.subr.mxu0 0.0
    %1114 = vmatpush2.msra.mxu0 0.0
    %1115 = vmatprep.subr.mxu0 0.0
    %1116 = vmatpush2.msra.mxu0 0.0
    %1117 = vmatprep.subr.mxu0 0.0
    %1118 = vmatpush2.msra.mxu0 0.0
    %1119 = vmatprep.subr.mxu0 0.0
    %1120 = vmatpush2.msra.mxu0 0.0
    %1121 = vmatprep.subr.mxu0 0.0
    %1122 = vmatpush2.msra.mxu0 0.0
    %1123 = vmatprep.subr.mxu0 0.0
    %1124 = vmatpush2.msra.mxu0 0.0
    %1125 = vmatprep.subr.mxu0 0.0
    %1126 = vmatpush2.msra.mxu0 0.0
    %1127 = vmatprep.subr.mxu0 0.0
    %1128 = vmatpush2.msra.mxu0 0.0
    %1129 = vmatprep.subr.mxu0 0.0
    %1130 = vmatpush2.msra.mxu0 0.0
    %1131 = vmatprep.subr.mxu0 0.0
    %1132 = vmatpush2.msra.mxu0 0.0
    %1133 = vmatprep.subr.mxu0 0.0
    %1134 = vmatpush2.msra.mxu0 0.0
    %1135 = vmatprep.mubr.f32.mxu0 0.0
    %1136 = vmatmul.mubr.f32.gmra.mxu0 %v1057
    %v1137 = vpop.f32.mrf.mxu0
    %v1138 = vadd.f32 0.0, %v1137
    %v1139 = vpop.f32.mrf.mxu0
    %1140 = vmatprep.mubr.f32.mxu0 0.0
    %1141 = vmatmul.mubr.f32.gmra.mxu0 %v1060
    %v1142 = vpop.f32.mrf.mxu0
    %v1143 = vadd.f32 0.0, %v1142
    %v1144 = vpop.f32.mrf.mxu0
    %1145 = vmatprep.mubr.f32.mxu0 0.0
    %1146 = vmatmul.mubr.f32.gmra.mxu0 %v1063
    %v1147 = vpop.f32.mrf.mxu0
    %v1148 = vadd.f32 0.0, %v1147
    %v1149 = vpop.f32.mrf.mxu0
    %1150 = vmatprep.mubr.f32.mxu0 0.0
    %1151 = vmatmul.mubr.f32.gmra.mxu0 %v1066
    %v1152 = vpop.f32.mrf.mxu0
    %v1153 = vadd.f32 0.0, %v1152
    %v1154 = vpop.f32.mrf.mxu0
    %1155 = vmatprep.mubr.f32.mxu0 0.0
    %1156 = vmatmul.mubr.f32.gmra.mxu0 %v1069
    %v1157 = vpop.f32.mrf.mxu0
    %v1158 = vadd.f32 0.0, %v1157
    %v1159 = vpop.f32.mrf.mxu0
    %1160 = vdwg.mxu0
    %v1162 = vsel %vm1025, %v1037, 0
    %v1165 = vsel %vm1025, %v1039, 0
    %v1168 = vsel %vm1025, %v1041, 0
    %v1171 = vsel %vm1025, %v1043, 0
    %v1174 = vsel %vm1025, %v1045, 0
    %1176 = vmatprep.subr.mxu0 0.0
    %1177 = vmatpush1.msra.mxu0 0.0
    %1178 = vmatprep.subr.mxu0 0.0
    %1179 = vmatpush1.msra.mxu0 0.0
    %1180 = vmatprep.subr.mxu0 0.0
    %1181 = vmatpush1.msra.mxu0 0.0
    %1182 = vmatprep.subr.mxu0 0.0
    %1183 = vmatpush1.msra.mxu0 0.0
    %1184 = vmatprep.subr.mxu0 0.0
    %1185 = vmatpush1.msra.mxu0 0.0
    %1186 = vmatprep.subr.mxu0 0.0
    %1187 = vmatpush1.msra.mxu0 0.0
    %1188 = vmatprep.subr.mxu0 0.0
    %1189 = vmatpush1.msra.mxu0 0.0
    %1190 = vmatprep.subr.mxu0 0.0
    %1191 = vmatpush1.msra.mxu0 0.0
    %1192 = vmatprep.subr.mxu0 0.0
    %1193 = vmatpush1.msra.mxu0 0.0
    %1194 = vmatprep.subr.mxu0 0.0
    %1195 = vmatpush1.msra.mxu0 0.0
    %1196 = vmatprep.subr.mxu0 0.0
    %1197 = vmatpush1.msra.mxu0 0.0
    %1198 = vmatprep.subr.mxu0 0.0
    %1199 = vmatpush1.msra.mxu0 0.0
    %1200 = vmatprep.subr.mxu0 0.0
    %1201 = vmatpush1.msra.mxu0 %v56
    %1202 = vmatprep.subr.mxu0 0.0
    %1203 = vmatpush1.msra.mxu0 %v55
    %1204 = vmatprep.subr.mxu0 0.0
    %1205 = vmatpush1.msra.mxu0 %v54
    %1206 = vmatprep.subr.mxu0 0.0
    %1207 = vmatpush1.msra.mxu0 %v53
    %1208 = vmatprep.subr.mxu0 0.0
    %1209 = vmatpush2.msra.mxu0 0.0
    %1210 = vmatprep.subr.mxu0 0.0
    %1211 = vmatpush2.msra.mxu0 0.0
    %1212 = vmatprep.subr.mxu0 0.0
    %1213 = vmatpush2.msra.mxu0 0.0
    %1214 = vmatprep.subr.mxu0 0.0
    %1215 = vmatpush2.msra.mxu0 0.0
    %1216 = vmatprep.subr.mxu0 0.0
    %1217 = vmatpush2.msra.mxu0 0.0
    %1218 = vmatprep.subr.mxu0 0.0
    %1219 = vmatpush2.msra.mxu0 0.0
    %1220 = vmatprep.subr.mxu0 0.0
    %1221 = vmatpush2.msra.mxu0 0.0
    %1222 = vmatprep.subr.mxu0 0.0
    %1223 = vmatpush2.msra.mxu0 0.0
    %1224 = vmatprep.subr.mxu0 0.0
    %1225 = vmatpush2.msra.mxu0 0.0
    %1226 = vmatprep.subr.mxu0 0.0
    %1227 = vmatpush2.msra.mxu0 0.0
    %1228 = vmatprep.subr.mxu0 0.0
    %1229 = vmatpush2.msra.mxu0 0.0
    %1230 = vmatprep.subr.mxu0 0.0
    %1231 = vmatpush2.msra.mxu0 0.0
    %1232 = vmatprep.subr.mxu0 0.0
    %1233 = vmatpush2.msra.mxu0 0.0
    %1234 = vmatprep.subr.mxu0 0.0
    %1235 = vmatpush2.msra.mxu0 0.0
    %1236 = vmatprep.subr.mxu0 0.0
    %1237 = vmatpush2.msra.mxu0 0.0
    %1238 = vmatprep.subr.mxu0 0.0
    %1239 = vmatpush2.msra.mxu0 0.0
    %1240 = vmatprep.mubr.f32.mxu0 0.0
    %1241 = vmatmul.mubr.f32.gmra.mxu0 %v1162
    %v1242 = vpop.f32.mrf.mxu0
    %v1243 = vadd.f32 %v1138, %v1242
    %v1244 = vpop.f32.mrf.mxu0
    %1245 = vmatprep.mubr.f32.mxu0 0.0
    %1246 = vmatmul.mubr.f32.gmra.mxu0 %v1165
    %v1247 = vpop.f32.mrf.mxu0
    %v1248 = vadd.f32 %v1143, %v1247
    %v1249 = vpop.f32.mrf.mxu0
    %1250 = vmatprep.mubr.f32.mxu0 0.0
    %1251 = vmatmul.mubr.f32.gmra.mxu0 %v1168
    %v1252 = vpop.f32.mrf.mxu0
    %v1253 = vadd.f32 %v1148, %v1252
    %v1254 = vpop.f32.mrf.mxu0
    %1255 = vmatprep.mubr.f32.mxu0 0.0
    %1256 = vmatmul.mubr.f32.gmra.mxu0 %v1171
    %v1257 = vpop.f32.mrf.mxu0
    %v1258 = vadd.f32 %v1153, %v1257
    %v1259 = vpop.f32.mrf.mxu0
    %1260 = vmatprep.mubr.f32.mxu0 0.0
    %1261 = vmatmul.mubr.f32.gmra.mxu0 %v1174
    %v1262 = vpop.f32.mrf.mxu0
    %v1263 = vadd.f32 %v1158, %v1262
    %v1264 = vpop.f32.mrf.mxu0
    %1265 = vdwg.mxu0
    %s1266 = scalar_lea.vmem [#allocation2], 2
    %v1267 = vld [vmem:[%s1266] ss:$2 sm:$0xff]
    %s1268 = scalar_lea.vmem [#allocation2], 18
    %v1269 = vld [vmem:[%s1268] ss:$2 sm:$0xff]
    %s1270 = scalar_lea.vmem [#allocation2], 34
    %v1271 = vld [vmem:[%s1270] ss:$2 sm:$0xff]
    %s1272 = scalar_lea.vmem [#allocation2], 50
    %v1273 = vld [vmem:[%s1272] ss:$2 sm:$0xff]
    %s1274 = scalar_lea.vmem [#allocation2], 66
    %v1275 = vld [vmem:[%s1274] ss:$2 sm:$0xf]
    %v1277 = vsel %vm1025, %v1267, 0
    %v1280 = vsel %vm1025, %v1269, 0
    %v1283 = vsel %vm1025, %v1271, 0
    %v1286 = vsel %vm1025, %v1273, 0
    %v1289 = vsel %vm1025, %v1275, 0
    %1291 = vmatprep.subr.mxu0 0.0
    %1292 = vmatpush1.msra.mxu0 0.0
    %1293 = vmatprep.subr.mxu0 0.0
    %1294 = vmatpush1.msra.mxu0 0.0
    %1295 = vmatprep.subr.mxu0 0.0
    %1296 = vmatpush1.msra.mxu0 0.0
    %1297 = vmatprep.subr.mxu0 0.0
    %1298 = vmatpush1.msra.mxu0 0.0
    %1299 = vmatprep.subr.mxu0 0.0
    %1300 = vmatpush1.msra.mxu0 0.0
    %1301 = vmatprep.subr.mxu0 0.0
    %1302 = vmatpush1.msra.mxu0 0.0
    %1303 = vmatprep.subr.mxu0 0.0
    %1304 = vmatpush1.msra.mxu0 0.0
    %1305 = vmatprep.subr.mxu0 0.0
    %1306 = vmatpush1.msra.mxu0 0.0
    %1307 = vmatprep.subr.mxu0 0.0
    %1308 = vmatpush1.msra.mxu0 0.0
    %1309 = vmatprep.subr.mxu0 0.0
    %1310 = vmatpush1.msra.mxu0 0.0
    %1311 = vmatprep.subr.mxu0 0.0
    %1312 = vmatpush1.msra.mxu0 0.0
    %1313 = vmatprep.subr.mxu0 0.0
    %1314 = vmatpush1.msra.mxu0 0.0
    %1315 = vmatprep.subr.mxu0 0.0
    %1316 = vmatpush1.msra.mxu0 %v61
    %1317 = vmatprep.subr.mxu0 0.0
    %1318 = vmatpush1.msra.mxu0 %v60
    %1319 = vmatprep.subr.mxu0 0.0
    %1320 = vmatpush1.msra.mxu0 %v59
    %1321 = vmatprep.subr.mxu0 0.0
    %1322 = vmatpush1.msra.mxu0 %v58
    %1323 = vmatprep.subr.mxu0 0.0
    %1324 = vmatpush2.msra.mxu0 0.0
    %1325 = vmatprep.subr.mxu0 0.0
    %1326 = vmatpush2.msra.mxu0 0.0
    %1327 = vmatprep.subr.mxu0 0.0
    %1328 = vmatpush2.msra.mxu0 0.0
    %1329 = vmatprep.subr.mxu0 0.0
    %1330 = vmatpush2.msra.mxu0 0.0
    %1331 = vmatprep.subr.mxu0 0.0
    %1332 = vmatpush2.msra.mxu0 0.0
    %1333 = vmatprep.subr.mxu0 0.0
    %1334 = vmatpush2.msra.mxu0 0.0
    %1335 = vmatprep.subr.mxu0 0.0
    %1336 = vmatpush2.msra.mxu0 0.0
    %1337 = vmatprep.subr.mxu0 0.0
    %1338 = vmatpush2.msra.mxu0 0.0
    %1339 = vmatprep.subr.mxu0 0.0
    %1340 = vmatpush2.msra.mxu0 0.0
    %1341 = vmatprep.subr.mxu0 0.0
    %1342 = vmatpush2.msra.mxu0 0.0
    %1343 = vmatprep.subr.mxu0 0.0
    %1344 = vmatpush2.msra.mxu0 0.0
    %1345 = vmatprep.subr.mxu0 0.0
    %1346 = vmatpush2.msra.mxu0 0.0
    %1347 = vmatprep.subr.mxu0 0.0
    %1348 = vmatpush2.msra.mxu0 0.0
    %1349 = vmatprep.subr.mxu0 0.0
    %1350 = vmatpush2.msra.mxu0 0.0
    %1351 = vmatprep.subr.mxu0 0.0
    %1352 = vmatpush2.msra.mxu0 0.0
    %1353 = vmatprep.subr.mxu0 0.0
    %1354 = vmatpush2.msra.mxu0 0.0
    %1355 = vmatprep.mubr.f32.mxu0 0.0
    %1356 = vmatmul.mubr.f32.gmra.mxu0 %v1277
    %v1357 = vpop.f32.mrf.mxu0
    %v1358 = vadd.f32 0.0, %v1357
    %v1359 = vpop.f32.mrf.mxu0
    %1360 = vmatprep.mubr.f32.mxu0 0.0
    %1361 = vmatmul.mubr.f32.gmra.mxu0 %v1280
    %v1362 = vpop.f32.mrf.mxu0
    %v1363 = vadd.f32 0.0, %v1362
    %v1364 = vpop.f32.mrf.mxu0
    %1365 = vmatprep.mubr.f32.mxu0 0.0
    %1366 = vmatmul.mubr.f32.gmra.mxu0 %v1283
    %v1367 = vpop.f32.mrf.mxu0
    %v1368 = vadd.f32 0.0, %v1367
    %v1369 = vpop.f32.mrf.mxu0
    %1370 = vmatprep.mubr.f32.mxu0 0.0
    %1371 = vmatmul.mubr.f32.gmra.mxu0 %v1286
    %v1372 = vpop.f32.mrf.mxu0
    %v1373 = vadd.f32 0.0, %v1372
    %v1374 = vpop.f32.mrf.mxu0
    %1375 = vmatprep.mubr.f32.mxu0 0.0
    %1376 = vmatmul.mubr.f32.gmra.mxu0 %v1289
    %v1377 = vpop.f32.mrf.mxu0
    %v1378 = vadd.f32 0.0, %v1377
    %v1379 = vpop.f32.mrf.mxu0
    %1380 = vdwg.mxu0
    %1381 = vmatprep.subr.mxu0 0.0
    %1382 = vmatpush1.msra.mxu0 0.0
    %1383 = vmatprep.subr.mxu0 0.0
    %1384 = vmatpush1.msra.mxu0 0.0
    %1385 = vmatprep.subr.mxu0 0.0
    %1386 = vmatpush1.msra.mxu0 0.0
    %1387 = vmatprep.subr.mxu0 0.0
    %1388 = vmatpush1.msra.mxu0 0.0
    %1389 = vmatprep.subr.mxu0 0.0
    %1390 = vmatpush1.msra.mxu0 0.0
    %1391 = vmatprep.subr.mxu0 0.0
    %1392 = vmatpush1.msra.mxu0 0.0
    %1393 = vmatprep.subr.mxu0 0.0
    %1394 = vmatpush1.msra.mxu0 0.0
    %1395 = vmatprep.subr.mxu0 0.0
    %1396 = vmatpush1.msra.mxu0 0.0
    %1397 = vmatprep.subr.mxu0 0.0
    %1398 = vmatpush1.msra.mxu0 0.0
    %1399 = vmatprep.subr.mxu0 0.0
    %1400 = vmatpush1.msra.mxu0 0.0
    %1401 = vmatprep.subr.mxu0 0.0
    %1402 = vmatpush1.msra.mxu0 0.0
    %1403 = vmatprep.subr.mxu0 0.0
    %1404 = vmatpush1.msra.mxu0 0.0
    %1405 = vmatprep.subr.mxu0 0.0
    %1406 = vmatpush1.msra.mxu0 %v56
    %1407 = vmatprep.subr.mxu0 0.0
    %1408 = vmatpush1.msra.mxu0 %v55
    %1409 = vmatprep.subr.mxu0 0.0
    %1410 = vmatpush1.msra.mxu0 %v54
    %1411 = vmatprep.subr.mxu0 0.0
    %1412 = vmatpush1.msra.mxu0 %v53
    %1413 = vmatprep.subr.mxu0 0.0
    %1414 = vmatpush2.msra.mxu0 0.0
    %1415 = vmatprep.subr.mxu0 0.0
    %1416 = vmatpush2.msra.mxu0 0.0
    %1417 = vmatprep.subr.mxu0 0.0
    %1418 = vmatpush2.msra.mxu0 0.0
    %1419 = vmatprep.subr.mxu0 0.0
    %1420 = vmatpush2.msra.mxu0 0.0
    %1421 = vmatprep.subr.mxu0 0.0
    %1422 = vmatpush2.msra.mxu0 0.0
    %1423 = vmatprep.subr.mxu0 0.0
    %1424 = vmatpush2.msra.mxu0 0.0
    %1425 = vmatprep.subr.mxu0 0.0
    %1426 = vmatpush2.msra.mxu0 0.0
    %1427 = vmatprep.subr.mxu0 0.0
    %1428 = vmatpush2.msra.mxu0 0.0
    %1429 = vmatprep.subr.mxu0 0.0
    %1430 = vmatpush2.msra.mxu0 0.0
    %1431 = vmatprep.subr.mxu0 0.0
    %1432 = vmatpush2.msra.mxu0 0.0
    %1433 = vmatprep.subr.mxu0 0.0
    %1434 = vmatpush2.msra.mxu0 0.0
    %1435 = vmatprep.subr.mxu0 0.0
    %1436 = vmatpush2.msra.mxu0 0.0
    %1437 = vmatprep.subr.mxu0 0.0
    %1438 = vmatpush2.msra.mxu0 0.0
    %1439 = vmatprep.subr.mxu0 0.0
    %1440 = vmatpush2.msra.mxu0 0.0
    %1441 = vmatprep.subr.mxu0 0.0
    %1442 = vmatpush2.msra.mxu0 0.0
    %1443 = vmatprep.subr.mxu0 0.0
    %1444 = vmatpush2.msra.mxu0 0.0
    %1445 = vmatprep.mubr.f32.mxu0 0.0
    %1446 = vmatmul.mubr.f32.gmra.mxu0 %v1057
    %v1447 = vpop.f32.mrf.mxu0
    %v1448 = vadd.f32 %v1358, %v1447
    %v1449 = vpop.f32.mrf.mxu0
    %1450 = vmatprep.mubr.f32.mxu0 0.0
    %1451 = vmatmul.mubr.f32.gmra.mxu0 %v1060
    %v1452 = vpop.f32.mrf.mxu0
    %v1453 = vadd.f32 %v1363, %v1452
    %v1454 = vpop.f32.mrf.mxu0
    %1455 = vmatprep.mubr.f32.mxu0 0.0
    %1456 = vmatmul.mubr.f32.gmra.mxu0 %v1063
    %v1457 = vpop.f32.mrf.mxu0
    %v1458 = vadd.f32 %v1368, %v1457
    %v1459 = vpop.f32.mrf.mxu0
    %1460 = vmatprep.mubr.f32.mxu0 0.0
    %1461 = vmatmul.mubr.f32.gmra.mxu0 %v1066
    %v1462 = vpop.f32.mrf.mxu0
    %v1463 = vadd.f32 %v1373, %v1462
    %v1464 = vpop.f32.mrf.mxu0
    %1465 = vmatprep.mubr.f32.mxu0 0.0
    %1466 = vmatmul.mubr.f32.gmra.mxu0 %v1069
    %v1467 = vpop.f32.mrf.mxu0
    %v1468 = vadd.f32 %v1378, %v1467
    %v1469 = vpop.f32.mrf.mxu0
    %1470 = vdwg.mxu0
    %1471 = vmatprep.subr.mxu0 0.0
    %1472 = vmatpush1.msra.mxu0 0.0
    %1473 = vmatprep.subr.mxu0 0.0
    %1474 = vmatpush1.msra.mxu0 0.0
    %1475 = vmatprep.subr.mxu0 0.0
    %1476 = vmatpush1.msra.mxu0 0.0
    %1477 = vmatprep.subr.mxu0 0.0
    %1478 = vmatpush1.msra.mxu0 0.0
    %1479 = vmatprep.subr.mxu0 0.0
    %1480 = vmatpush1.msra.mxu0 0.0
    %1481 = vmatprep.subr.mxu0 0.0
    %1482 = vmatpush1.msra.mxu0 0.0
    %1483 = vmatprep.subr.mxu0 0.0
    %1484 = vmatpush1.msra.mxu0 0.0
    %1485 = vmatprep.subr.mxu0 0.0
    %1486 = vmatpush1.msra.mxu0 0.0
    %1487 = vmatprep.subr.mxu0 0.0
    %1488 = vmatpush1.msra.mxu0 0.0
    %1489 = vmatprep.subr.mxu0 0.0
    %1490 = vmatpush1.msra.mxu0 0.0
    %1491 = vmatprep.subr.mxu0 0.0
    %1492 = vmatpush1.msra.mxu0 0.0
    %1493 = vmatprep.subr.mxu0 0.0
    %1494 = vmatpush1.msra.mxu0 0.0
    %1495 = vmatprep.subr.mxu0 0.0
    %1496 = vmatpush1.msra.mxu0 %v66
    %1497 = vmatprep.subr.mxu0 0.0
    %1498 = vmatpush1.msra.mxu0 %v65
    %1499 = vmatprep.subr.mxu0 0.0
    %1500 = vmatpush1.msra.mxu0 %v64
    %1501 = vmatprep.subr.mxu0 0.0
    %1502 = vmatpush1.msra.mxu0 %v63
    %1503 = vmatprep.subr.mxu0 0.0
    %1504 = vmatpush2.msra.mxu0 0.0
    %1505 = vmatprep.subr.mxu0 0.0
    %1506 = vmatpush2.msra.mxu0 0.0
    %1507 = vmatprep.subr.mxu0 0.0
    %1508 = vmatpush2.msra.mxu0 0.0
    %1509 = vmatprep.subr.mxu0 0.0
    %1510 = vmatpush2.msra.mxu0 0.0
    %1511 = vmatprep.subr.mxu0 0.0
    %1512 = vmatpush2.msra.mxu0 0.0
    %1513 = vmatprep.subr.mxu0 0.0
    %1514 = vmatpush2.msra.mxu0 0.0
    %1515 = vmatprep.subr.mxu0 0.0
    %1516 = vmatpush2.msra.mxu0 0.0
    %1517 = vmatprep.subr.mxu0 0.0
    %1518 = vmatpush2.msra.mxu0 0.0
    %1519 = vmatprep.subr.mxu0 0.0
    %1520 = vmatpush2.msra.mxu0 0.0
    %1521 = vmatprep.subr.mxu0 0.0
    %1522 = vmatpush2.msra.mxu0 0.0
    %1523 = vmatprep.subr.mxu0 0.0
    %1524 = vmatpush2.msra.mxu0 0.0
    %1525 = vmatprep.subr.mxu0 0.0
    %1526 = vmatpush2.msra.mxu0 0.0
    %1527 = vmatprep.subr.mxu0 0.0
    %1528 = vmatpush2.msra.mxu0 0.0
    %1529 = vmatprep.subr.mxu0 0.0
    %1530 = vmatpush2.msra.mxu0 0.0
    %1531 = vmatprep.subr.mxu0 0.0
    %1532 = vmatpush2.msra.mxu0 0.0
    %1533 = vmatprep.subr.mxu0 0.0
    %1534 = vmatpush2.msra.mxu0 0.0
    %1535 = vmatprep.mubr.f32.mxu0 0.0
    %1536 = vmatmul.mubr.f32.gmra.mxu0 %v1277
    %v1537 = vpop.f32.mrf.mxu0
    %v1538 = vadd.f32 0.0, %v1537
    %v1539 = vpop.f32.mrf.mxu0
    %1540 = vmatprep.mubr.f32.mxu0 0.0
    %1541 = vmatmul.mubr.f32.gmra.mxu0 %v1280
    %v1542 = vpop.f32.mrf.mxu0
    %v1543 = vadd.f32 0.0, %v1542
    %v1544 = vpop.f32.mrf.mxu0
    %1545 = vmatprep.mubr.f32.mxu0 0.0
    %1546 = vmatmul.mubr.f32.gmra.mxu0 %v1283
    %v1547 = vpop.f32.mrf.mxu0
    %v1548 = vadd.f32 0.0, %v1547
    %v1549 = vpop.f32.mrf.mxu0
    %1550 = vmatprep.mubr.f32.mxu0 0.0
    %1551 = vmatmul.mubr.f32.gmra.mxu0 %v1286
    %v1552 = vpop.f32.mrf.mxu0
    %v1553 = vadd.f32 0.0, %v1552
    %v1554 = vpop.f32.mrf.mxu0
    %1555 = vmatprep.mubr.f32.mxu0 0.0
    %1556 = vmatmul.mubr.f32.gmra.mxu0 %v1289
    %v1557 = vpop.f32.mrf.mxu0
    %v1558 = vadd.f32 0.0, %v1557
    %v1559 = vpop.f32.mrf.mxu0
    %1560 = vdwg.mxu0
    %v1561 = vadd.f32 %v1243, %v1538
    %v1562 = vadd.f32 %v1248, %v1543
    %v1563 = vadd.f32 %v1253, %v1548
    %v1564 = vadd.f32 %v1258, %v1553
    %v1565 = vadd.f32 %v1263, %v1558
    %s1566 = scalar_lea.vmem [#allocation2], 3
    %v1567 = vld [vmem:[%s1566] ss:$2 sm:$0xff]
    %s1568 = scalar_lea.vmem [#allocation2], 19
    %v1569 = vld [vmem:[%s1568] ss:$2 sm:$0xff]
    %s1570 = scalar_lea.vmem [#allocation2], 35
    %v1571 = vld [vmem:[%s1570] ss:$2 sm:$0xff]
    %s1572 = scalar_lea.vmem [#allocation2], 51
    %v1573 = vld [vmem:[%s1572] ss:$2 sm:$0xff]
    %s1574 = scalar_lea.vmem [#allocation2], 67
    %v1575 = vld [vmem:[%s1574] ss:$2 sm:$0xf]
    %v1577 = vsel %vm1025, %v1567, 0
    %v1580 = vsel %vm1025, %v1569, 0
    %v1583 = vsel %vm1025, %v1571, 0
    %v1586 = vsel %vm1025, %v1573, 0
    %v1589 = vsel %vm1025, %v1575, 0
    %1591 = vmatprep.subr.mxu0 0.0
    %1592 = vmatpush1.msra.mxu0 0.0
    %1593 = vmatprep.subr.mxu0 0.0
    %1594 = vmatpush1.msra.mxu0 0.0
    %1595 = vmatprep.subr.mxu0 0.0
    %1596 = vmatpush1.msra.mxu0 0.0
    %1597 = vmatprep.subr.mxu0 0.0
    %1598 = vmatpush1.msra.mxu0 0.0
    %1599 = vmatprep.subr.mxu0 0.0
    %1600 = vmatpush1.msra.mxu0 0.0
    %1601 = vmatprep.subr.mxu0 0.0
    %1602 = vmatpush1.msra.mxu0 0.0
    %1603 = vmatprep.subr.mxu0 0.0
    %1604 = vmatpush1.msra.mxu0 0.0
    %1605 = vmatprep.subr.mxu0 0.0
    %1606 = vmatpush1.msra.mxu0 0.0
    %1607 = vmatprep.subr.mxu0 0.0
    %1608 = vmatpush1.msra.mxu0 0.0
    %1609 = vmatprep.subr.mxu0 0.0
    %1610 = vmatpush1.msra.mxu0 0.0
    %1611 = vmatprep.subr.mxu0 0.0
    %1612 = vmatpush1.msra.mxu0 0.0
    %1613 = vmatprep.subr.mxu0 0.0
    %1614 = vmatpush1.msra.mxu0 0.0
    %1615 = vmatprep.subr.mxu0 0.0
    %1616 = vmatpush1.msra.mxu0 %v66
    %1617 = vmatprep.subr.mxu0 0.0
    %1618 = vmatpush1.msra.mxu0 %v65
    %1619 = vmatprep.subr.mxu0 0.0
    %1620 = vmatpush1.msra.mxu0 %v64
    %1621 = vmatprep.subr.mxu0 0.0
    %1622 = vmatpush1.msra.mxu0 %v63
    %1623 = vmatprep.subr.mxu0 0.0
    %1624 = vmatpush2.msra.mxu0 0.0
    %1625 = vmatprep.subr.mxu0 0.0
    %1626 = vmatpush2.msra.mxu0 0.0
    %1627 = vmatprep.subr.mxu0 0.0
    %1628 = vmatpush2.msra.mxu0 0.0
    %1629 = vmatprep.subr.mxu0 0.0
    %1630 = vmatpush2.msra.mxu0 0.0
    %1631 = vmatprep.subr.mxu0 0.0
    %1632 = vmatpush2.msra.mxu0 0.0
    %1633 = vmatprep.subr.mxu0 0.0
    %1634 = vmatpush2.msra.mxu0 0.0
    %1635 = vmatprep.subr.mxu0 0.0
    %1636 = vmatpush2.msra.mxu0 0.0
    %1637 = vmatprep.subr.mxu0 0.0
    %1638 = vmatpush2.msra.mxu0 0.0
    %1639 = vmatprep.subr.mxu0 0.0
    %1640 = vmatpush2.msra.mxu0 0.0
    %1641 = vmatprep.subr.mxu0 0.0
    %1642 = vmatpush2.msra.mxu0 0.0
    %1643 = vmatprep.subr.mxu0 0.0
    %1644 = vmatpush2.msra.mxu0 0.0
    %1645 = vmatprep.subr.mxu0 0.0
    %1646 = vmatpush2.msra.mxu0 0.0
    %1647 = vmatprep.subr.mxu0 0.0
    %1648 = vmatpush2.msra.mxu0 0.0
    %1649 = vmatprep.subr.mxu0 0.0
    %1650 = vmatpush2.msra.mxu0 0.0
    %1651 = vmatprep.subr.mxu0 0.0
    %1652 = vmatpush2.msra.mxu0 0.0
    %1653 = vmatprep.subr.mxu0 0.0
    %1654 = vmatpush2.msra.mxu0 0.0
    %1655 = vmatprep.mubr.f32.mxu0 0.0
    %1656 = vmatmul.mubr.f32.gmra.mxu0 %v1577
    %v1657 = vpop.f32.mrf.mxu0
    %v1658 = vadd.f32 0.0, %v1657
    %v1659 = vpop.f32.mrf.mxu0
    %1660 = vmatprep.mubr.f32.mxu0 0.0
    %1661 = vmatmul.mubr.f32.gmra.mxu0 %v1580
    %v1662 = vpop.f32.mrf.mxu0
    %v1663 = vadd.f32 0.0, %v1662
    %v1664 = vpop.f32.mrf.mxu0
    %1665 = vmatprep.mubr.f32.mxu0 0.0
    %1666 = vmatmul.mubr.f32.gmra.mxu0 %v1583
    %v1667 = vpop.f32.mrf.mxu0
    %v1668 = vadd.f32 0.0, %v1667
    %v1669 = vpop.f32.mrf.mxu0
    %1670 = vmatprep.mubr.f32.mxu0 0.0
    %1671 = vmatmul.mubr.f32.gmra.mxu0 %v1586
    %v1672 = vpop.f32.mrf.mxu0
    %v1673 = vadd.f32 0.0, %v1672
    %v1674 = vpop.f32.mrf.mxu0
    %1675 = vmatprep.mubr.f32.mxu0 0.0
    %1676 = vmatmul.mubr.f32.gmra.mxu0 %v1589
    %v1677 = vpop.f32.mrf.mxu0
    %v1678 = vadd.f32 0.0, %v1677
    %v1679 = vpop.f32.mrf.mxu0
    %1680 = vdwg.mxu0
    %v1681 = vadd.f32 %v1448, %v1658
    %v1682 = vadd.f32 %v1453, %v1663
    %v1683 = vadd.f32 %v1458, %v1668
    %v1684 = vadd.f32 %v1463, %v1673
    %v1685 = vadd.f32 %v1468, %v1678
    %v1686 = vmax.f32 %v1561, %v1681
    %v1687 = vmax.f32 %v1562, %v1682
    %v1688 = vmax.f32 %v1563, %v1683
    %v1689 = vmax.f32 %v1564, %v1684
    %v1690 = vmax.f32 %v1565, %v1685
    %v1692 = vlaneseq
    %v1693 = vshrl.u32 %v1692, 7
    %v1694 = vsub.s32 0, %v1693
    %v1695 = vrot.slane %v68, %v1694
    %v1697 = vadd.f32 %v1686, %v1695
    %v1698 = vadd.f32 %v1687, %v1695
    %v1699 = vadd.f32 %v1688, %v1695
    %v1700 = vadd.f32 %v1689, %v1695
    %v1701 = vadd.f32 %v1690, %v1695
    %v1702 = vmax.f32 %v1697, 0.0
    %v1703 = vmax.f32 %v1698, 0.0
    %v1704 = vmax.f32 %v1699, 0.0
    %v1705 = vmax.f32 %v1700, 0.0
    %v1706 = vmax.f32 %v1701, 0.0
    %vm1707 = vcmask 516096
    %1708 = vst.msk [vmem:[#allocation3] sm:$0x1] %vm1707, %v1702
    %v1711 = vunpack.c.l.s4 1983009808
    %v1712 = vunpack.c.0.s8 %v1711
    %v1713 = vlaneseq
    %v1714 = vshrl.u32 %v1713, 7
    %v1715 = vsub.s32 %v1712, %v1714
    %v1716 = vrot.slane %v1702, %v1715
    %v1717 = vrot.slane %v1716, 7
    %v1718 = vrot.slane %v1717, 2
    %1719 = vrot.lane.b32.xlu0 %v1718, 64
    %v1720 = vpop.permute.xlu0 %1719
    %vm1722 = vcmask 1040896
    %1723 = vst.msk [vmem:[#allocation3] sm:$0x1] %vm1722, %v1720
    %v1724 = vcombine.high %v1716, %v1716
    %1726 = vst.msk [vmem:[#allocation3 + $0x2] sm:$0x1] %vm1707, %v1724
    %v1727 = vrot.slane %v1724, 7
    %v1728 = vrot.slane %v1727, 2
    %1729 = vrot.lane.b32.xlu0 %v1728, 64
    %v1730 = vpop.permute.xlu0 %1729
    %1732 = vst.msk [vmem:[#allocation3 + $0x2] sm:$0x1] %vm1722, %v1730
    %v1733 = vcombine.high %v1702, %v1702
    %v1735 = vunpack.c.l.s4 1983009808
    %v1736 = vunpack.c.0.s8 %v1735
    %v1737 = vlaneseq
    %v1738 = vshrl.u32 %v1737, 7
    %v1739 = vsub.s32 %v1736, %v1738
    %v1740 = vrot.slane %v1733, %v1739
    %1742 = vst.msk [vmem:[#allocation3 + $0x4] sm:$0x1] %vm1707, %v1740
    %v1743 = vrot.slane %v1740, 7
    %v1744 = vrot.slane %v1743, 2
    %1745 = vrot.lane.b32.xlu0 %v1744, 64
    %v1746 = vpop.permute.xlu0 %1745
    %1748 = vst.msk [vmem:[#allocation3 + $0x4] sm:$0x1] %vm1722, %v1746
    %v1749 = vcombine.high %v1740, %v1740
    %1751 = vst.msk [vmem:[#allocation3 + $0x6] sm:$0x1] %vm1707, %v1749
    %v1752 = vrot.slane %v1749, 7
    %v1753 = vrot.slane %v1752, 2
    %1754 = vrot.lane.b32.xlu0 %v1753, 64
    %v1755 = vpop.permute.xlu0 %1754
    %1757 = vst.msk [vmem:[#allocation3 + $0x6] sm:$0x1] %vm1722, %v1755
    %1758 = vst.msk [vmem:[#allocation3 + $0x8] sm:$0x1] %vm1707, %v1703
    %v1761 = vunpack.c.l.s4 1983009808
    %v1762 = vunpack.c.0.s8 %v1761
    %v1763 = vlaneseq
    %v1764 = vshrl.u32 %v1763, 7
    %v1765 = vsub.s32 %v1762, %v1764
    %v1766 = vrot.slane %v1703, %v1765
    %v1767 = vrot.slane %v1766, 7
    %v1768 = vrot.slane %v1767, 2
    %1769 = vrot.lane.b32.xlu0 %v1768, 64
    %v1770 = vpop.permute.xlu0 %1769
    %1772 = vst.msk [vmem:[#allocation3 + $0x8] sm:$0x1] %vm1722, %v1770
    %v1773 = vcombine.high %v1766, %v1766
    %1775 = vst.msk [vmem:[#allocation3 + $0xa] sm:$0x1] %vm1707, %v1773
    %v1776 = vrot.slane %v1773, 7
    %v1777 = vrot.slane %v1776, 2
    %1778 = vrot.lane.b32.xlu0 %v1777, 64
    %v1779 = vpop.permute.xlu0 %1778
    %1781 = vst.msk [vmem:[#allocation3 + $0xa] sm:$0x1] %vm1722, %v1779
    %v1782 = vcombine.high %v1703, %v1703
    %v1784 = vunpack.c.l.s4 1983009808
    %v1785 = vunpack.c.0.s8 %v1784
    %v1786 = vlaneseq
    %v1787 = vshrl.u32 %v1786, 7
    %v1788 = vsub.s32 %v1785, %v1787
    %v1789 = vrot.slane %v1782, %v1788
    %1791 = vst.msk [vmem:[#allocation3 + $0xc] sm:$0x1] %vm1707, %v1789
    %v1792 = vrot.slane %v1789, 7
    %v1793 = vrot.slane %v1792, 2
    %1794 = vrot.lane.b32.xlu0 %v1793, 64
    %v1795 = vpop.permute.xlu0 %1794
    %1797 = vst.msk [vmem:[#allocation3 + $0xc] sm:$0x1] %vm1722, %v1795
    %v1798 = vcombine.high %v1789, %v1789
    %1800 = vst.msk [vmem:[#allocation3 + $0xe] sm:$0x1] %vm1707, %v1798
    %v1801 = vrot.slane %v1798, 7
    %v1802 = vrot.slane %v1801, 2
    %1803 = vrot.lane.b32.xlu0 %v1802, 64
    %v1804 = vpop.permute.xlu0 %1803
    %1806 = vst.msk [vmem:[#allocation3 + $0xe] sm:$0x1] %vm1722, %v1804
    %1807 = vst.msk [vmem:[#allocation3 + $0x10] sm:$0x1] %vm1707, %v1704
    %v1810 = vunpack.c.l.s4 1983009808
    %v1811 = vunpack.c.0.s8 %v1810
    %v1812 = vlaneseq
    %v1813 = vshrl.u32 %v1812, 7
    %v1814 = vsub.s32 %v1811, %v1813
    %v1815 = vrot.slane %v1704, %v1814
    %v1816 = vrot.slane %v1815, 7
    %v1817 = vrot.slane %v1816, 2
    %1818 = vrot.lane.b32.xlu0 %v1817, 64
    %v1819 = vpop.permute.xlu0 %1818
    %1821 = vst.msk [vmem:[#allocation3 + $0x10] sm:$0x1] %vm1722, %v1819
    %v1822 = vcombine.high %v1815, %v1815
    %1824 = vst.msk [vmem:[#allocation3 + $0x12] sm:$0x1] %vm1707, %v1822
    %v1825 = vrot.slane %v1822, 7
    %v1826 = vrot.slane %v1825, 2
    %1827 = vrot.lane.b32.xlu0 %v1826, 64
    %v1828 = vpop.permute.xlu0 %1827
    %1830 = vst.msk [vmem:[#allocation3 + $0x12] sm:$0x1] %vm1722, %v1828
    %v1831 = vcombine.high %v1704, %v1704
    %v1833 = vunpack.c.l.s4 1983009808
    %v1834 = vunpack.c.0.s8 %v1833
    %v1835 = vlaneseq
    %v1836 = vshrl.u32 %v1835, 7
    %v1837 = vsub.s32 %v1834, %v1836
    %v1838 = vrot.slane %v1831, %v1837
    %1840 = vst.msk [vmem:[#allocation3 + $0x14] sm:$0x1] %vm1707, %v1838
    %v1841 = vrot.slane %v1838, 7
    %v1842 = vrot.slane %v1841, 2
    %1843 = vrot.lane.b32.xlu0 %v1842, 64
    %v1844 = vpop.permute.xlu0 %1843
    %1846 = vst.msk [vmem:[#allocation3 + $0x14] sm:$0x1] %vm1722, %v1844
    %v1847 = vcombine.high %v1838, %v1838
    %1849 = vst.msk [vmem:[#allocation3 + $0x16] sm:$0x1] %vm1707, %v1847
    %v1850 = vrot.slane %v1847, 7
    %v1851 = vrot.slane %v1850, 2
    %1852 = vrot.lane.b32.xlu0 %v1851, 64
    %v1853 = vpop.permute.xlu0 %1852
    %1855 = vst.msk [vmem:[#allocation3 + $0x16] sm:$0x1] %vm1722, %v1853
    %1856 = vst.msk [vmem:[#allocation3 + $0x18] sm:$0x1] %vm1707, %v1705
    %v1859 = vunpack.c.l.s4 1983009808
    %v1860 = vunpack.c.0.s8 %v1859
    %v1861 = vlaneseq
    %v1862 = vshrl.u32 %v1861, 7
    %v1863 = vsub.s32 %v1860, %v1862
    %v1864 = vrot.slane %v1705, %v1863
    %v1865 = vrot.slane %v1864, 7
    %v1866 = vrot.slane %v1865, 2
    %1867 = vrot.lane.b32.xlu0 %v1866, 64
    %v1868 = vpop.permute.xlu0 %1867
    %1870 = vst.msk [vmem:[#allocation3 + $0x18] sm:$0x1] %vm1722, %v1868
    %v1871 = vcombine.high %v1864, %v1864
    %1873 = vst.msk [vmem:[#allocation3 + $0x1a] sm:$0x1] %vm1707, %v1871
    %v1874 = vrot.slane %v1871, 7
    %v1875 = vrot.slane %v1874, 2
    %1876 = vrot.lane.b32.xlu0 %v1875, 64
    %v1877 = vpop.permute.xlu0 %1876
    %1879 = vst.msk [vmem:[#allocation3 + $0x1a] sm:$0x1] %vm1722, %v1877
    %v1880 = vcombine.high %v1705, %v1705
    %v1882 = vunpack.c.l.s4 1983009808
    %v1883 = vunpack.c.0.s8 %v1882
    %v1884 = vlaneseq
    %v1885 = vshrl.u32 %v1884, 7
    %v1886 = vsub.s32 %v1883, %v1885
    %v1887 = vrot.slane %v1880, %v1886
    %1889 = vst.msk [vmem:[#allocation3 + $0x1c] sm:$0x1] %vm1707, %v1887
    %v1890 = vrot.slane %v1887, 7
    %v1891 = vrot.slane %v1890, 2
    %1892 = vrot.lane.b32.xlu0 %v1891, 64
    %v1893 = vpop.permute.xlu0 %1892
    %1895 = vst.msk [vmem:[#allocation3 + $0x1c] sm:$0x1] %vm1722, %v1893
    %v1896 = vcombine.high %v1887, %v1887
    %1898 = vst.msk [vmem:[#allocation3 + $0x1e] sm:$0x1] %vm1707, %v1896
    %v1899 = vrot.slane %v1896, 7
    %v1900 = vrot.slane %v1899, 2
    %1901 = vrot.lane.b32.xlu0 %v1900, 64
    %v1902 = vpop.permute.xlu0 %1901
    %1904 = vst.msk [vmem:[#allocation3 + $0x1e] sm:$0x1] %vm1722, %v1902
    %1905 = vst.msk [vmem:[#allocation3 + $0x20] sm:$0x1] %vm1707, %v1706
    %v1908 = vunpack.c.l.s4 1983009808
    %v1909 = vunpack.c.0.s8 %v1908
    %v1910 = vlaneseq
    %v1911 = vshrl.u32 %v1910, 7
    %v1912 = vsub.s32 %v1909, %v1911
    %v1913 = vrot.slane %v1706, %v1912
    %v1914 = vrot.slane %v1913, 7
    %v1915 = vrot.slane %v1914, 2
    %1916 = vrot.lane.b32.xlu0 %v1915, 64
    %v1917 = vpop.permute.xlu0 %1916
    %1919 = vst.msk [vmem:[#allocation3 + $0x20] sm:$0x1] %vm1722, %v1917
    %v1920 = vcombine.high %v1913, %v1913
    %1922 = vst.msk [vmem:[#allocation3 + $0x22] sm:$0x1] %vm1707, %v1920
    %v1923 = vrot.slane %v1920, 7
    %v1924 = vrot.slane %v1923, 2
    %1925 = vrot.lane.b32.xlu0 %v1924, 64
    %v1926 = vpop.permute.xlu0 %1925
    %1928 = vst.msk [vmem:[#allocation3 + $0x22] sm:$0x1] %vm1722, %v1926
    %s1929 = scalar_lea.vmem %s0, 150
    %v1930 = vld [vmem:[%s1929] ss:$2 sm:$0xff]
    %s1931 = scalar_lea.vmem %s0, 166
    %v1932 = vld [vmem:[%s1931] ss:$2 sm:$0xff]
    %s1933 = scalar_lea.vmem %s0, 182
    %v1934 = vld [vmem:[%s1933] ss:$2 sm:$0xff]
    %s1935 = scalar_lea.vmem %s0, 198
    %v1936 = vld [vmem:[%s1935] ss:$2 sm:$0xff]
    %s1937 = scalar_lea.vmem %s0, 214
    %v1938 = vld [vmem:[%s1937] ss:$2 sm:$0xff]
    %s1939 = scalar_lea.vmem %s0, 230
    %v1940 = vld [vmem:[%s1939] ss:$2 sm:$0xff]
    %s1941 = scalar_lea.vmem %s0, 246
    %v1942 = vld [vmem:[%s1941] ss:$2 sm:$0xff]
    %s1943 = scalar_lea.vmem %s0, 262
    %v1944 = vld [vmem:[%s1943] ss:$2 sm:$0xff]
    %s1945 = scalar_lea.vmem %s0, 278
    %v1946 = vld [vmem:[%s1945] ss:$2 sm:$0xff]
    %s1947 = scalar_lea.vmem %s0, 294
    %v1948 = vld [vmem:[%s1947] ss:$2 sm:$0x3]
    %s1949 = scalar_lea.vmem %s0, 151
    %v1950 = vld [vmem:[%s1949] ss:$2 sm:$0xff]
    %s1951 = scalar_lea.vmem %s0, 167
    %v1952 = vld [vmem:[%s1951] ss:$2 sm:$0xff]
    %s1953 = scalar_lea.vmem %s0, 183
    %v1954 = vld [vmem:[%s1953] ss:$2 sm:$0xff]
    %s1955 = scalar_lea.vmem %s0, 199
    %v1956 = vld [vmem:[%s1955] ss:$2 sm:$0xff]
    %s1957 = scalar_lea.vmem %s0, 215
    %v1958 = vld [vmem:[%s1957] ss:$2 sm:$0xff]
    %s1959 = scalar_lea.vmem %s0, 231
    %v1960 = vld [vmem:[%s1959] ss:$2 sm:$0xff]
    %s1961 = scalar_lea.vmem %s0, 247
    %v1962 = vld [vmem:[%s1961] ss:$2 sm:$0xff]
    %s1963 = scalar_lea.vmem %s0, 263
    %v1964 = vld [vmem:[%s1963] ss:$2 sm:$0xff]
    %s1965 = scalar_lea.vmem %s0, 279
    %v1966 = vld [vmem:[%s1965] ss:$2 sm:$0xff]
    %s1967 = scalar_lea.vmem %s0, 295
    %v1968 = vld [vmem:[%s1967] ss:$2 sm:$0x3]
    %v1970 = vsel %vm108, %v1950, 0
    %v1973 = vsel %vm108, %v1952, 0
    %v1976 = vsel %vm108, %v1954, 0
    %v1979 = vsel %vm108, %v1956, 0
    %v1982 = vsel %vm108, %v1958, 0
    %v1985 = vsel %vm108, %v1960, 0
    %v1988 = vsel %vm108, %v1962, 0
    %v1991 = vsel %vm108, %v1964, 0
    %v1994 = vsel %vm108, %v1966, 0
    %v1997 = vsel %vm108, %v1968, 0
    %1999 = vmatprep.subr.mxu0 0.0
    %2000 = vmatpush1.msra.mxu0 0.0
    %2001 = vmatprep.subr.mxu0 0.0
    %2002 = vmatpush1.msra.mxu0 0.0
    %2003 = vmatprep.subr.mxu0 0.0
    %2004 = vmatpush1.msra.mxu0 0.0
    %2005 = vmatprep.subr.mxu0 0.0
    %2006 = vmatpush1.msra.mxu0 0.0
    %2007 = vmatprep.subr.mxu0 0.0
    %2008 = vmatpush1.msra.mxu0 0.0
    %2009 = vmatprep.subr.mxu0 0.0
    %2010 = vmatpush1.msra.mxu0 0.0
    %2011 = vmatprep.subr.mxu0 0.0
    %2012 = vmatpush1.msra.mxu0 0.0
    %2013 = vmatprep.subr.mxu0 0.0
    %2014 = vmatpush1.msra.mxu0 0.0
    %2015 = vmatprep.subr.mxu0 0.0
    %2016 = vmatpush1.msra.mxu0 0.0
    %2017 = vmatprep.subr.mxu0 0.0
    %2018 = vmatpush1.msra.mxu0 0.0
    %2019 = vmatprep.subr.mxu0 0.0
    %2020 = vmatpush1.msra.mxu0 0.0
    %2021 = vmatprep.subr.mxu0 0.0
    %2022 = vmatpush1.msra.mxu0 0.0
    %2023 = vmatprep.subr.mxu0 0.0
    %2024 = vmatpush1.msra.mxu0 0.0
    %2025 = vmatprep.subr.mxu0 0.0
    %2026 = vmatpush1.msra.mxu0 0.0
    %2027 = vmatprep.subr.mxu0 0.0
    %2028 = vmatpush1.msra.mxu0 0.0
    %2029 = vmatprep.subr.mxu0 0.0
    %2030 = vmatpush1.msra.mxu0 %v141
    %2031 = vmatprep.subr.mxu0 0.0
    %2032 = vmatpush2.msra.mxu0 0.0
    %2033 = vmatprep.subr.mxu0 0.0
    %2034 = vmatpush2.msra.mxu0 0.0
    %2035 = vmatprep.subr.mxu0 0.0
    %2036 = vmatpush2.msra.mxu0 0.0
    %2037 = vmatprep.subr.mxu0 0.0
    %2038 = vmatpush2.msra.mxu0 0.0
    %2039 = vmatprep.subr.mxu0 0.0
    %2040 = vmatpush2.msra.mxu0 0.0
    %2041 = vmatprep.subr.mxu0 0.0
    %2042 = vmatpush2.msra.mxu0 0.0
    %2043 = vmatprep.subr.mxu0 0.0
    %2044 = vmatpush2.msra.mxu0 0.0
    %2045 = vmatprep.subr.mxu0 0.0
    %2046 = vmatpush2.msra.mxu0 0.0
    %2047 = vmatprep.subr.mxu0 0.0
    %2048 = vmatpush2.msra.mxu0 0.0
    %2049 = vmatprep.subr.mxu0 0.0
    %2050 = vmatpush2.msra.mxu0 0.0
    %2051 = vmatprep.subr.mxu0 0.0
    %2052 = vmatpush2.msra.mxu0 0.0
    %2053 = vmatprep.subr.mxu0 0.0
    %2054 = vmatpush2.msra.mxu0 0.0
    %2055 = vmatprep.subr.mxu0 0.0
    %2056 = vmatpush2.msra.mxu0 0.0
    %2057 = vmatprep.subr.mxu0 0.0
    %2058 = vmatpush2.msra.mxu0 0.0
    %2059 = vmatprep.subr.mxu0 0.0
    %2060 = vmatpush2.msra.mxu0 0.0
    %2061 = vmatprep.subr.mxu0 0.0
    %2062 = vmatpush2.msra.mxu0 0.0
    %2063 = vmatprep.mubr.f32.mxu0 0.0
    %2064 = vmatmul.mubr.f32.gmra.mxu0 %v1970
    %v2065 = vpop.f32.mrf.mxu0
    %v2066 = vadd.f32 0.0, %v2065
    %v2067 = vpop.f32.mrf.mxu0
    %2068 = vmatprep.mubr.f32.mxu0 0.0
    %2069 = vmatmul.mubr.f32.gmra.mxu0 %v1973
    %v2070 = vpop.f32.mrf.mxu0
    %v2071 = vadd.f32 0.0, %v2070
    %v2072 = vpop.f32.mrf.mxu0
    %2073 = vmatprep.mubr.f32.mxu0 0.0
    %2074 = vmatmul.mubr.f32.gmra.mxu0 %v1976
    %v2075 = vpop.f32.mrf.mxu0
    %v2076 = vadd.f32 0.0, %v2075
    %v2077 = vpop.f32.mrf.mxu0
    %2078 = vmatprep.mubr.f32.mxu0 0.0
    %2079 = vmatmul.mubr.f32.gmra.mxu0 %v1979
    %v2080 = vpop.f32.mrf.mxu0
    %v2081 = vadd.f32 0.0, %v2080
    %v2082 = vpop.f32.mrf.mxu0
    %2083 = vmatprep.mubr.f32.mxu0 0.0
    %2084 = vmatmul.mubr.f32.gmra.mxu0 %v1982
    %v2085 = vpop.f32.mrf.mxu0
    %v2086 = vadd.f32 0.0, %v2085
    %v2087 = vpop.f32.mrf.mxu0
    %2088 = vmatprep.mubr.f32.mxu0 0.0
    %2089 = vmatmul.mubr.f32.gmra.mxu0 %v1985
    %v2090 = vpop.f32.mrf.mxu0
    %v2091 = vadd.f32 0.0, %v2090
    %v2092 = vpop.f32.mrf.mxu0
    %2093 = vmatprep.mubr.f32.mxu0 0.0
    %2094 = vmatmul.mubr.f32.gmra.mxu0 %v1988
    %v2095 = vpop.f32.mrf.mxu0
    %v2096 = vadd.f32 0.0, %v2095
    %v2097 = vpop.f32.mrf.mxu0
    %2098 = vmatprep.mubr.f32.mxu0 0.0
    %2099 = vmatmul.mubr.f32.gmra.mxu0 %v1991
    %v2100 = vpop.f32.mrf.mxu0
    %v2101 = vadd.f32 0.0, %v2100
    %v2102 = vpop.f32.mrf.mxu0
    %2103 = vmatprep.mubr.f32.mxu0 0.0
    %2104 = vmatmul.mubr.f32.gmra.mxu0 %v1994
    %v2105 = vpop.f32.mrf.mxu0
    %v2106 = vadd.f32 0.0, %v2105
    %v2107 = vpop.f32.mrf.mxu0
    %2108 = vmatprep.mubr.f32.mxu0 0.0
    %2109 = vmatmul.mubr.f32.gmra.mxu0 %v1997
    %v2110 = vpop.f32.mrf.mxu0
    %v2111 = vadd.f32 0.0, %v2110
    %v2112 = vpop.f32.mrf.mxu0
    %2113 = vdwg.mxu0
    %v2115 = vsel %vm108, %v1930, 0
    %v2118 = vsel %vm108, %v1932, 0
    %v2121 = vsel %vm108, %v1934, 0
    %v2124 = vsel %vm108, %v1936, 0
    %v2127 = vsel %vm108, %v1938, 0
    %v2130 = vsel %vm108, %v1940, 0
    %v2133 = vsel %vm108, %v1942, 0
    %v2136 = vsel %vm108, %v1944, 0
    %v2139 = vsel %vm108, %v1946, 0
    %v2142 = vsel %vm108, %v1948, 0
    %2144 = vmatprep.subr.mxu0 0.0
    %2145 = vmatpush1.msra.mxu0 0.0
    %2146 = vmatprep.subr.mxu0 0.0
    %2147 = vmatpush1.msra.mxu0 0.0
    %2148 = vmatprep.subr.mxu0 0.0
    %2149 = vmatpush1.msra.mxu0 0.0
    %2150 = vmatprep.subr.mxu0 0.0
    %2151 = vmatpush1.msra.mxu0 0.0
    %2152 = vmatprep.subr.mxu0 0.0
    %2153 = vmatpush1.msra.mxu0 0.0
    %2154 = vmatprep.subr.mxu0 0.0
    %2155 = vmatpush1.msra.mxu0 0.0
    %2156 = vmatprep.subr.mxu0 0.0
    %2157 = vmatpush1.msra.mxu0 0.0
    %2158 = vmatprep.subr.mxu0 0.0
    %2159 = vmatpush1.msra.mxu0 0.0
    %2160 = vmatprep.subr.mxu0 0.0
    %2161 = vmatpush1.msra.mxu0 0.0
    %2162 = vmatprep.subr.mxu0 0.0
    %2163 = vmatpush1.msra.mxu0 0.0
    %2164 = vmatprep.subr.mxu0 0.0
    %2165 = vmatpush1.msra.mxu0 0.0
    %2166 = vmatprep.subr.mxu0 0.0
    %2167 = vmatpush1.msra.mxu0 0.0
    %2168 = vmatprep.subr.mxu0 0.0
    %2169 = vmatpush1.msra.mxu0 0.0
    %2170 = vmatprep.subr.mxu0 0.0
    %2171 = vmatpush1.msra.mxu0 0.0
    %2172 = vmatprep.subr.mxu0 0.0
    %2173 = vmatpush1.msra.mxu0 0.0
    %2174 = vmatprep.subr.mxu0 0.0
    %2175 = vmatpush1.msra.mxu0 %v289
    %2176 = vmatprep.subr.mxu0 0.0
    %2177 = vmatpush2.msra.mxu0 0.0
    %2178 = vmatprep.subr.mxu0 0.0
    %2179 = vmatpush2.msra.mxu0 0.0
    %2180 = vmatprep.subr.mxu0 0.0
    %2181 = vmatpush2.msra.mxu0 0.0
    %2182 = vmatprep.subr.mxu0 0.0
    %2183 = vmatpush2.msra.mxu0 0.0
    %2184 = vmatprep.subr.mxu0 0.0
    %2185 = vmatpush2.msra.mxu0 0.0
    %2186 = vmatprep.subr.mxu0 0.0
    %2187 = vmatpush2.msra.mxu0 0.0
    %2188 = vmatprep.subr.mxu0 0.0
    %2189 = vmatpush2.msra.mxu0 0.0
    %2190 = vmatprep.subr.mxu0 0.0
    %2191 = vmatpush2.msra.mxu0 0.0
    %2192 = vmatprep.subr.mxu0 0.0
    %2193 = vmatpush2.msra.mxu0 0.0
    %2194 = vmatprep.subr.mxu0 0.0
    %2195 = vmatpush2.msra.mxu0 0.0
    %2196 = vmatprep.subr.mxu0 0.0
    %2197 = vmatpush2.msra.mxu0 0.0
    %2198 = vmatprep.subr.mxu0 0.0
    %2199 = vmatpush2.msra.mxu0 0.0
    %2200 = vmatprep.subr.mxu0 0.0
    %2201 = vmatpush2.msra.mxu0 0.0
    %2202 = vmatprep.subr.mxu0 0.0
    %2203 = vmatpush2.msra.mxu0 0.0
    %2204 = vmatprep.subr.mxu0 0.0
    %2205 = vmatpush2.msra.mxu0 0.0
    %2206 = vmatprep.subr.mxu0 0.0
    %2207 = vmatpush2.msra.mxu0 0.0
    %2208 = vmatprep.mubr.f32.mxu0 0.0
    %2209 = vmatmul.mubr.f32.gmra.mxu0 %v2115
    %v2210 = vpop.f32.mrf.mxu0
    %v2211 = vadd.f32 %v2066, %v2210
    %v2212 = vpop.f32.mrf.mxu0
    %2213 = vmatprep.mubr.f32.mxu0 0.0
    %2214 = vmatmul.mubr.f32.gmra.mxu0 %v2118
    %v2215 = vpop.f32.mrf.mxu0
    %v2216 = vadd.f32 %v2071, %v2215
    %v2217 = vpop.f32.mrf.mxu0
    %2218 = vmatprep.mubr.f32.mxu0 0.0
    %2219 = vmatmul.mubr.f32.gmra.mxu0 %v2121
    %v2220 = vpop.f32.mrf.mxu0
    %v2221 = vadd.f32 %v2076, %v2220
    %v2222 = vpop.f32.mrf.mxu0
    %2223 = vmatprep.mubr.f32.mxu0 0.0
    %2224 = vmatmul.mubr.f32.gmra.mxu0 %v2124
    %v2225 = vpop.f32.mrf.mxu0
    %v2226 = vadd.f32 %v2081, %v2225
    %v2227 = vpop.f32.mrf.mxu0
    %2228 = vmatprep.mubr.f32.mxu0 0.0
    %2229 = vmatmul.mubr.f32.gmra.mxu0 %v2127
    %v2230 = vpop.f32.mrf.mxu0
    %v2231 = vadd.f32 %v2086, %v2230
    %v2232 = vpop.f32.mrf.mxu0
    %2233 = vmatprep.mubr.f32.mxu0 0.0
    %2234 = vmatmul.mubr.f32.gmra.mxu0 %v2130
    %v2235 = vpop.f32.mrf.mxu0
    %v2236 = vadd.f32 %v2091, %v2235
    %v2237 = vpop.f32.mrf.mxu0
    %2238 = vmatprep.mubr.f32.mxu0 0.0
    %2239 = vmatmul.mubr.f32.gmra.mxu0 %v2133
    %v2240 = vpop.f32.mrf.mxu0
    %v2241 = vadd.f32 %v2096, %v2240
    %v2242 = vpop.f32.mrf.mxu0
    %2243 = vmatprep.mubr.f32.mxu0 0.0
    %2244 = vmatmul.mubr.f32.gmra.mxu0 %v2136
    %v2245 = vpop.f32.mrf.mxu0
    %v2246 = vadd.f32 %v2101, %v2245
    %v2247 = vpop.f32.mrf.mxu0
    %2248 = vmatprep.mubr.f32.mxu0 0.0
    %2249 = vmatmul.mubr.f32.gmra.mxu0 %v2139
    %v2250 = vpop.f32.mrf.mxu0
    %v2251 = vadd.f32 %v2106, %v2250
    %v2252 = vpop.f32.mrf.mxu0
    %2253 = vmatprep.mubr.f32.mxu0 0.0
    %2254 = vmatmul.mubr.f32.gmra.mxu0 %v2142
    %v2255 = vpop.f32.mrf.mxu0
    %v2256 = vadd.f32 %v2111, %v2255
    %v2257 = vpop.f32.mrf.mxu0
    %2258 = vdwg.mxu0
    %s2259 = scalar_lea.vmem %s0, 152
    %v2260 = vld [vmem:[%s2259] ss:$2 sm:$0xff]
    %s2261 = scalar_lea.vmem %s0, 168
    %v2262 = vld [vmem:[%s2261] ss:$2 sm:$0xff]
    %s2263 = scalar_lea.vmem %s0, 184
    %v2264 = vld [vmem:[%s2263] ss:$2 sm:$0xff]
    %s2265 = scalar_lea.vmem %s0, 200
    %v2266 = vld [vmem:[%s2265] ss:$2 sm:$0xff]
    %s2267 = scalar_lea.vmem %s0, 216
    %v2268 = vld [vmem:[%s2267] ss:$2 sm:$0xff]
    %s2269 = scalar_lea.vmem %s0, 232
    %v2270 = vld [vmem:[%s2269] ss:$2 sm:$0xff]
    %s2271 = scalar_lea.vmem %s0, 248
    %v2272 = vld [vmem:[%s2271] ss:$2 sm:$0xff]
    %s2273 = scalar_lea.vmem %s0, 264
    %v2274 = vld [vmem:[%s2273] ss:$2 sm:$0xff]
    %s2275 = scalar_lea.vmem %s0, 280
    %v2276 = vld [vmem:[%s2275] ss:$2 sm:$0xff]
    %s2277 = scalar_lea.vmem %s0, 296
    %v2278 = vld [vmem:[%s2277] ss:$2 sm:$0x3]
    %v2280 = vsel %vm108, %v2260, 0
    %v2283 = vsel %vm108, %v2262, 0
    %v2286 = vsel %vm108, %v2264, 0
    %v2289 = vsel %vm108, %v2266, 0
    %v2292 = vsel %vm108, %v2268, 0
    %v2295 = vsel %vm108, %v2270, 0
    %v2298 = vsel %vm108, %v2272, 0
    %v2301 = vsel %vm108, %v2274, 0
    %v2304 = vsel %vm108, %v2276, 0
    %v2307 = vsel %vm108, %v2278, 0
    %2309 = vmatprep.subr.mxu0 0.0
    %2310 = vmatpush1.msra.mxu0 0.0
    %2311 = vmatprep.subr.mxu0 0.0
    %2312 = vmatpush1.msra.mxu0 0.0
    %2313 = vmatprep.subr.mxu0 0.0
    %2314 = vmatpush1.msra.mxu0 0.0
    %2315 = vmatprep.subr.mxu0 0.0
    %2316 = vmatpush1.msra.mxu0 0.0
    %2317 = vmatprep.subr.mxu0 0.0
    %2318 = vmatpush1.msra.mxu0 0.0
    %2319 = vmatprep.subr.mxu0 0.0
    %2320 = vmatpush1.msra.mxu0 0.0
    %2321 = vmatprep.subr.mxu0 0.0
    %2322 = vmatpush1.msra.mxu0 0.0
    %2323 = vmatprep.subr.mxu0 0.0
    %2324 = vmatpush1.msra.mxu0 0.0
    %2325 = vmatprep.subr.mxu0 0.0
    %2326 = vmatpush1.msra.mxu0 0.0
    %2327 = vmatprep.subr.mxu0 0.0
    %2328 = vmatpush1.msra.mxu0 0.0
    %2329 = vmatprep.subr.mxu0 0.0
    %2330 = vmatpush1.msra.mxu0 0.0
    %2331 = vmatprep.subr.mxu0 0.0
    %2332 = vmatpush1.msra.mxu0 0.0
    %2333 = vmatprep.subr.mxu0 0.0
    %2334 = vmatpush1.msra.mxu0 0.0
    %2335 = vmatprep.subr.mxu0 0.0
    %2336 = vmatpush1.msra.mxu0 0.0
    %2337 = vmatprep.subr.mxu0 0.0
    %2338 = vmatpush1.msra.mxu0 0.0
    %2339 = vmatprep.subr.mxu0 0.0
    %2340 = vmatpush1.msra.mxu0 %v141
    %2341 = vmatprep.subr.mxu0 0.0
    %2342 = vmatpush2.msra.mxu0 0.0
    %2343 = vmatprep.subr.mxu0 0.0
    %2344 = vmatpush2.msra.mxu0 0.0
    %2345 = vmatprep.subr.mxu0 0.0
    %2346 = vmatpush2.msra.mxu0 0.0
    %2347 = vmatprep.subr.mxu0 0.0
    %2348 = vmatpush2.msra.mxu0 0.0
    %2349 = vmatprep.subr.mxu0 0.0
    %2350 = vmatpush2.msra.mxu0 0.0
    %2351 = vmatprep.subr.mxu0 0.0
    %2352 = vmatpush2.msra.mxu0 0.0
    %2353 = vmatprep.subr.mxu0 0.0
    %2354 = vmatpush2.msra.mxu0 0.0
    %2355 = vmatprep.subr.mxu0 0.0
    %2356 = vmatpush2.msra.mxu0 0.0
    %2357 = vmatprep.subr.mxu0 0.0
    %2358 = vmatpush2.msra.mxu0 0.0
    %2359 = vmatprep.subr.mxu0 0.0
    %2360 = vmatpush2.msra.mxu0 0.0
    %2361 = vmatprep.subr.mxu0 0.0
    %2362 = vmatpush2.msra.mxu0 0.0
    %2363 = vmatprep.subr.mxu0 0.0
    %2364 = vmatpush2.msra.mxu0 0.0
    %2365 = vmatprep.subr.mxu0 0.0
    %2366 = vmatpush2.msra.mxu0 0.0
    %2367 = vmatprep.subr.mxu0 0.0
    %2368 = vmatpush2.msra.mxu0 0.0
    %2369 = vmatprep.subr.mxu0 0.0
    %2370 = vmatpush2.msra.mxu0 0.0
    %2371 = vmatprep.subr.mxu0 0.0
    %2372 = vmatpush2.msra.mxu0 0.0
    %2373 = vmatprep.mubr.f32.mxu0 0.0
    %2374 = vmatmul.mubr.f32.gmra.mxu0 %v2280
    %v2375 = vpop.f32.mrf.mxu0
    %v2376 = vadd.f32 0.0, %v2375
    %v2377 = vpop.f32.mrf.mxu0
    %2378 = vmatprep.mubr.f32.mxu0 0.0
    %2379 = vmatmul.mubr.f32.gmra.mxu0 %v2283
    %v2380 = vpop.f32.mrf.mxu0
    %v2381 = vadd.f32 0.0, %v2380
    %v2382 = vpop.f32.mrf.mxu0
    %2383 = vmatprep.mubr.f32.mxu0 0.0
    %2384 = vmatmul.mubr.f32.gmra.mxu0 %v2286
    %v2385 = vpop.f32.mrf.mxu0
    %v2386 = vadd.f32 0.0, %v2385
    %v2387 = vpop.f32.mrf.mxu0
    %2388 = vmatprep.mubr.f32.mxu0 0.0
    %2389 = vmatmul.mubr.f32.gmra.mxu0 %v2289
    %v2390 = vpop.f32.mrf.mxu0
    %v2391 = vadd.f32 0.0, %v2390
    %v2392 = vpop.f32.mrf.mxu0
    %2393 = vmatprep.mubr.f32.mxu0 0.0
    %2394 = vmatmul.mubr.f32.gmra.mxu0 %v2292
    %v2395 = vpop.f32.mrf.mxu0
    %v2396 = vadd.f32 0.0, %v2395
    %v2397 = vpop.f32.mrf.mxu0
    %2398 = vmatprep.mubr.f32.mxu0 0.0
    %2399 = vmatmul.mubr.f32.gmra.mxu0 %v2295
    %v2400 = vpop.f32.mrf.mxu0
    %v2401 = vadd.f32 0.0, %v2400
    %v2402 = vpop.f32.mrf.mxu0
    %2403 = vmatprep.mubr.f32.mxu0 0.0
    %2404 = vmatmul.mubr.f32.gmra.mxu0 %v2298
    %v2405 = vpop.f32.mrf.mxu0
    %v2406 = vadd.f32 0.0, %v2405
    %v2407 = vpop.f32.mrf.mxu0
    %2408 = vmatprep.mubr.f32.mxu0 0.0
    %2409 = vmatmul.mubr.f32.gmra.mxu0 %v2301
    %v2410 = vpop.f32.mrf.mxu0
    %v2411 = vadd.f32 0.0, %v2410
    %v2412 = vpop.f32.mrf.mxu0
    %2413 = vmatprep.mubr.f32.mxu0 0.0
    %2414 = vmatmul.mubr.f32.gmra.mxu0 %v2304
    %v2415 = vpop.f32.mrf.mxu0
    %v2416 = vadd.f32 0.0, %v2415
    %v2417 = vpop.f32.mrf.mxu0
    %2418 = vmatprep.mubr.f32.mxu0 0.0
    %2419 = vmatmul.mubr.f32.gmra.mxu0 %v2307
    %v2420 = vpop.f32.mrf.mxu0
    %v2421 = vadd.f32 0.0, %v2420
    %v2422 = vpop.f32.mrf.mxu0
    %2423 = vdwg.mxu0
    %2424 = vmatprep.subr.mxu0 0.0
    %2425 = vmatpush1.msra.mxu0 0.0
    %2426 = vmatprep.subr.mxu0 0.0
    %2427 = vmatpush1.msra.mxu0 0.0
    %2428 = vmatprep.subr.mxu0 0.0
    %2429 = vmatpush1.msra.mxu0 0.0
    %2430 = vmatprep.subr.mxu0 0.0
    %2431 = vmatpush1.msra.mxu0 0.0
    %2432 = vmatprep.subr.mxu0 0.0
    %2433 = vmatpush1.msra.mxu0 0.0
    %2434 = vmatprep.subr.mxu0 0.0
    %2435 = vmatpush1.msra.mxu0 0.0
    %2436 = vmatprep.subr.mxu0 0.0
    %2437 = vmatpush1.msra.mxu0 0.0
    %2438 = vmatprep.subr.mxu0 0.0
    %2439 = vmatpush1.msra.mxu0 0.0
    %2440 = vmatprep.subr.mxu0 0.0
    %2441 = vmatpush1.msra.mxu0 0.0
    %2442 = vmatprep.subr.mxu0 0.0
    %2443 = vmatpush1.msra.mxu0 0.0
    %2444 = vmatprep.subr.mxu0 0.0
    %2445 = vmatpush1.msra.mxu0 0.0
    %2446 = vmatprep.subr.mxu0 0.0
    %2447 = vmatpush1.msra.mxu0 0.0
    %2448 = vmatprep.subr.mxu0 0.0
    %2449 = vmatpush1.msra.mxu0 0.0
    %2450 = vmatprep.subr.mxu0 0.0
    %2451 = vmatpush1.msra.mxu0 0.0
    %2452 = vmatprep.subr.mxu0 0.0
    %2453 = vmatpush1.msra.mxu0 0.0
    %2454 = vmatprep.subr.mxu0 0.0
    %2455 = vmatpush1.msra.mxu0 %v289
    %2456 = vmatprep.subr.mxu0 0.0
    %2457 = vmatpush2.msra.mxu0 0.0
    %2458 = vmatprep.subr.mxu0 0.0
    %2459 = vmatpush2.msra.mxu0 0.0
    %2460 = vmatprep.subr.mxu0 0.0
    %2461 = vmatpush2.msra.mxu0 0.0
    %2462 = vmatprep.subr.mxu0 0.0
    %2463 = vmatpush2.msra.mxu0 0.0
    %2464 = vmatprep.subr.mxu0 0.0
    %2465 = vmatpush2.msra.mxu0 0.0
    %2466 = vmatprep.subr.mxu0 0.0
    %2467 = vmatpush2.msra.mxu0 0.0
    %2468 = vmatprep.subr.mxu0 0.0
    %2469 = vmatpush2.msra.mxu0 0.0
    %2470 = vmatprep.subr.mxu0 0.0
    %2471 = vmatpush2.msra.mxu0 0.0
    %2472 = vmatprep.subr.mxu0 0.0
    %2473 = vmatpush2.msra.mxu0 0.0
    %2474 = vmatprep.subr.mxu0 0.0
    %2475 = vmatpush2.msra.mxu0 0.0
    %2476 = vmatprep.subr.mxu0 0.0
    %2477 = vmatpush2.msra.mxu0 0.0
    %2478 = vmatprep.subr.mxu0 0.0
    %2479 = vmatpush2.msra.mxu0 0.0
    %2480 = vmatprep.subr.mxu0 0.0
    %2481 = vmatpush2.msra.mxu0 0.0
    %2482 = vmatprep.subr.mxu0 0.0
    %2483 = vmatpush2.msra.mxu0 0.0
    %2484 = vmatprep.subr.mxu0 0.0
    %2485 = vmatpush2.msra.mxu0 0.0
    %2486 = vmatprep.subr.mxu0 0.0
    %2487 = vmatpush2.msra.mxu0 0.0
    %2488 = vmatprep.mubr.f32.mxu0 0.0
    %2489 = vmatmul.mubr.f32.gmra.mxu0 %v1970
    %v2490 = vpop.f32.mrf.mxu0
    %v2491 = vadd.f32 %v2376, %v2490
    %v2492 = vpop.f32.mrf.mxu0
    %2493 = vmatprep.mubr.f32.mxu0 0.0
    %2494 = vmatmul.mubr.f32.gmra.mxu0 %v1973
    %v2495 = vpop.f32.mrf.mxu0
    %v2496 = vadd.f32 %v2381, %v2495
    %v2497 = vpop.f32.mrf.mxu0
    %2498 = vmatprep.mubr.f32.mxu0 0.0
    %2499 = vmatmul.mubr.f32.gmra.mxu0 %v1976
    %v2500 = vpop.f32.mrf.mxu0
    %v2501 = vadd.f32 %v2386, %v2500
    %v2502 = vpop.f32.mrf.mxu0
    %2503 = vmatprep.mubr.f32.mxu0 0.0
    %2504 = vmatmul.mubr.f32.gmra.mxu0 %v1979
    %v2505 = vpop.f32.mrf.mxu0
    %v2506 = vadd.f32 %v2391, %v2505
    %v2507 = vpop.f32.mrf.mxu0
    %2508 = vmatprep.mubr.f32.mxu0 0.0
    %2509 = vmatmul.mubr.f32.gmra.mxu0 %v1982
    %v2510 = vpop.f32.mrf.mxu0
    %v2511 = vadd.f32 %v2396, %v2510
    %v2512 = vpop.f32.mrf.mxu0
    %2513 = vmatprep.mubr.f32.mxu0 0.0
    %2514 = vmatmul.mubr.f32.gmra.mxu0 %v1985
    %v2515 = vpop.f32.mrf.mxu0
    %v2516 = vadd.f32 %v2401, %v2515
    %v2517 = vpop.f32.mrf.mxu0
    %2518 = vmatprep.mubr.f32.mxu0 0.0
    %2519 = vmatmul.mubr.f32.gmra.mxu0 %v1988
    %v2520 = vpop.f32.mrf.mxu0
    %v2521 = vadd.f32 %v2406, %v2520
    %v2522 = vpop.f32.mrf.mxu0
    %2523 = vmatprep.mubr.f32.mxu0 0.0
    %2524 = vmatmul.mubr.f32.gmra.mxu0 %v1991
    %v2525 = vpop.f32.mrf.mxu0
    %v2526 = vadd.f32 %v2411, %v2525
    %v2527 = vpop.f32.mrf.mxu0
    %2528 = vmatprep.mubr.f32.mxu0 0.0
    %2529 = vmatmul.mubr.f32.gmra.mxu0 %v1994
    %v2530 = vpop.f32.mrf.mxu0
    %v2531 = vadd.f32 %v2416, %v2530
    %v2532 = vpop.f32.mrf.mxu0
    %2533 = vmatprep.mubr.f32.mxu0 0.0
    %2534 = vmatmul.mubr.f32.gmra.mxu0 %v1997
    %v2535 = vpop.f32.mrf.mxu0
    %v2536 = vadd.f32 %v2421, %v2535
    %v2537 = vpop.f32.mrf.mxu0
    %2538 = vdwg.mxu0
    %2539 = vmatprep.subr.mxu0 0.0
    %2540 = vmatpush1.msra.mxu0 0.0
    %2541 = vmatprep.subr.mxu0 0.0
    %2542 = vmatpush1.msra.mxu0 0.0
    %2543 = vmatprep.subr.mxu0 0.0
    %2544 = vmatpush1.msra.mxu0 0.0
    %2545 = vmatprep.subr.mxu0 0.0
    %2546 = vmatpush1.msra.mxu0 0.0
    %2547 = vmatprep.subr.mxu0 0.0
    %2548 = vmatpush1.msra.mxu0 0.0
    %2549 = vmatprep.subr.mxu0 0.0
    %2550 = vmatpush1.msra.mxu0 0.0
    %2551 = vmatprep.subr.mxu0 0.0
    %2552 = vmatpush1.msra.mxu0 0.0
    %2553 = vmatprep.subr.mxu0 0.0
    %2554 = vmatpush1.msra.mxu0 0.0
    %2555 = vmatprep.subr.mxu0 0.0
    %2556 = vmatpush1.msra.mxu0 0.0
    %2557 = vmatprep.subr.mxu0 0.0
    %2558 = vmatpush1.msra.mxu0 0.0
    %2559 = vmatprep.subr.mxu0 0.0
    %2560 = vmatpush1.msra.mxu0 0.0
    %2561 = vmatprep.subr.mxu0 0.0
    %2562 = vmatpush1.msra.mxu0 0.0
    %2563 = vmatprep.subr.mxu0 0.0
    %2564 = vmatpush1.msra.mxu0 0.0
    %2565 = vmatprep.subr.mxu0 0.0
    %2566 = vmatpush1.msra.mxu0 0.0
    %2567 = vmatprep.subr.mxu0 0.0
    %2568 = vmatpush1.msra.mxu0 0.0
    %2569 = vmatprep.subr.mxu0 0.0
    %2570 = vmatpush1.msra.mxu0 %v687
    %2571 = vmatprep.subr.mxu0 0.0
    %2572 = vmatpush2.msra.mxu0 0.0
    %2573 = vmatprep.subr.mxu0 0.0
    %2574 = vmatpush2.msra.mxu0 0.0
    %2575 = vmatprep.subr.mxu0 0.0
    %2576 = vmatpush2.msra.mxu0 0.0
    %2577 = vmatprep.subr.mxu0 0.0
    %2578 = vmatpush2.msra.mxu0 0.0
    %2579 = vmatprep.subr.mxu0 0.0
    %2580 = vmatpush2.msra.mxu0 0.0
    %2581 = vmatprep.subr.mxu0 0.0
    %2582 = vmatpush2.msra.mxu0 0.0
    %2583 = vmatprep.subr.mxu0 0.0
    %2584 = vmatpush2.msra.mxu0 0.0
    %2585 = vmatprep.subr.mxu0 0.0
    %2586 = vmatpush2.msra.mxu0 0.0
    %2587 = vmatprep.subr.mxu0 0.0
    %2588 = vmatpush2.msra.mxu0 0.0
    %2589 = vmatprep.subr.mxu0 0.0
    %2590 = vmatpush2.msra.mxu0 0.0
    %2591 = vmatprep.subr.mxu0 0.0
    %2592 = vmatpush2.msra.mxu0 0.0
    %2593 = vmatprep.subr.mxu0 0.0
    %2594 = vmatpush2.msra.mxu0 0.0
    %2595 = vmatprep.subr.mxu0 0.0
    %2596 = vmatpush2.msra.mxu0 0.0
    %2597 = vmatprep.subr.mxu0 0.0
    %2598 = vmatpush2.msra.mxu0 0.0
    %2599 = vmatprep.subr.mxu0 0.0
    %2600 = vmatpush2.msra.mxu0 0.0
    %2601 = vmatprep.subr.mxu0 0.0
    %2602 = vmatpush2.msra.mxu0 0.0
    %2603 = vmatprep.mubr.f32.mxu0 0.0
    %2604 = vmatmul.mubr.f32.gmra.mxu0 %v2280
    %v2605 = vpop.f32.mrf.mxu0
    %v2606 = vadd.f32 0.0, %v2605
    %v2607 = vpop.f32.mrf.mxu0
    %2608 = vmatprep.mubr.f32.mxu0 0.0
    %2609 = vmatmul.mubr.f32.gmra.mxu0 %v2283
    %v2610 = vpop.f32.mrf.mxu0
    %v2611 = vadd.f32 0.0, %v2610
    %v2612 = vpop.f32.mrf.mxu0
    %2613 = vmatprep.mubr.f32.mxu0 0.0
    %2614 = vmatmul.mubr.f32.gmra.mxu0 %v2286
    %v2615 = vpop.f32.mrf.mxu0
    %v2616 = vadd.f32 0.0, %v2615
    %v2617 = vpop.f32.mrf.mxu0
    %2618 = vmatprep.mubr.f32.mxu0 0.0
    %2619 = vmatmul.mubr.f32.gmra.mxu0 %v2289
    %v2620 = vpop.f32.mrf.mxu0
    %v2621 = vadd.f32 0.0, %v2620
    %v2622 = vpop.f32.mrf.mxu0
    %2623 = vmatprep.mubr.f32.mxu0 0.0
    %2624 = vmatmul.mubr.f32.gmra.mxu0 %v2292
    %v2625 = vpop.f32.mrf.mxu0
    %v2626 = vadd.f32 0.0, %v2625
    %v2627 = vpop.f32.mrf.mxu0
    %2628 = vmatprep.mubr.f32.mxu0 0.0
    %2629 = vmatmul.mubr.f32.gmra.mxu0 %v2295
    %v2630 = vpop.f32.mrf.mxu0
    %v2631 = vadd.f32 0.0, %v2630
    %v2632 = vpop.f32.mrf.mxu0
    %2633 = vmatprep.mubr.f32.mxu0 0.0
    %2634 = vmatmul.mubr.f32.gmra.mxu0 %v2298
    %v2635 = vpop.f32.mrf.mxu0
    %v2636 = vadd.f32 0.0, %v2635
    %v2637 = vpop.f32.mrf.mxu0
    %2638 = vmatprep.mubr.f32.mxu0 0.0
    %2639 = vmatmul.mubr.f32.gmra.mxu0 %v2301
    %v2640 = vpop.f32.mrf.mxu0
    %v2641 = vadd.f32 0.0, %v2640
    %v2642 = vpop.f32.mrf.mxu0
    %2643 = vmatprep.mubr.f32.mxu0 0.0
    %2644 = vmatmul.mubr.f32.gmra.mxu0 %v2304
    %v2645 = vpop.f32.mrf.mxu0
    %v2646 = vadd.f32 0.0, %v2645
    %v2647 = vpop.f32.mrf.mxu0
    %2648 = vmatprep.mubr.f32.mxu0 0.0
    %2649 = vmatmul.mubr.f32.gmra.mxu0 %v2307
    %v2650 = vpop.f32.mrf.mxu0
    %v2651 = vadd.f32 0.0, %v2650
    %v2652 = vpop.f32.mrf.mxu0
    %2653 = vdwg.mxu0
    %v2654 = vadd.f32 %v2211, %v2606
    %v2655 = vadd.f32 %v2216, %v2611
    %v2656 = vadd.f32 %v2221, %v2616
    %v2657 = vadd.f32 %v2226, %v2621
    %v2658 = vadd.f32 %v2231, %v2626
    %v2659 = vadd.f32 %v2236, %v2631
    %v2660 = vadd.f32 %v2241, %v2636
    %v2661 = vadd.f32 %v2246, %v2641
    %v2662 = vadd.f32 %v2251, %v2646
    %v2663 = vadd.f32 %v2256, %v2651
    %s2664 = scalar_lea.vmem %s0, 153
    %v2665 = vld [vmem:[%s2664] ss:$2 sm:$0xff]
    %s2666 = scalar_lea.vmem %s0, 169
    %v2667 = vld [vmem:[%s2666] ss:$2 sm:$0xff]
    %s2668 = scalar_lea.vmem %s0, 185
    %v2669 = vld [vmem:[%s2668] ss:$2 sm:$0xff]
    %s2670 = scalar_lea.vmem %s0, 201
    %v2671 = vld [vmem:[%s2670] ss:$2 sm:$0xff]
    %s2672 = scalar_lea.vmem %s0, 217
    %v2673 = vld [vmem:[%s2672] ss:$2 sm:$0xff]
    %s2674 = scalar_lea.vmem %s0, 233
    %v2675 = vld [vmem:[%s2674] ss:$2 sm:$0xff]
    %s2676 = scalar_lea.vmem %s0, 249
    %v2677 = vld [vmem:[%s2676] ss:$2 sm:$0xff]
    %s2678 = scalar_lea.vmem %s0, 265
    %v2679 = vld [vmem:[%s2678] ss:$2 sm:$0xff]
    %s2680 = scalar_lea.vmem %s0, 281
    %v2681 = vld [vmem:[%s2680] ss:$2 sm:$0xff]
    %s2682 = scalar_lea.vmem %s0, 297
    %v2683 = vld [vmem:[%s2682] ss:$2 sm:$0x3]
    %v2685 = vsel %vm108, %v2665, 0
    %v2688 = vsel %vm108, %v2667, 0
    %v2691 = vsel %vm108, %v2669, 0
    %v2694 = vsel %vm108, %v2671, 0
    %v2697 = vsel %vm108, %v2673, 0
    %v2700 = vsel %vm108, %v2675, 0
    %v2703 = vsel %vm108, %v2677, 0
    %v2706 = vsel %vm108, %v2679, 0
    %v2709 = vsel %vm108, %v2681, 0
    %v2712 = vsel %vm108, %v2683, 0
    %2714 = vmatprep.subr.mxu0 0.0
    %2715 = vmatpush1.msra.mxu0 0.0
    %2716 = vmatprep.subr.mxu0 0.0
    %2717 = vmatpush1.msra.mxu0 0.0
    %2718 = vmatprep.subr.mxu0 0.0
    %2719 = vmatpush1.msra.mxu0 0.0
    %2720 = vmatprep.subr.mxu0 0.0
    %2721 = vmatpush1.msra.mxu0 0.0
    %2722 = vmatprep.subr.mxu0 0.0
    %2723 = vmatpush1.msra.mxu0 0.0
    %2724 = vmatprep.subr.mxu0 0.0
    %2725 = vmatpush1.msra.mxu0 0.0
    %2726 = vmatprep.subr.mxu0 0.0
    %2727 = vmatpush1.msra.mxu0 0.0
    %2728 = vmatprep.subr.mxu0 0.0
    %2729 = vmatpush1.msra.mxu0 0.0
    %2730 = vmatprep.subr.mxu0 0.0
    %2731 = vmatpush1.msra.mxu0 0.0
    %2732 = vmatprep.subr.mxu0 0.0
    %2733 = vmatpush1.msra.mxu0 0.0
    %2734 = vmatprep.subr.mxu0 0.0
    %2735 = vmatpush1.msra.mxu0 0.0
    %2736 = vmatprep.subr.mxu0 0.0
    %2737 = vmatpush1.msra.mxu0 0.0
    %2738 = vmatprep.subr.mxu0 0.0
    %2739 = vmatpush1.msra.mxu0 0.0
    %2740 = vmatprep.subr.mxu0 0.0
    %2741 = vmatpush1.msra.mxu0 0.0
    %2742 = vmatprep.subr.mxu0 0.0
    %2743 = vmatpush1.msra.mxu0 0.0
    %2744 = vmatprep.subr.mxu0 0.0
    %2745 = vmatpush1.msra.mxu0 %v687
    %2746 = vmatprep.subr.mxu0 0.0
    %2747 = vmatpush2.msra.mxu0 0.0
    %2748 = vmatprep.subr.mxu0 0.0
    %2749 = vmatpush2.msra.mxu0 0.0
    %2750 = vmatprep.subr.mxu0 0.0
    %2751 = vmatpush2.msra.mxu0 0.0
    %2752 = vmatprep.subr.mxu0 0.0
    %2753 = vmatpush2.msra.mxu0 0.0
    %2754 = vmatprep.subr.mxu0 0.0
    %2755 = vmatpush2.msra.mxu0 0.0
    %2756 = vmatprep.subr.mxu0 0.0
    %2757 = vmatpush2.msra.mxu0 0.0
    %2758 = vmatprep.subr.mxu0 0.0
    %2759 = vmatpush2.msra.mxu0 0.0
    %2760 = vmatprep.subr.mxu0 0.0
    %2761 = vmatpush2.msra.mxu0 0.0
    %2762 = vmatprep.subr.mxu0 0.0
    %2763 = vmatpush2.msra.mxu0 0.0
    %2764 = vmatprep.subr.mxu0 0.0
    %2765 = vmatpush2.msra.mxu0 0.0
    %2766 = vmatprep.subr.mxu0 0.0
    %2767 = vmatpush2.msra.mxu0 0.0
    %2768 = vmatprep.subr.mxu0 0.0
    %2769 = vmatpush2.msra.mxu0 0.0
    %2770 = vmatprep.subr.mxu0 0.0
    %2771 = vmatpush2.msra.mxu0 0.0
    %2772 = vmatprep.subr.mxu0 0.0
    %2773 = vmatpush2.msra.mxu0 0.0
    %2774 = vmatprep.subr.mxu0 0.0
    %2775 = vmatpush2.msra.mxu0 0.0
    %2776 = vmatprep.subr.mxu0 0.0
    %2777 = vmatpush2.msra.mxu0 0.0
    %2778 = vmatprep.mubr.f32.mxu0 0.0
    %2779 = vmatmul.mubr.f32.gmra.mxu0 %v2685
    %v2780 = vpop.f32.mrf.mxu0
    %v2781 = vadd.f32 0.0, %v2780
    %v2782 = vpop.f32.mrf.mxu0
    %2783 = vmatprep.mubr.f32.mxu0 0.0
    %2784 = vmatmul.mubr.f32.gmra.mxu0 %v2688
    %v2785 = vpop.f32.mrf.mxu0
    %v2786 = vadd.f32 0.0, %v2785
    %v2787 = vpop.f32.mrf.mxu0
    %2788 = vmatprep.mubr.f32.mxu0 0.0
    %2789 = vmatmul.mubr.f32.gmra.mxu0 %v2691
    %v2790 = vpop.f32.mrf.mxu0
    %v2791 = vadd.f32 0.0, %v2790
    %v2792 = vpop.f32.mrf.mxu0
    %2793 = vmatprep.mubr.f32.mxu0 0.0
    %2794 = vmatmul.mubr.f32.gmra.mxu0 %v2694
    %v2795 = vpop.f32.mrf.mxu0
    %v2796 = vadd.f32 0.0, %v2795
    %v2797 = vpop.f32.mrf.mxu0
    %2798 = vmatprep.mubr.f32.mxu0 0.0
    %2799 = vmatmul.mubr.f32.gmra.mxu0 %v2697
    %v2800 = vpop.f32.mrf.mxu0
    %v2801 = vadd.f32 0.0, %v2800
    %v2802 = vpop.f32.mrf.mxu0
    %2803 = vmatprep.mubr.f32.mxu0 0.0
    %2804 = vmatmul.mubr.f32.gmra.mxu0 %v2700
    %v2805 = vpop.f32.mrf.mxu0
    %v2806 = vadd.f32 0.0, %v2805
    %v2807 = vpop.f32.mrf.mxu0
    %2808 = vmatprep.mubr.f32.mxu0 0.0
    %2809 = vmatmul.mubr.f32.gmra.mxu0 %v2703
    %v2810 = vpop.f32.mrf.mxu0
    %v2811 = vadd.f32 0.0, %v2810
    %v2812 = vpop.f32.mrf.mxu0
    %2813 = vmatprep.mubr.f32.mxu0 0.0
    %2814 = vmatmul.mubr.f32.gmra.mxu0 %v2706
    %v2815 = vpop.f32.mrf.mxu0
    %v2816 = vadd.f32 0.0, %v2815
    %v2817 = vpop.f32.mrf.mxu0
    %2818 = vmatprep.mubr.f32.mxu0 0.0
    %2819 = vmatmul.mubr.f32.gmra.mxu0 %v2709
    %v2820 = vpop.f32.mrf.mxu0
    %v2821 = vadd.f32 0.0, %v2820
    %v2822 = vpop.f32.mrf.mxu0
    %2823 = vmatprep.mubr.f32.mxu0 0.0
    %2824 = vmatmul.mubr.f32.gmra.mxu0 %v2712
    %v2825 = vpop.f32.mrf.mxu0
    %v2826 = vadd.f32 0.0, %v2825
    %v2827 = vpop.f32.mrf.mxu0
    %2828 = vdwg.mxu0
    %v2829 = vadd.f32 %v2491, %v2781
    %v2830 = vadd.f32 %v2496, %v2786
    %v2831 = vadd.f32 %v2501, %v2791
    %v2832 = vadd.f32 %v2506, %v2796
    %v2833 = vadd.f32 %v2511, %v2801
    %v2834 = vadd.f32 %v2516, %v2806
    %v2835 = vadd.f32 %v2521, %v2811
    %v2836 = vadd.f32 %v2526, %v2816
    %v2837 = vadd.f32 %v2531, %v2821
    %v2838 = vadd.f32 %v2536, %v2826
    %v2839 = vmax.f32 %v2654, %v2829
    %v2840 = vmax.f32 %v2655, %v2830
    %v2841 = vmax.f32 %v2656, %v2831
    %v2842 = vmax.f32 %v2657, %v2832
    %v2843 = vmax.f32 %v2658, %v2833
    %v2844 = vmax.f32 %v2659, %v2834
    %v2845 = vmax.f32 %v2660, %v2835
    %v2846 = vmax.f32 %v2661, %v2836
    %v2847 = vmax.f32 %v2662, %v2837
    %v2848 = vmax.f32 %v2663, %v2838
    %v2849 = vadd.f32 %v2839, %v1003
    %v2850 = vadd.f32 %v2840, %v1003
    %v2851 = vadd.f32 %v2841, %v1003
    %v2852 = vadd.f32 %v2842, %v1003
    %v2853 = vadd.f32 %v2843, %v1003
    %v2854 = vadd.f32 %v2844, %v1003
    %v2855 = vadd.f32 %v2845, %v1003
    %v2856 = vadd.f32 %v2846, %v1003
    %v2857 = vadd.f32 %v2847, %v1003
    %v2858 = vadd.f32 %v2848, %v1003
    %v2859 = vmax.f32 %v2849, 0.0
    %v2860 = vmax.f32 %v2850, 0.0
    %v2861 = vmax.f32 %v2851, 0.0
    %v2862 = vmax.f32 %v2852, 0.0
    %v2863 = vmax.f32 %v2853, 0.0
    %v2864 = vmax.f32 %v2854, 0.0
    %v2865 = vmax.f32 %v2855, 0.0
    %v2866 = vmax.f32 %v2856, 0.0
    %v2867 = vmax.f32 %v2857, 0.0
    %v2868 = vmax.f32 %v2858, 0.0
    %2869 = vst.msk [vmem:[#allocation2] sm:$0xff] %vm1025, %v2859
    %2870 = vst.msk [vmem:[#allocation2 + $0x8] sm:$0xff] %vm1025, %v2860
    %2871 = vst.msk [vmem:[#allocation2 + $0x10] sm:$0xff] %vm1025, %v2861
    %2872 = vst.msk [vmem:[#allocation2 + $0x18] sm:$0xff] %vm1025, %v2862
    %2873 = vst.msk [vmem:[#allocation2 + $0x20] sm:$0xff] %vm1025, %v2863
    %2874 = vst.msk [vmem:[#allocation2 + $0x28] sm:$0xff] %vm1025, %v2864
    %2875 = vst.msk [vmem:[#allocation2 + $0x30] sm:$0xff] %vm1025, %v2865
    %2876 = vst.msk [vmem:[#allocation2 + $0x38] sm:$0xff] %vm1025, %v2866
    %2877 = vst.msk [vmem:[#allocation2 + $0x40] sm:$0xff] %vm1025, %v2867
    %2878 = vst.msk [vmem:[#allocation2 + $0x48] sm:$0x3] %vm1035, %v2868
    %v2879 = vld [vmem:[#allocation2] ss:$2 sm:$0xff]
    %v2880 = vld [vmem:[%s1038] ss:$2 sm:$0xff]
    %v2881 = vld [vmem:[%s1040] ss:$2 sm:$0xff]
    %v2882 = vld [vmem:[%s1042] ss:$2 sm:$0xff]
    %v2883 = vld [vmem:[%s1044] ss:$2 sm:$0xf]
    %v2884 = vld [vmem:[%s1046] ss:$2 sm:$0xff]
    %v2885 = vld [vmem:[%s1048] ss:$2 sm:$0xff]
    %v2886 = vld [vmem:[%s1050] ss:$2 sm:$0xff]
    %v2887 = vld [vmem:[%s1052] ss:$2 sm:$0xff]
    %v2888 = vld [vmem:[%s1054] ss:$2 sm:$0xf]
    %v2890 = vsel %vm1025, %v2884, 0
    %v2893 = vsel %vm1025, %v2885, 0
    %v2896 = vsel %vm1025, %v2886, 0
    %v2899 = vsel %vm1025, %v2887, 0
    %v2902 = vsel %vm1025, %v2888, 0
    %2904 = vmatprep.subr.mxu0 0.0
    %2905 = vmatpush1.msra.mxu0 0.0
    %2906 = vmatprep.subr.mxu0 0.0
    %2907 = vmatpush1.msra.mxu0 0.0
    %2908 = vmatprep.subr.mxu0 0.0
    %2909 = vmatpush1.msra.mxu0 0.0
    %2910 = vmatprep.subr.mxu0 0.0
    %2911 = vmatpush1.msra.mxu0 0.0
    %2912 = vmatprep.subr.mxu0 0.0
    %2913 = vmatpush1.msra.mxu0 0.0
    %2914 = vmatprep.subr.mxu0 0.0
    %2915 = vmatpush1.msra.mxu0 0.0
    %2916 = vmatprep.subr.mxu0 0.0
    %2917 = vmatpush1.msra.mxu0 0.0
    %2918 = vmatprep.subr.mxu0 0.0
    %2919 = vmatpush1.msra.mxu0 0.0
    %2920 = vmatprep.subr.mxu0 0.0
    %2921 = vmatpush1.msra.mxu0 0.0
    %2922 = vmatprep.subr.mxu0 0.0
    %2923 = vmatpush1.msra.mxu0 0.0
    %2924 = vmatprep.subr.mxu0 0.0
    %2925 = vmatpush1.msra.mxu0 0.0
    %2926 = vmatprep.subr.mxu0 0.0
    %2927 = vmatpush1.msra.mxu0 0.0
    %2928 = vmatprep.subr.mxu0 0.0
    %2929 = vmatpush1.msra.mxu0 %v61
    %2930 = vmatprep.subr.mxu0 0.0
    %2931 = vmatpush1.msra.mxu0 %v60
    %2932 = vmatprep.subr.mxu0 0.0
    %2933 = vmatpush1.msra.mxu0 %v59
    %2934 = vmatprep.subr.mxu0 0.0
    %2935 = vmatpush1.msra.mxu0 %v58
    %2936 = vmatprep.subr.mxu0 0.0
    %2937 = vmatpush2.msra.mxu0 0.0
    %2938 = vmatprep.subr.mxu0 0.0
    %2939 = vmatpush2.msra.mxu0 0.0
    %2940 = vmatprep.subr.mxu0 0.0
    %2941 = vmatpush2.msra.mxu0 0.0
    %2942 = vmatprep.subr.mxu0 0.0
    %2943 = vmatpush2.msra.mxu0 0.0
    %2944 = vmatprep.subr.mxu0 0.0
    %2945 = vmatpush2.msra.mxu0 0.0
    %2946 = vmatprep.subr.mxu0 0.0
    %2947 = vmatpush2.msra.mxu0 0.0
    %2948 = vmatprep.subr.mxu0 0.0
    %2949 = vmatpush2.msra.mxu0 0.0
    %2950 = vmatprep.subr.mxu0 0.0
    %2951 = vmatpush2.msra.mxu0 0.0
    %2952 = vmatprep.subr.mxu0 0.0
    %2953 = vmatpush2.msra.mxu0 0.0
    %2954 = vmatprep.subr.mxu0 0.0
    %2955 = vmatpush2.msra.mxu0 0.0
    %2956 = vmatprep.subr.mxu0 0.0
    %2957 = vmatpush2.msra.mxu0 0.0
    %2958 = vmatprep.subr.mxu0 0.0
    %2959 = vmatpush2.msra.mxu0 0.0
    %2960 = vmatprep.subr.mxu0 0.0
    %2961 = vmatpush2.msra.mxu0 0.0
    %2962 = vmatprep.subr.mxu0 0.0
    %2963 = vmatpush2.msra.mxu0 0.0
    %2964 = vmatprep.subr.mxu0 0.0
    %2965 = vmatpush2.msra.mxu0 0.0
    %2966 = vmatprep.subr.mxu0 0.0
    %2967 = vmatpush2.msra.mxu0 0.0
    %2968 = vmatprep.mubr.f32.mxu0 0.0
    %2969 = vmatmul.mubr.f32.gmra.mxu0 %v2890
    %v2970 = vpop.f32.mrf.mxu0
    %v2971 = vadd.f32 0.0, %v2970
    %v2972 = vpop.f32.mrf.mxu0
    %2973 = vmatprep.mubr.f32.mxu0 0.0
    %2974 = vmatmul.mubr.f32.gmra.mxu0 %v2893
    %v2975 = vpop.f32.mrf.mxu0
    %v2976 = vadd.f32 0.0, %v2975
    %v2977 = vpop.f32.mrf.mxu0
    %2978 = vmatprep.mubr.f32.mxu0 0.0
    %2979 = vmatmul.mubr.f32.gmra.mxu0 %v2896
    %v2980 = vpop.f32.mrf.mxu0
    %v2981 = vadd.f32 0.0, %v2980
    %v2982 = vpop.f32.mrf.mxu0
    %2983 = vmatprep.mubr.f32.mxu0 0.0
    %2984 = vmatmul.mubr.f32.gmra.mxu0 %v2899
    %v2985 = vpop.f32.mrf.mxu0
    %v2986 = vadd.f32 0.0, %v2985
    %v2987 = vpop.f32.mrf.mxu0
    %2988 = vmatprep.mubr.f32.mxu0 0.0
    %2989 = vmatmul.mubr.f32.gmra.mxu0 %v2902
    %v2990 = vpop.f32.mrf.mxu0
    %v2991 = vadd.f32 0.0, %v2990
    %v2992 = vpop.f32.mrf.mxu0
    %2993 = vdwg.mxu0
    %v2995 = vsel %vm1025, %v2879, 0
    %v2998 = vsel %vm1025, %v2880, 0
    %v3001 = vsel %vm1025, %v2881, 0
    %v3004 = vsel %vm1025, %v2882, 0
    %v3007 = vsel %vm1025, %v2883, 0
    %3009 = vmatprep.subr.mxu0 0.0
    %3010 = vmatpush1.msra.mxu0 0.0
    %3011 = vmatprep.subr.mxu0 0.0
    %3012 = vmatpush1.msra.mxu0 0.0
    %3013 = vmatprep.subr.mxu0 0.0
    %3014 = vmatpush1.msra.mxu0 0.0
    %3015 = vmatprep.subr.mxu0 0.0
    %3016 = vmatpush1.msra.mxu0 0.0
    %3017 = vmatprep.subr.mxu0 0.0
    %3018 = vmatpush1.msra.mxu0 0.0
    %3019 = vmatprep.subr.mxu0 0.0
    %3020 = vmatpush1.msra.mxu0 0.0
    %3021 = vmatprep.subr.mxu0 0.0
    %3022 = vmatpush1.msra.mxu0 0.0
    %3023 = vmatprep.subr.mxu0 0.0
    %3024 = vmatpush1.msra.mxu0 0.0
    %3025 = vmatprep.subr.mxu0 0.0
    %3026 = vmatpush1.msra.mxu0 0.0
    %3027 = vmatprep.subr.mxu0 0.0
    %3028 = vmatpush1.msra.mxu0 0.0
    %3029 = vmatprep.subr.mxu0 0.0
    %3030 = vmatpush1.msra.mxu0 0.0
    %3031 = vmatprep.subr.mxu0 0.0
    %3032 = vmatpush1.msra.mxu0 0.0
    %3033 = vmatprep.subr.mxu0 0.0
    %3034 = vmatpush1.msra.mxu0 %v56
    %3035 = vmatprep.subr.mxu0 0.0
    %3036 = vmatpush1.msra.mxu0 %v55
    %3037 = vmatprep.subr.mxu0 0.0
    %3038 = vmatpush1.msra.mxu0 %v54
    %3039 = vmatprep.subr.mxu0 0.0
    %3040 = vmatpush1.msra.mxu0 %v53
    %3041 = vmatprep.subr.mxu0 0.0
    %3042 = vmatpush2.msra.mxu0 0.0
    %3043 = vmatprep.subr.mxu0 0.0
    %3044 = vmatpush2.msra.mxu0 0.0
    %3045 = vmatprep.subr.mxu0 0.0
    %3046 = vmatpush2.msra.mxu0 0.0
    %3047 = vmatprep.subr.mxu0 0.0
    %3048 = vmatpush2.msra.mxu0 0.0
    %3049 = vmatprep.subr.mxu0 0.0
    %3050 = vmatpush2.msra.mxu0 0.0
    %3051 = vmatprep.subr.mxu0 0.0
    %3052 = vmatpush2.msra.mxu0 0.0
    %3053 = vmatprep.subr.mxu0 0.0
    %3054 = vmatpush2.msra.mxu0 0.0
    %3055 = vmatprep.subr.mxu0 0.0
    %3056 = vmatpush2.msra.mxu0 0.0
    %3057 = vmatprep.subr.mxu0 0.0
    %3058 = vmatpush2.msra.mxu0 0.0
    %3059 = vmatprep.subr.mxu0 0.0
    %3060 = vmatpush2.msra.mxu0 0.0
    %3061 = vmatprep.subr.mxu0 0.0
    %3062 = vmatpush2.msra.mxu0 0.0
    %3063 = vmatprep.subr.mxu0 0.0
    %3064 = vmatpush2.msra.mxu0 0.0
    %3065 = vmatprep.subr.mxu0 0.0
    %3066 = vmatpush2.msra.mxu0 0.0
    %3067 = vmatprep.subr.mxu0 0.0
    %3068 = vmatpush2.msra.mxu0 0.0
    %3069 = vmatprep.subr.mxu0 0.0
    %3070 = vmatpush2.msra.mxu0 0.0
    %3071 = vmatprep.subr.mxu0 0.0
    %3072 = vmatpush2.msra.mxu0 0.0
    %3073 = vmatprep.mubr.f32.mxu0 0.0
    %3074 = vmatmul.mubr.f32.gmra.mxu0 %v2995
    %v3075 = vpop.f32.mrf.mxu0
    %v3076 = vadd.f32 %v2971, %v3075
    %v3077 = vpop.f32.mrf.mxu0
    %3078 = vmatprep.mubr.f32.mxu0 0.0
    %3079 = vmatmul.mubr.f32.gmra.mxu0 %v2998
    %v3080 = vpop.f32.mrf.mxu0
    %v3081 = vadd.f32 %v2976, %v3080
    %v3082 = vpop.f32.mrf.mxu0
    %3083 = vmatprep.mubr.f32.mxu0 0.0
    %3084 = vmatmul.mubr.f32.gmra.mxu0 %v3001
    %v3085 = vpop.f32.mrf.mxu0
    %v3086 = vadd.f32 %v2981, %v3085
    %v3087 = vpop.f32.mrf.mxu0
    %3088 = vmatprep.mubr.f32.mxu0 0.0
    %3089 = vmatmul.mubr.f32.gmra.mxu0 %v3004
    %v3090 = vpop.f32.mrf.mxu0
    %v3091 = vadd.f32 %v2986, %v3090
    %v3092 = vpop.f32.mrf.mxu0
    %3093 = vmatprep.mubr.f32.mxu0 0.0
    %3094 = vmatmul.mubr.f32.gmra.mxu0 %v3007
    %v3095 = vpop.f32.mrf.mxu0
    %v3096 = vadd.f32 %v2991, %v3095
    %v3097 = vpop.f32.mrf.mxu0
    %3098 = vdwg.mxu0
    %v3099 = vld [vmem:[%s1266] ss:$2 sm:$0xff]
    %v3100 = vld [vmem:[%s1268] ss:$2 sm:$0xff]
    %v3101 = vld [vmem:[%s1270] ss:$2 sm:$0xff]
    %v3102 = vld [vmem:[%s1272] ss:$2 sm:$0xff]
    %v3103 = vld [vmem:[%s1274] ss:$2 sm:$0xf]
    %v3105 = vsel %vm1025, %v3099, 0
    %v3108 = vsel %vm1025, %v3100, 0
    %v3111 = vsel %vm1025, %v3101, 0
    %v3114 = vsel %vm1025, %v3102, 0
    %v3117 = vsel %vm1025, %v3103, 0
    %3119 = vmatprep.subr.mxu0 0.0
    %3120 = vmatpush1.msra.mxu0 0.0
    %3121 = vmatprep.subr.mxu0 0.0
    %3122 = vmatpush1.msra.mxu0 0.0
    %3123 = vmatprep.subr.mxu0 0.0
    %3124 = vmatpush1.msra.mxu0 0.0
    %3125 = vmatprep.subr.mxu0 0.0
    %3126 = vmatpush1.msra.mxu0 0.0
    %3127 = vmatprep.subr.mxu0 0.0
    %3128 = vmatpush1.msra.mxu0 0.0
    %3129 = vmatprep.subr.mxu0 0.0
    %3130 = vmatpush1.msra.mxu0 0.0
    %3131 = vmatprep.subr.mxu0 0.0
    %3132 = vmatpush1.msra.mxu0 0.0
    %3133 = vmatprep.subr.mxu0 0.0
    %3134 = vmatpush1.msra.mxu0 0.0
    %3135 = vmatprep.subr.mxu0 0.0
    %3136 = vmatpush1.msra.mxu0 0.0
    %3137 = vmatprep.subr.mxu0 0.0
    %3138 = vmatpush1.msra.mxu0 0.0
    %3139 = vmatprep.subr.mxu0 0.0
    %3140 = vmatpush1.msra.mxu0 0.0
    %3141 = vmatprep.subr.mxu0 0.0
    %3142 = vmatpush1.msra.mxu0 0.0
    %3143 = vmatprep.subr.mxu0 0.0
    %3144 = vmatpush1.msra.mxu0 %v61
    %3145 = vmatprep.subr.mxu0 0.0
    %3146 = vmatpush1.msra.mxu0 %v60
    %3147 = vmatprep.subr.mxu0 0.0
    %3148 = vmatpush1.msra.mxu0 %v59
    %3149 = vmatprep.subr.mxu0 0.0
    %3150 = vmatpush1.msra.mxu0 %v58
    %3151 = vmatprep.subr.mxu0 0.0
    %3152 = vmatpush2.msra.mxu0 0.0
    %3153 = vmatprep.subr.mxu0 0.0
    %3154 = vmatpush2.msra.mxu0 0.0
    %3155 = vmatprep.subr.mxu0 0.0
    %3156 = vmatpush2.msra.mxu0 0.0
    %3157 = vmatprep.subr.mxu0 0.0
    %3158 = vmatpush2.msra.mxu0 0.0
    %3159 = vmatprep.subr.mxu0 0.0
    %3160 = vmatpush2.msra.mxu0 0.0
    %3161 = vmatprep.subr.mxu0 0.0
    %3162 = vmatpush2.msra.mxu0 0.0
    %3163 = vmatprep.subr.mxu0 0.0
    %3164 = vmatpush2.msra.mxu0 0.0
    %3165 = vmatprep.subr.mxu0 0.0
    %3166 = vmatpush2.msra.mxu0 0.0
    %3167 = vmatprep.subr.mxu0 0.0
    %3168 = vmatpush2.msra.mxu0 0.0
    %3169 = vmatprep.subr.mxu0 0.0
    %3170 = vmatpush2.msra.mxu0 0.0
    %3171 = vmatprep.subr.mxu0 0.0
    %3172 = vmatpush2.msra.mxu0 0.0
    %3173 = vmatprep.subr.mxu0 0.0
    %3174 = vmatpush2.msra.mxu0 0.0
    %3175 = vmatprep.subr.mxu0 0.0
    %3176 = vmatpush2.msra.mxu0 0.0
    %3177 = vmatprep.subr.mxu0 0.0
    %3178 = vmatpush2.msra.mxu0 0.0
    %3179 = vmatprep.subr.mxu0 0.0
    %3180 = vmatpush2.msra.mxu0 0.0
    %3181 = vmatprep.subr.mxu0 0.0
    %3182 = vmatpush2.msra.mxu0 0.0
    %3183 = vmatprep.mubr.f32.mxu0 0.0
    %3184 = vmatmul.mubr.f32.gmra.mxu0 %v3105
    %v3185 = vpop.f32.mrf.mxu0
    %v3186 = vadd.f32 0.0, %v3185
    %v3187 = vpop.f32.mrf.mxu0
    %3188 = vmatprep.mubr.f32.mxu0 0.0
    %3189 = vmatmul.mubr.f32.gmra.mxu0 %v3108
    %v3190 = vpop.f32.mrf.mxu0
    %v3191 = vadd.f32 0.0, %v3190
    %v3192 = vpop.f32.mrf.mxu0
    %3193 = vmatprep.mubr.f32.mxu0 0.0
    %3194 = vmatmul.mubr.f32.gmra.mxu0 %v3111
    %v3195 = vpop.f32.mrf.mxu0
    %v3196 = vadd.f32 0.0, %v3195
    %v3197 = vpop.f32.mrf.mxu0
    %3198 = vmatprep.mubr.f32.mxu0 0.0
    %3199 = vmatmul.mubr.f32.gmra.mxu0 %v3114
    %v3200 = vpop.f32.mrf.mxu0
    %v3201 = vadd.f32 0.0, %v3200
    %v3202 = vpop.f32.mrf.mxu0
    %3203 = vmatprep.mubr.f32.mxu0 0.0
    %3204 = vmatmul.mubr.f32.gmra.mxu0 %v3117
    %v3205 = vpop.f32.mrf.mxu0
    %v3206 = vadd.f32 0.0, %v3205
    %v3207 = vpop.f32.mrf.mxu0
    %3208 = vdwg.mxu0
    %3209 = vmatprep.subr.mxu0 0.0
    %3210 = vmatpush1.msra.mxu0 0.0
    %3211 = vmatprep.subr.mxu0 0.0
    %3212 = vmatpush1.msra.mxu0 0.0
    %3213 = vmatprep.subr.mxu0 0.0
    %3214 = vmatpush1.msra.mxu0 0.0
    %3215 = vmatprep.subr.mxu0 0.0
    %3216 = vmatpush1.msra.mxu0 0.0
    %3217 = vmatprep.subr.mxu0 0.0
    %3218 = vmatpush1.msra.mxu0 0.0
    %3219 = vmatprep.subr.mxu0 0.0
    %3220 = vmatpush1.msra.mxu0 0.0
    %3221 = vmatprep.subr.mxu0 0.0
    %3222 = vmatpush1.msra.mxu0 0.0
    %3223 = vmatprep.subr.mxu0 0.0
    %3224 = vmatpush1.msra.mxu0 0.0
    %3225 = vmatprep.subr.mxu0 0.0
    %3226 = vmatpush1.msra.mxu0 0.0
    %3227 = vmatprep.subr.mxu0 0.0
    %3228 = vmatpush1.msra.mxu0 0.0
    %3229 = vmatprep.subr.mxu0 0.0
    %3230 = vmatpush1.msra.mxu0 0.0
    %3231 = vmatprep.subr.mxu0 0.0
    %3232 = vmatpush1.msra.mxu0 0.0
    %3233 = vmatprep.subr.mxu0 0.0
    %3234 = vmatpush1.msra.mxu0 %v56
    %3235 = vmatprep.subr.mxu0 0.0
    %3236 = vmatpush1.msra.mxu0 %v55
    %3237 = vmatprep.subr.mxu0 0.0
    %3238 = vmatpush1.msra.mxu0 %v54
    %3239 = vmatprep.subr.mxu0 0.0
    %3240 = vmatpush1.msra.mxu0 %v53
    %3241 = vmatprep.subr.mxu0 0.0
    %3242 = vmatpush2.msra.mxu0 0.0
    %3243 = vmatprep.subr.mxu0 0.0
    %3244 = vmatpush2.msra.mxu0 0.0
    %3245 = vmatprep.subr.mxu0 0.0
    %3246 = vmatpush2.msra.mxu0 0.0
    %3247 = vmatprep.subr.mxu0 0.0
    %3248 = vmatpush2.msra.mxu0 0.0
    %3249 = vmatprep.subr.mxu0 0.0
    %3250 = vmatpush2.msra.mxu0 0.0
    %3251 = vmatprep.subr.mxu0 0.0
    %3252 = vmatpush2.msra.mxu0 0.0
    %3253 = vmatprep.subr.mxu0 0.0
    %3254 = vmatpush2.msra.mxu0 0.0
    %3255 = vmatprep.subr.mxu0 0.0
    %3256 = vmatpush2.msra.mxu0 0.0
    %3257 = vmatprep.subr.mxu0 0.0
    %3258 = vmatpush2.msra.mxu0 0.0
    %3259 = vmatprep.subr.mxu0 0.0
    %3260 = vmatpush2.msra.mxu0 0.0
    %3261 = vmatprep.subr.mxu0 0.0
    %3262 = vmatpush2.msra.mxu0 0.0
    %3263 = vmatprep.subr.mxu0 0.0
    %3264 = vmatpush2.msra.mxu0 0.0
    %3265 = vmatprep.subr.mxu0 0.0
    %3266 = vmatpush2.msra.mxu0 0.0
    %3267 = vmatprep.subr.mxu0 0.0
    %3268 = vmatpush2.msra.mxu0 0.0
    %3269 = vmatprep.subr.mxu0 0.0
    %3270 = vmatpush2.msra.mxu0 0.0
    %3271 = vmatprep.subr.mxu0 0.0
    %3272 = vmatpush2.msra.mxu0 0.0
    %3273 = vmatprep.mubr.f32.mxu0 0.0
    %3274 = vmatmul.mubr.f32.gmra.mxu0 %v2890
    %v3275 = vpop.f32.mrf.mxu0
    %v3276 = vadd.f32 %v3186, %v3275
    %v3277 = vpop.f32.mrf.mxu0
    %3278 = vmatprep.mubr.f32.mxu0 0.0
    %3279 = vmatmul.mubr.f32.gmra.mxu0 %v2893
    %v3280 = vpop.f32.mrf.mxu0
    %v3281 = vadd.f32 %v3191, %v3280
    %v3282 = vpop.f32.mrf.mxu0
    %3283 = vmatprep.mubr.f32.mxu0 0.0
    %3284 = vmatmul.mubr.f32.gmra.mxu0 %v2896
    %v3285 = vpop.f32.mrf.mxu0
    %v3286 = vadd.f32 %v3196, %v3285
    %v3287 = vpop.f32.mrf.mxu0
    %3288 = vmatprep.mubr.f32.mxu0 0.0
    %3289 = vmatmul.mubr.f32.gmra.mxu0 %v2899
    %v3290 = vpop.f32.mrf.mxu0
    %v3291 = vadd.f32 %v3201, %v3290
    %v3292 = vpop.f32.mrf.mxu0
    %3293 = vmatprep.mubr.f32.mxu0 0.0
    %3294 = vmatmul.mubr.f32.gmra.mxu0 %v2902
    %v3295 = vpop.f32.mrf.mxu0
    %v3296 = vadd.f32 %v3206, %v3295
    %v3297 = vpop.f32.mrf.mxu0
    %3298 = vdwg.mxu0
    %3299 = vmatprep.subr.mxu0 0.0
    %3300 = vmatpush1.msra.mxu0 0.0
    %3301 = vmatprep.subr.mxu0 0.0
    %3302 = vmatpush1.msra.mxu0 0.0
    %3303 = vmatprep.subr.mxu0 0.0
    %3304 = vmatpush1.msra.mxu0 0.0
    %3305 = vmatprep.subr.mxu0 0.0
    %3306 = vmatpush1.msra.mxu0 0.0
    %3307 = vmatprep.subr.mxu0 0.0
    %3308 = vmatpush1.msra.mxu0 0.0
    %3309 = vmatprep.subr.mxu0 0.0
    %3310 = vmatpush1.msra.mxu0 0.0
    %3311 = vmatprep.subr.mxu0 0.0
    %3312 = vmatpush1.msra.mxu0 0.0
    %3313 = vmatprep.subr.mxu0 0.0
    %3314 = vmatpush1.msra.mxu0 0.0
    %3315 = vmatprep.subr.mxu0 0.0
    %3316 = vmatpush1.msra.mxu0 0.0
    %3317 = vmatprep.subr.mxu0 0.0
    %3318 = vmatpush1.msra.mxu0 0.0
    %3319 = vmatprep.subr.mxu0 0.0
    %3320 = vmatpush1.msra.mxu0 0.0
    %3321 = vmatprep.subr.mxu0 0.0
    %3322 = vmatpush1.msra.mxu0 0.0
    %3323 = vmatprep.subr.mxu0 0.0
    %3324 = vmatpush1.msra.mxu0 %v66
    %3325 = vmatprep.subr.mxu0 0.0
    %3326 = vmatpush1.msra.mxu0 %v65
    %3327 = vmatprep.subr.mxu0 0.0
    %3328 = vmatpush1.msra.mxu0 %v64
    %3329 = vmatprep.subr.mxu0 0.0
    %3330 = vmatpush1.msra.mxu0 %v63
    %3331 = vmatprep.subr.mxu0 0.0
    %3332 = vmatpush2.msra.mxu0 0.0
    %3333 = vmatprep.subr.mxu0 0.0
    %3334 = vmatpush2.msra.mxu0 0.0
    %3335 = vmatprep.subr.mxu0 0.0
    %3336 = vmatpush2.msra.mxu0 0.0
    %3337 = vmatprep.subr.mxu0 0.0
    %3338 = vmatpush2.msra.mxu0 0.0
    %3339 = vmatprep.subr.mxu0 0.0
    %3340 = vmatpush2.msra.mxu0 0.0
    %3341 = vmatprep.subr.mxu0 0.0
    %3342 = vmatpush2.msra.mxu0 0.0
    %3343 = vmatprep.subr.mxu0 0.0
    %3344 = vmatpush2.msra.mxu0 0.0
    %3345 = vmatprep.subr.mxu0 0.0
    %3346 = vmatpush2.msra.mxu0 0.0
    %3347 = vmatprep.subr.mxu0 0.0
    %3348 = vmatpush2.msra.mxu0 0.0
    %3349 = vmatprep.subr.mxu0 0.0
    %3350 = vmatpush2.msra.mxu0 0.0
    %3351 = vmatprep.subr.mxu0 0.0
    %3352 = vmatpush2.msra.mxu0 0.0
    %3353 = vmatprep.subr.mxu0 0.0
    %3354 = vmatpush2.msra.mxu0 0.0
    %3355 = vmatprep.subr.mxu0 0.0
    %3356 = vmatpush2.msra.mxu0 0.0
    %3357 = vmatprep.subr.mxu0 0.0
    %3358 = vmatpush2.msra.mxu0 0.0
    %3359 = vmatprep.subr.mxu0 0.0
    %3360 = vmatpush2.msra.mxu0 0.0
    %3361 = vmatprep.subr.mxu0 0.0
    %3362 = vmatpush2.msra.mxu0 0.0
    %3363 = vmatprep.mubr.f32.mxu0 0.0
    %3364 = vmatmul.mubr.f32.gmra.mxu0 %v3105
    %v3365 = vpop.f32.mrf.mxu0
    %v3366 = vadd.f32 0.0, %v3365
    %v3367 = vpop.f32.mrf.mxu0
    %3368 = vmatprep.mubr.f32.mxu0 0.0
    %3369 = vmatmul.mubr.f32.gmra.mxu0 %v3108
    %v3370 = vpop.f32.mrf.mxu0
    %v3371 = vadd.f32 0.0, %v3370
    %v3372 = vpop.f32.mrf.mxu0
    %3373 = vmatprep.mubr.f32.mxu0 0.0
    %3374 = vmatmul.mubr.f32.gmra.mxu0 %v3111
    %v3375 = vpop.f32.mrf.mxu0
    %v3376 = vadd.f32 0.0, %v3375
    %v3377 = vpop.f32.mrf.mxu0
    %3378 = vmatprep.mubr.f32.mxu0 0.0
    %3379 = vmatmul.mubr.f32.gmra.mxu0 %v3114
    %v3380 = vpop.f32.mrf.mxu0
    %v3381 = vadd.f32 0.0, %v3380
    %v3382 = vpop.f32.mrf.mxu0
    %3383 = vmatprep.mubr.f32.mxu0 0.0
    %3384 = vmatmul.mubr.f32.gmra.mxu0 %v3117
    %v3385 = vpop.f32.mrf.mxu0
    %v3386 = vadd.f32 0.0, %v3385
    %v3387 = vpop.f32.mrf.mxu0
    %3388 = vdwg.mxu0
    %v3389 = vadd.f32 %v3076, %v3366
    %v3390 = vadd.f32 %v3081, %v3371
    %v3391 = vadd.f32 %v3086, %v3376
    %v3392 = vadd.f32 %v3091, %v3381
    %v3393 = vadd.f32 %v3096, %v3386
    %v3394 = vld [vmem:[%s1566] ss:$2 sm:$0xff]
    %v3395 = vld [vmem:[%s1568] ss:$2 sm:$0xff]
    %v3396 = vld [vmem:[%s1570] ss:$2 sm:$0xff]
    %v3397 = vld [vmem:[%s1572] ss:$2 sm:$0xff]
    %v3398 = vld [vmem:[%s1574] ss:$2 sm:$0xf]
    %v3400 = vsel %vm1025, %v3394, 0
    %v3403 = vsel %vm1025, %v3395, 0
    %v3406 = vsel %vm1025, %v3396, 0
    %v3409 = vsel %vm1025, %v3397, 0
    %v3412 = vsel %vm1025, %v3398, 0
    %3414 = vmatprep.subr.mxu0 0.0
    %3415 = vmatpush1.msra.mxu0 0.0
    %3416 = vmatprep.subr.mxu0 0.0
    %3417 = vmatpush1.msra.mxu0 0.0
    %3418 = vmatprep.subr.mxu0 0.0
    %3419 = vmatpush1.msra.mxu0 0.0
    %3420 = vmatprep.subr.mxu0 0.0
    %3421 = vmatpush1.msra.mxu0 0.0
    %3422 = vmatprep.subr.mxu0 0.0
    %3423 = vmatpush1.msra.mxu0 0.0
    %3424 = vmatprep.subr.mxu0 0.0
    %3425 = vmatpush1.msra.mxu0 0.0
    %3426 = vmatprep.subr.mxu0 0.0
    %3427 = vmatpush1.msra.mxu0 0.0
    %3428 = vmatprep.subr.mxu0 0.0
    %3429 = vmatpush1.msra.mxu0 0.0
    %3430 = vmatprep.subr.mxu0 0.0
    %3431 = vmatpush1.msra.mxu0 0.0
    %3432 = vmatprep.subr.mxu0 0.0
    %3433 = vmatpush1.msra.mxu0 0.0
    %3434 = vmatprep.subr.mxu0 0.0
    %3435 = vmatpush1.msra.mxu0 0.0
    %3436 = vmatprep.subr.mxu0 0.0
    %3437 = vmatpush1.msra.mxu0 0.0
    %3438 = vmatprep.subr.mxu0 0.0
    %3439 = vmatpush1.msra.mxu0 %v66
    %3440 = vmatprep.subr.mxu0 0.0
    %3441 = vmatpush1.msra.mxu0 %v65
    %3442 = vmatprep.subr.mxu0 0.0
    %3443 = vmatpush1.msra.mxu0 %v64
    %3444 = vmatprep.subr.mxu0 0.0
    %3445 = vmatpush1.msra.mxu0 %v63
    %3446 = vmatprep.subr.mxu0 0.0
    %3447 = vmatpush2.msra.mxu0 0.0
    %3448 = vmatprep.subr.mxu0 0.0
    %3449 = vmatpush2.msra.mxu0 0.0
    %3450 = vmatprep.subr.mxu0 0.0
    %3451 = vmatpush2.msra.mxu0 0.0
    %3452 = vmatprep.subr.mxu0 0.0
    %3453 = vmatpush2.msra.mxu0 0.0
    %3454 = vmatprep.subr.mxu0 0.0
    %3455 = vmatpush2.msra.mxu0 0.0
    %3456 = vmatprep.subr.mxu0 0.0
    %3457 = vmatpush2.msra.mxu0 0.0
    %3458 = vmatprep.subr.mxu0 0.0
    %3459 = vmatpush2.msra.mxu0 0.0
    %3460 = vmatprep.subr.mxu0 0.0
    %3461 = vmatpush2.msra.mxu0 0.0
    %3462 = vmatprep.subr.mxu0 0.0
    %3463 = vmatpush2.msra.mxu0 0.0
    %3464 = vmatprep.subr.mxu0 0.0
    %3465 = vmatpush2.msra.mxu0 0.0
    %3466 = vmatprep.subr.mxu0 0.0
    %3467 = vmatpush2.msra.mxu0 0.0
    %3468 = vmatprep.subr.mxu0 0.0
    %3469 = vmatpush2.msra.mxu0 0.0
    %3470 = vmatprep.subr.mxu0 0.0
    %3471 = vmatpush2.msra.mxu0 0.0
    %3472 = vmatprep.subr.mxu0 0.0
    %3473 = vmatpush2.msra.mxu0 0.0
    %3474 = vmatprep.subr.mxu0 0.0
    %3475 = vmatpush2.msra.mxu0 0.0
    %3476 = vmatprep.subr.mxu0 0.0
    %3477 = vmatpush2.msra.mxu0 0.0
    %3478 = vmatprep.mubr.f32.mxu0 0.0
    %3479 = vmatmul.mubr.f32.gmra.mxu0 %v3400
    %v3480 = vpop.f32.mrf.mxu0
    %v3481 = vadd.f32 0.0, %v3480
    %v3482 = vpop.f32.mrf.mxu0
    %3483 = vmatprep.mubr.f32.mxu0 0.0
    %3484 = vmatmul.mubr.f32.gmra.mxu0 %v3403
    %v3485 = vpop.f32.mrf.mxu0
    %v3486 = vadd.f32 0.0, %v3485
    %v3487 = vpop.f32.mrf.mxu0
    %3488 = vmatprep.mubr.f32.mxu0 0.0
    %3489 = vmatmul.mubr.f32.gmra.mxu0 %v3406
    %v3490 = vpop.f32.mrf.mxu0
    %v3491 = vadd.f32 0.0, %v3490
    %v3492 = vpop.f32.mrf.mxu0
    %3493 = vmatprep.mubr.f32.mxu0 0.0
    %3494 = vmatmul.mubr.f32.gmra.mxu0 %v3409
    %v3495 = vpop.f32.mrf.mxu0
    %v3496 = vadd.f32 0.0, %v3495
    %v3497 = vpop.f32.mrf.mxu0
    %3498 = vmatprep.mubr.f32.mxu0 0.0
    %3499 = vmatmul.mubr.f32.gmra.mxu0 %v3412
    %v3500 = vpop.f32.mrf.mxu0
    %v3501 = vadd.f32 0.0, %v3500
    %v3502 = vpop.f32.mrf.mxu0
    %3503 = vdwg.mxu0
    %v3504 = vadd.f32 %v3276, %v3481
    %v3505 = vadd.f32 %v3281, %v3486
    %v3506 = vadd.f32 %v3286, %v3491
    %v3507 = vadd.f32 %v3291, %v3496
    %v3508 = vadd.f32 %v3296, %v3501
    %v3509 = vmax.f32 %v3389, %v3504
    %v3510 = vmax.f32 %v3390, %v3505
    %v3511 = vmax.f32 %v3391, %v3506
    %v3512 = vmax.f32 %v3392, %v3507
    %v3513 = vmax.f32 %v3393, %v3508
    %v3514 = vadd.f32 %v3509, %v1695
    %v3515 = vadd.f32 %v3510, %v1695
    %v3516 = vadd.f32 %v3511, %v1695
    %v3517 = vadd.f32 %v3512, %v1695
    %v3518 = vadd.f32 %v3513, %v1695
    %v3519 = vmax.f32 %v3514, 0.0
    %v3520 = vmax.f32 %v3515, 0.0
    %v3521 = vmax.f32 %v3516, 0.0
    %v3522 = vmax.f32 %v3517, 0.0
    %v3523 = vmax.f32 %v3518, 0.0
    %3524 = vst.msk [vmem:[#allocation3 + $0x1] sm:$0x1] %vm1707, %v3519
    %v3527 = vunpack.c.l.s4 1983009808
    %v3528 = vunpack.c.0.s8 %v3527
    %v3529 = vlaneseq
    %v3530 = vshrl.u32 %v3529, 7
    %v3531 = vsub.s32 %v3528, %v3530
    %v3532 = vrot.slane %v3519, %v3531
    %v3533 = vrot.slane %v3532, 7
    %v3534 = vrot.slane %v3533, 2
    %3535 = vrot.lane.b32.xlu0 %v3534, 64
    %v3536 = vpop.permute.xlu0 %3535
    %3538 = vst.msk [vmem:[#allocation3 + $0x1] sm:$0x1] %vm1722, %v3536
    %v3539 = vcombine.high %v3532, %v3532
    %3541 = vst.msk [vmem:[#allocation3 + $0x3] sm:$0x1] %vm1707, %v3539
    %v3542 = vrot.slane %v3539, 7
    %v3543 = vrot.slane %v3542, 2
    %3544 = vrot.lane.b32.xlu0 %v3543, 64
    %v3545 = vpop.permute.xlu0 %3544
    %3547 = vst.msk [vmem:[#allocation3 + $0x3] sm:$0x1] %vm1722, %v3545
    %v3548 = vcombine.high %v3519, %v3519
    %v3550 = vunpack.c.l.s4 1983009808
    %v3551 = vunpack.c.0.s8 %v3550
    %v3552 = vlaneseq
    %v3553 = vshrl.u32 %v3552, 7
    %v3554 = vsub.s32 %v3551, %v3553
    %v3555 = vrot.slane %v3548, %v3554
    %3557 = vst.msk [vmem:[#allocation3 + $0x5] sm:$0x1] %vm1707, %v3555
    %v3558 = vrot.slane %v3555, 7
    %v3559 = vrot.slane %v3558, 2
    %3560 = vrot.lane.b32.xlu0 %v3559, 64
    %v3561 = vpop.permute.xlu0 %3560
    %3563 = vst.msk [vmem:[#allocation3 + $0x5] sm:$0x1] %vm1722, %v3561
    %v3564 = vcombine.high %v3555, %v3555
    %3566 = vst.msk [vmem:[#allocation3 + $0x7] sm:$0x1] %vm1707, %v3564
    %v3567 = vrot.slane %v3564, 7
    %v3568 = vrot.slane %v3567, 2
    %3569 = vrot.lane.b32.xlu0 %v3568, 64
    %v3570 = vpop.permute.xlu0 %3569
    %3572 = vst.msk [vmem:[#allocation3 + $0x7] sm:$0x1] %vm1722, %v3570
    %3573 = vst.msk [vmem:[#allocation3 + $0x9] sm:$0x1] %vm1707, %v3520
    %v3576 = vunpack.c.l.s4 1983009808
    %v3577 = vunpack.c.0.s8 %v3576
    %v3578 = vlaneseq
    %v3579 = vshrl.u32 %v3578, 7
    %v3580 = vsub.s32 %v3577, %v3579
    %v3581 = vrot.slane %v3520, %v3580
    %v3582 = vrot.slane %v3581, 7
    %v3583 = vrot.slane %v3582, 2
    %3584 = vrot.lane.b32.xlu0 %v3583, 64
    %v3585 = vpop.permute.xlu0 %3584
    %3587 = vst.msk [vmem:[#allocation3 + $0x9] sm:$0x1] %vm1722, %v3585
    %v3588 = vcombine.high %v3581, %v3581
    %3590 = vst.msk [vmem:[#allocation3 + $0xb] sm:$0x1] %vm1707, %v3588
    %v3591 = vrot.slane %v3588, 7
    %v3592 = vrot.slane %v3591, 2
    %3593 = vrot.lane.b32.xlu0 %v3592, 64
    %v3594 = vpop.permute.xlu0 %3593
    %3596 = vst.msk [vmem:[#allocation3 + $0xb] sm:$0x1] %vm1722, %v3594
    %v3597 = vcombine.high %v3520, %v3520
    %v3599 = vunpack.c.l.s4 1983009808
    %v3600 = vunpack.c.0.s8 %v3599
    %v3601 = vlaneseq
    %v3602 = vshrl.u32 %v3601, 7
    %v3603 = vsub.s32 %v3600, %v3602
    %v3604 = vrot.slane %v3597, %v3603
    %3606 = vst.msk [vmem:[#allocation3 + $0xd] sm:$0x1] %vm1707, %v3604
    %v3607 = vrot.slane %v3604, 7
    %v3608 = vrot.slane %v3607, 2
    %3609 = vrot.lane.b32.xlu0 %v3608, 64
    %v3610 = vpop.permute.xlu0 %3609
    %3612 = vst.msk [vmem:[#allocation3 + $0xd] sm:$0x1] %vm1722, %v3610
    %v3613 = vcombine.high %v3604, %v3604
    %3615 = vst.msk [vmem:[#allocation3 + $0xf] sm:$0x1] %vm1707, %v3613
    %v3616 = vrot.slane %v3613, 7
    %v3617 = vrot.slane %v3616, 2
    %3618 = vrot.lane.b32.xlu0 %v3617, 64
    %v3619 = vpop.permute.xlu0 %3618
    %3621 = vst.msk [vmem:[#allocation3 + $0xf] sm:$0x1] %vm1722, %v3619
    %3622 = vst.msk [vmem:[#allocation3 + $0x11] sm:$0x1] %vm1707, %v3521
    %v3625 = vunpack.c.l.s4 1983009808
    %v3626 = vunpack.c.0.s8 %v3625
    %v3627 = vlaneseq
    %v3628 = vshrl.u32 %v3627, 7
    %v3629 = vsub.s32 %v3626, %v3628
    %v3630 = vrot.slane %v3521, %v3629
    %v3631 = vrot.slane %v3630, 7
    %v3632 = vrot.slane %v3631, 2
    %3633 = vrot.lane.b32.xlu0 %v3632, 64
    %v3634 = vpop.permute.xlu0 %3633
    %3636 = vst.msk [vmem:[#allocation3 + $0x11] sm:$0x1] %vm1722, %v3634
    %v3637 = vcombine.high %v3630, %v3630
    %3639 = vst.msk [vmem:[#allocation3 + $0x13] sm:$0x1] %vm1707, %v3637
    %v3640 = vrot.slane %v3637, 7
    %v3641 = vrot.slane %v3640, 2
    %3642 = vrot.lane.b32.xlu0 %v3641, 64
    %v3643 = vpop.permute.xlu0 %3642
    %3645 = vst.msk [vmem:[#allocation3 + $0x13] sm:$0x1] %vm1722, %v3643
    %v3646 = vcombine.high %v3521, %v3521
    %v3648 = vunpack.c.l.s4 1983009808
    %v3649 = vunpack.c.0.s8 %v3648
    %v3650 = vlaneseq
    %v3651 = vshrl.u32 %v3650, 7
    %v3652 = vsub.s32 %v3649, %v3651
    %v3653 = vrot.slane %v3646, %v3652
    %3655 = vst.msk [vmem:[#allocation3 + $0x15] sm:$0x1] %vm1707, %v3653
    %v3656 = vrot.slane %v3653, 7
    %v3657 = vrot.slane %v3656, 2
    %3658 = vrot.lane.b32.xlu0 %v3657, 64
    %v3659 = vpop.permute.xlu0 %3658
    %3661 = vst.msk [vmem:[#allocation3 + $0x15] sm:$0x1] %vm1722, %v3659
    %v3662 = vcombine.high %v3653, %v3653
    %3664 = vst.msk [vmem:[#allocation3 + $0x17] sm:$0x1] %vm1707, %v3662
    %v3665 = vrot.slane %v3662, 7
    %v3666 = vrot.slane %v3665, 2
    %3667 = vrot.lane.b32.xlu0 %v3666, 64
    %v3668 = vpop.permute.xlu0 %3667
    %3670 = vst.msk [vmem:[#allocation3 + $0x17] sm:$0x1] %vm1722, %v3668
    %3671 = vst.msk [vmem:[#allocation3 + $0x19] sm:$0x1] %vm1707, %v3522
    %v3674 = vunpack.c.l.s4 1983009808
    %v3675 = vunpack.c.0.s8 %v3674
    %v3676 = vlaneseq
    %v3677 = vshrl.u32 %v3676, 7
    %v3678 = vsub.s32 %v3675, %v3677
    %v3679 = vrot.slane %v3522, %v3678
    %v3680 = vrot.slane %v3679, 7
    %v3681 = vrot.slane %v3680, 2
    %3682 = vrot.lane.b32.xlu0 %v3681, 64
    %v3683 = vpop.permute.xlu0 %3682
    %3685 = vst.msk [vmem:[#allocation3 + $0x19] sm:$0x1] %vm1722, %v3683
    %v3686 = vcombine.high %v3679, %v3679
    %3688 = vst.msk [vmem:[#allocation3 + $0x1b] sm:$0x1] %vm1707, %v3686
    %v3689 = vrot.slane %v3686, 7
    %v3690 = vrot.slane %v3689, 2
    %3691 = vrot.lane.b32.xlu0 %v3690, 64
    %v3692 = vpop.permute.xlu0 %3691
    %3694 = vst.msk [vmem:[#allocation3 + $0x1b] sm:$0x1] %vm1722, %v3692
    %v3695 = vcombine.high %v3522, %v3522
    %v3697 = vunpack.c.l.s4 1983009808
    %v3698 = vunpack.c.0.s8 %v3697
    %v3699 = vlaneseq
    %v3700 = vshrl.u32 %v3699, 7
    %v3701 = vsub.s32 %v3698, %v3700
    %v3702 = vrot.slane %v3695, %v3701
    %3704 = vst.msk [vmem:[#allocation3 + $0x1d] sm:$0x1] %vm1707, %v3702
    %v3705 = vrot.slane %v3702, 7
    %v3706 = vrot.slane %v3705, 2
    %3707 = vrot.lane.b32.xlu0 %v3706, 64
    %v3708 = vpop.permute.xlu0 %3707
    %3710 = vst.msk [vmem:[#allocation3 + $0x1d] sm:$0x1] %vm1722, %v3708
    %v3711 = vcombine.high %v3702, %v3702
    %3713 = vst.msk [vmem:[#allocation3 + $0x1f] sm:$0x1] %vm1707, %v3711
    %v3714 = vrot.slane %v3711, 7
    %v3715 = vrot.slane %v3714, 2
    %3716 = vrot.lane.b32.xlu0 %v3715, 64
    %v3717 = vpop.permute.xlu0 %3716
    %3719 = vst.msk [vmem:[#allocation3 + $0x1f] sm:$0x1] %vm1722, %v3717
    %3720 = vst.msk [vmem:[#allocation3 + $0x21] sm:$0x1] %vm1707, %v3523
    %v3723 = vunpack.c.l.s4 1983009808
    %v3724 = vunpack.c.0.s8 %v3723
    %v3725 = vlaneseq
    %v3726 = vshrl.u32 %v3725, 7
    %v3727 = vsub.s32 %v3724, %v3726
    %v3728 = vrot.slane %v3523, %v3727
    %v3729 = vrot.slane %v3728, 7
    %v3730 = vrot.slane %v3729, 2
    %3731 = vrot.lane.b32.xlu0 %v3730, 64
    %v3732 = vpop.permute.xlu0 %3731
    %3734 = vst.msk [vmem:[#allocation3 + $0x21] sm:$0x1] %vm1722, %v3732
    %v3735 = vcombine.high %v3728, %v3728
    %3737 = vst.msk [vmem:[#allocation3 + $0x23] sm:$0x1] %vm1707, %v3735
    %v3738 = vrot.slane %v3735, 7
    %v3739 = vrot.slane %v3738, 2
    %3740 = vrot.lane.b32.xlu0 %v3739, 64
    %v3741 = vpop.permute.xlu0 %3740
    %3743 = vst.msk [vmem:[#allocation3 + $0x23] sm:$0x1] %vm1722, %v3741
    %v3744 = vld [vmem:[#allocation3] sm:$0xff]
    %v3745 = vld [vmem:[#allocation3 + $0x8] sm:$0xff]
    %v3746 = vld [vmem:[#allocation3 + $0x10] sm:$0xff]
    %v3747 = vld [vmem:[#allocation3 + $0x18] sm:$0xff]
    %v3748 = vld [vmem:[#allocation3 + $0x20] sm:$0xf]
    %v3754 = vcombine.high %v3744, %v3744
    %v3756 = vunpack.c.l.s4 1983009808
    %v3757 = vunpack.c.0.s8 %v3756
    %v3758 = vlaneseq
    %v3759 = vshrl.u32 %v3758, 7
    %v3760 = vsub.s32 %v3757, %v3759
    %v3761 = vrot.slane %v3744, %v3760
    %v3763 = vunpack.c.l.s4 1983009808
    %v3764 = vunpack.c.0.s8 %v3763
    %v3765 = vlaneseq
    %v3766 = vshrl.u32 %v3765, 7
    %v3767 = vsub.s32 %v3764, %v3766
    %v3768 = vrot.slane %v3754, %v3767
    %v3769 = vcombine.high %v3761, %v3761
    %v3770 = vcombine.high %v3768, %v3768
    %v3771 = vcombine.high %v3745, %v3745
    %v3773 = vunpack.c.l.s4 1983009808
    %v3774 = vunpack.c.0.s8 %v3773
    %v3775 = vlaneseq
    %v3776 = vshrl.u32 %v3775, 7
    %v3777 = vsub.s32 %v3774, %v3776
    %v3778 = vrot.slane %v3745, %v3777
    %v3780 = vunpack.c.l.s4 1983009808
    %v3781 = vunpack.c.0.s8 %v3780
    %v3782 = vlaneseq
    %v3783 = vshrl.u32 %v3782, 7
    %v3784 = vsub.s32 %v3781, %v3783
    %v3785 = vrot.slane %v3771, %v3784
    %v3786 = vcombine.high %v3778, %v3778
    %v3787 = vcombine.high %v3785, %v3785
    %v3788 = vcombine.high %v3746, %v3746
    %v3790 = vunpack.c.l.s4 1983009808
    %v3791 = vunpack.c.0.s8 %v3790
    %v3792 = vlaneseq
    %v3793 = vshrl.u32 %v3792, 7
    %v3794 = vsub.s32 %v3791, %v3793
    %v3795 = vrot.slane %v3746, %v3794
    %v3797 = vunpack.c.l.s4 1983009808
    %v3798 = vunpack.c.0.s8 %v3797
    %v3799 = vlaneseq
    %v3800 = vshrl.u32 %v3799, 7
    %v3801 = vsub.s32 %v3798, %v3800
    %v3802 = vrot.slane %v3788, %v3801
    %v3803 = vcombine.high %v3795, %v3795
    %v3804 = vcombine.high %v3802, %v3802
    %v3805 = vcombine.high %v3747, %v3747
    %v3807 = vunpack.c.l.s4 1983009808
    %v3808 = vunpack.c.0.s8 %v3807
    %v3809 = vlaneseq
    %v3810 = vshrl.u32 %v3809, 7
    %v3811 = vsub.s32 %v3808, %v3810
    %v3812 = vrot.slane %v3747, %v3811
    %v3814 = vunpack.c.l.s4 1983009808
    %v3815 = vunpack.c.0.s8 %v3814
    %v3816 = vlaneseq
    %v3817 = vshrl.u32 %v3816, 7
    %v3818 = vsub.s32 %v3815, %v3817
    %v3819 = vrot.slane %v3805, %v3818
    %v3820 = vcombine.high %v3812, %v3812
    %v3821 = vcombine.high %v3819, %v3819
    %v3823 = vunpack.c.l.s4 1983009808
    %v3824 = vunpack.c.0.s8 %v3823
    %v3825 = vlaneseq
    %v3826 = vshrl.u32 %v3825, 7
    %v3827 = vsub.s32 %v3824, %v3826
    %v3828 = vrot.slane %v3748, %v3827
    %v3829 = vcombine.high %v3828, %v3828
    %v3848 = vpack.c.bf16 %v3761, %v3761
    %v3849 = vpack.c.bf16 %v3769, %v3769
    %v3850 = vpack.c.bf16 %v3768, %v3768
    %v3851 = vpack.c.bf16 %v3770, %v3770
    %v3852 = vpack.c.bf16 %v3778, %v3778
    %v3853 = vpack.c.bf16 %v3786, %v3786
    %v3854 = vpack.c.bf16 %v3785, %v3785
    %v3855 = vpack.c.bf16 %v3787, %v3787
    %v3856 = vpack.c.bf16 %v3795, %v3795
    %v3857 = vpack.c.bf16 %v3803, %v3803
    %v3858 = vpack.c.bf16 %v3802, %v3802
    %v3859 = vpack.c.bf16 %v3804, %v3804
    %v3860 = vpack.c.bf16 %v3812, %v3812
    %v3861 = vpack.c.bf16 %v3820, %v3820
    %v3862 = vpack.c.bf16 %v3819, %v3819
    %v3863 = vpack.c.bf16 %v3821, %v3821
    %v3864 = vpack.c.bf16 %v3828, %v3828
    %v3865 = vpack.c.bf16 %v3829, %v3829
    %v3866 = vld [vmem:[#allocation4] sm:$0xf]
    %v3867 = vld [vmem:[#allocation4 + $0x4] sm:$0xf]
    %v3868 = vld [vmem:[#allocation4 + $0x8] sm:$0xf]
    %v3869 = vld [vmem:[#allocation4 + $0xc] sm:$0xf]
    %v3870 = vld [vmem:[#allocation4 + $0x10] sm:$0xf]
    %v3871 = vld [vmem:[#allocation4 + $0x14] sm:$0xf]
    %v3872 = vld [vmem:[#allocation4 + $0x18] sm:$0xf]
    %v3873 = vld [vmem:[#allocation4 + $0x1c] sm:$0xf]
    %v3874 = vld [vmem:[#allocation4 + $0x20] sm:$0xf]
    %v3875 = vld [vmem:[#allocation4 + $0x24] sm:$0xf]
    %v3876 = vld [vmem:[#allocation4 + $0x28] sm:$0xf]
    %v3877 = vld [vmem:[#allocation4 + $0x2c] sm:$0xf]
    %v3878 = vld [vmem:[#allocation4 + $0x30] sm:$0xf]
    %v3879 = vld [vmem:[#allocation4 + $0x34] sm:$0xf]
    %v3880 = vld [vmem:[#allocation4 + $0x38] sm:$0xf]
    %v3881 = vld [vmem:[#allocation4 + $0x3c] sm:$0xf]
    %v3882 = vld [vmem:[#allocation4 + $0x40] sm:$0xf]
    %v3883 = vld [vmem:[#allocation4 + $0x44] sm:$0xf]
    %v3884 = vld [vmem:[#allocation4 + $0x48] sm:$0xf]
    %v3885 = vld [vmem:[#allocation4 + $0x4c] sm:$0xf]
    %v3886 = vld [vmem:[#allocation4 + $0x50] sm:$0xf]
    %v3887 = vld [vmem:[#allocation4 + $0x54] sm:$0xf]
    %v3888 = vld [vmem:[#allocation4 + $0x58] sm:$0xf]
    %v3889 = vld [vmem:[#allocation4 + $0x5c] sm:$0xf]
    %v3890 = vld [vmem:[#allocation4 + $0x60] sm:$0xf]
    %v3891 = vld [vmem:[#allocation4 + $0x64] sm:$0xf]
    %v3892 = vld [vmem:[#allocation4 + $0x68] sm:$0xf]
    %v3893 = vld [vmem:[#allocation4 + $0x6c] sm:$0xf]
    %v3894 = vld [vmem:[#allocation4 + $0x70] sm:$0xf]
    %v3895 = vld [vmem:[#allocation4 + $0x74] sm:$0xf]
    %v3896 = vld [vmem:[#allocation4 + $0x78] sm:$0xf]
    %v3897 = vld [vmem:[#allocation4 + $0x7c] sm:$0xf]
    %v3898 = vld [vmem:[#allocation4 + $0x80] sm:$0xf]
    %v3899 = vld [vmem:[#allocation4 + $0x84] sm:$0xf]
    %v3900 = vld [vmem:[#allocation4 + $0x88] sm:$0xf]
    %v3901 = vld [vmem:[#allocation4 + $0x8c] sm:$0xf]
    %v3902 = vld [vmem:[#allocation4 + $0x90] sm:$0xf]
    %v3903 = vld [vmem:[#allocation4 + $0x94] sm:$0xf]
    %v3904 = vld [vmem:[#allocation4 + $0x98] sm:$0xf]
    %v3905 = vld [vmem:[#allocation4 + $0x9c] sm:$0xf]
    %v3906 = vld [vmem:[#allocation4 + $0xa0] sm:$0xf]
    %v3907 = vld [vmem:[#allocation4 + $0xa4] sm:$0xf]
    %v3908 = vld [vmem:[#allocation4 + $0xa8] sm:$0xf]
    %v3909 = vld [vmem:[#allocation4 + $0xac] sm:$0xf]
    %v3910 = vld [vmem:[#allocation4 + $0xb0] sm:$0xf]
    %v3911 = vld [vmem:[#allocation4 + $0xb4] sm:$0xf]
    %v3912 = vld [vmem:[#allocation4 + $0xb8] sm:$0xf]
    %v3913 = vld [vmem:[#allocation4 + $0xbc] sm:$0xf]
    %v3914 = vld [vmem:[#allocation4 + $0xc0] sm:$0xf]
    %v3915 = vld [vmem:[#allocation4 + $0xc4] sm:$0xf]
    %v3916 = vld [vmem:[#allocation4 + $0xc8] sm:$0xf]
    %v3917 = vld [vmem:[#allocation4 + $0xcc] sm:$0xf]
    %v3918 = vld [vmem:[#allocation4 + $0xd0] sm:$0xf]
    %v3919 = vld [vmem:[#allocation4 + $0xd4] sm:$0xf]
    %v3920 = vld [vmem:[#allocation4 + $0xd8] sm:$0xf]
    %v3921 = vld [vmem:[#allocation4 + $0xdc] sm:$0xf]
    %v3922 = vld [vmem:[#allocation4 + $0xe0] sm:$0xf]
    %v3923 = vld [vmem:[#allocation4 + $0xe4] sm:$0xf]
    %v3924 = vld [vmem:[#allocation4 + $0xe8] sm:$0xf]
    %v3925 = vld [vmem:[#allocation4 + $0xec] sm:$0xf]
    %v3926 = vld [vmem:[#allocation4 + $0xf0] sm:$0xf]
    %v3927 = vld [vmem:[#allocation4 + $0xf4] sm:$0xf]
    %v3928 = vld [vmem:[#allocation4 + $0xf8] sm:$0xf]
    %v3929 = vld [vmem:[#allocation4 + $0xfc] sm:$0xf]
    %v3930 = vld [vmem:[#allocation4 + $0x100] sm:$0xf]
    %v3931 = vld [vmem:[#allocation4 + $0x104] sm:$0xf]
    %v3932 = vld [vmem:[#allocation4 + $0x108] sm:$0xf]
    %v3933 = vld [vmem:[#allocation4 + $0x10c] sm:$0xf]
    %v3934 = vld [vmem:[#allocation4 + $0x110] sm:$0xf]
    %v3935 = vld [vmem:[#allocation4 + $0x114] sm:$0xf]
    %v3936 = vld [vmem:[#allocation4 + $0x118] sm:$0xf]
    %v3937 = vld [vmem:[#allocation4 + $0x11c] sm:$0xf]
    %v3938 = vld [vmem:[#allocation4 + $0x120] sm:$0xf]
    %v3939 = vld [vmem:[#allocation4 + $0x124] sm:$0xf]
    %v3940 = vld [vmem:[#allocation4 + $0x128] sm:$0xf]
    %v3941 = vld [vmem:[#allocation4 + $0x12c] sm:$0xf]
    %v3942 = vld [vmem:[#allocation4 + $0x130] sm:$0xf]
    %v3943 = vld [vmem:[#allocation4 + $0x134] sm:$0xf]
    %v3944 = vld [vmem:[#allocation4 + $0x138] sm:$0xf]
    %v3945 = vld [vmem:[#allocation4 + $0x13c] sm:$0xf]
    %v3946 = vld [vmem:[#allocation4 + $0x140] sm:$0xf]
    %v3947 = vld [vmem:[#allocation4 + $0x144] sm:$0xf]
    %v3948 = vld [vmem:[#allocation4 + $0x148] sm:$0xf]
    %v3949 = vld [vmem:[#allocation4 + $0x14c] sm:$0xf]
    %v3950 = vld [vmem:[#allocation4 + $0x150] sm:$0xf]
    %v3951 = vld [vmem:[#allocation4 + $0x154] sm:$0xf]
    %v3952 = vld [vmem:[#allocation4 + $0x158] sm:$0xf]
    %v3953 = vld [vmem:[#allocation4 + $0x15c] sm:$0xf]
    %v3954 = vld [vmem:[#allocation4 + $0x160] sm:$0xf]
    %v3955 = vld [vmem:[#allocation4 + $0x164] sm:$0xf]
    %v3956 = vld [vmem:[#allocation4 + $0x168] sm:$0xf]
    %v3957 = vld [vmem:[#allocation4 + $0x16c] sm:$0xf]
    %v3958 = vld [vmem:[#allocation4 + $0x170] sm:$0xf]
    %v3959 = vld [vmem:[#allocation4 + $0x174] sm:$0xf]
    %v3960 = vld [vmem:[#allocation4 + $0x178] sm:$0xf]
    %v3961 = vld [vmem:[#allocation4 + $0x17c] sm:$0xf]
    %v3962 = vld [vmem:[#allocation4 + $0x180] sm:$0xf]
    %v3963 = vld [vmem:[#allocation4 + $0x184] sm:$0xf]
    %v3964 = vld [vmem:[#allocation4 + $0x188] sm:$0xf]
    %v3965 = vld [vmem:[#allocation4 + $0x18c] sm:$0xf]
    %v3966 = vld [vmem:[#allocation4 + $0x190] sm:$0xf]
    %v3967 = vld [vmem:[#allocation4 + $0x194] sm:$0xf]
    %v3968 = vld [vmem:[#allocation4 + $0x198] sm:$0xf]
    %v3969 = vld [vmem:[#allocation4 + $0x19c] sm:$0xf]
    %v3970 = vld [vmem:[#allocation4 + $0x1a0] sm:$0xf]
    %v3971 = vld [vmem:[#allocation4 + $0x1a4] sm:$0xf]
    %v3972 = vld [vmem:[#allocation4 + $0x1a8] sm:$0xf]
    %v3973 = vld [vmem:[#allocation4 + $0x1ac] sm:$0xf]
    %v3974 = vld [vmem:[#allocation4 + $0x1b0] sm:$0xf]
    %v3975 = vld [vmem:[#allocation4 + $0x1b4] sm:$0xf]
    %v3976 = vld [vmem:[#allocation4 + $0x1b8] sm:$0xf]
    %v3977 = vld [vmem:[#allocation4 + $0x1bc] sm:$0xf]
    %v3978 = vld [vmem:[#allocation4 + $0x1c0] sm:$0xf]
    %v3979 = vld [vmem:[#allocation4 + $0x1c4] sm:$0xf]
    %v3980 = vld [vmem:[#allocation4 + $0x1c8] sm:$0xf]
    %v3981 = vld [vmem:[#allocation4 + $0x1cc] sm:$0xf]
    %v3982 = vld [vmem:[#allocation4 + $0x1d0] sm:$0xf]
    %v3983 = vld [vmem:[#allocation4 + $0x1d4] sm:$0xf]
    %v3984 = vld [vmem:[#allocation4 + $0x1d8] sm:$0xf]
    %v3985 = vld [vmem:[#allocation4 + $0x1dc] sm:$0xf]
    %v3986 = vld [vmem:[#allocation4 + $0x1e0] sm:$0xf]
    %v3987 = vld [vmem:[#allocation4 + $0x1e4] sm:$0xf]
    %v3988 = vld [vmem:[#allocation4 + $0x1e8] sm:$0xf]
    %v3989 = vld [vmem:[#allocation4 + $0x1ec] sm:$0xf]
    %v3990 = vld [vmem:[#allocation4 + $0x1f0] sm:$0xf]
    %v3991 = vld [vmem:[#allocation4 + $0x1f4] sm:$0xf]
    %v3992 = vld [vmem:[#allocation4 + $0x1f8] sm:$0xf]
    %v3993 = vld [vmem:[#allocation4 + $0x1fc] sm:$0xf]
    %v3994 = vld [vmem:[#allocation4 + $0x200] sm:$0xf]
    %v3995 = vld [vmem:[#allocation4 + $0x204] sm:$0xf]
    %v3996 = vld [vmem:[#allocation4 + $0x208] sm:$0xf]
    %v3997 = vld [vmem:[#allocation4 + $0x20c] sm:$0xf]
    %v3998 = vld [vmem:[#allocation4 + $0x210] sm:$0xf]
    %v3999 = vld [vmem:[#allocation4 + $0x214] sm:$0xf]
    %v4000 = vld [vmem:[#allocation4 + $0x218] sm:$0xf]
    %v4001 = vld [vmem:[#allocation4 + $0x21c] sm:$0xf]
    %v4002 = vld [vmem:[#allocation4 + $0x220] sm:$0xf]
    %v4003 = vld [vmem:[#allocation4 + $0x224] sm:$0xf]
    %v4004 = vld [vmem:[#allocation4 + $0x228] sm:$0xf]
    %v4005 = vld [vmem:[#allocation4 + $0x22c] sm:$0xf]
    %v4006 = vld [vmem:[#allocation4 + $0x230] sm:$0xf]
    %v4007 = vld [vmem:[#allocation4 + $0x234] sm:$0xf]
    %v4008 = vld [vmem:[#allocation4 + $0x238] sm:$0xf]
    %v4009 = vld [vmem:[#allocation4 + $0x23c] sm:$0xf]
    %v4010 = vld [vmem:[#allocation4 + $0x240] sm:$0xf]
    %v4011 = vld [vmem:[#allocation4 + $0x244] sm:$0xf]
    %v4012 = vld [vmem:[#allocation4 + $0x248] sm:$0xf]
    %v4013 = vld [vmem:[#allocation4 + $0x24c] sm:$0xf]
    %v4014 = vld [vmem:[#allocation4 + $0x250] sm:$0xf]
    %v4015 = vld [vmem:[#allocation4 + $0x254] sm:$0xf]
    %v4016 = vld [vmem:[#allocation4 + $0x258] sm:$0xf]
    %v4017 = vld [vmem:[#allocation4 + $0x25c] sm:$0xf]
    %v4018 = vld [vmem:[#allocation4 + $0x260] sm:$0xf]
    %v4019 = vld [vmem:[#allocation4 + $0x264] sm:$0xf]
    %v4020 = vld [vmem:[#allocation4 + $0x268] sm:$0xf]
    %v4021 = vld [vmem:[#allocation4 + $0x26c] sm:$0xf]
    %v4022 = vld [vmem:[#allocation4 + $0x270] sm:$0xf]
    %v4023 = vld [vmem:[#allocation4 + $0x274] sm:$0xf]
    %v4024 = vld [vmem:[#allocation4 + $0x278] sm:$0xf]
    %v4025 = vld [vmem:[#allocation4 + $0x27c] sm:$0xf]
    %v4026 = vld [vmem:[#allocation4 + $0x280] sm:$0xf]
    %v4027 = vld [vmem:[#allocation4 + $0x284] sm:$0xf]
    %v4028 = vld [vmem:[#allocation4 + $0x288] sm:$0xf]
    %v4029 = vld [vmem:[#allocation4 + $0x28c] sm:$0xf]
    %v4030 = vld [vmem:[#allocation4 + $0x290] sm:$0xf]
    %v4031 = vld [vmem:[#allocation4 + $0x294] sm:$0xf]
    %v4032 = vld [vmem:[#allocation4 + $0x298] sm:$0xf]
    %v4033 = vld [vmem:[#allocation4 + $0x29c] sm:$0xf]
    %v4034 = vld [vmem:[#allocation4 + $0x2a0] sm:$0xf]
    %v4035 = vld [vmem:[#allocation4 + $0x2a4] sm:$0xf]
    %v4036 = vld [vmem:[#allocation4 + $0x2a8] sm:$0xf]
    %v4037 = vld [vmem:[#allocation4 + $0x2ac] sm:$0xf]
    %v4038 = vld [vmem:[#allocation4 + $0x2b0] sm:$0xf]
    %v4039 = vld [vmem:[#allocation4 + $0x2b4] sm:$0xf]
    %v4040 = vld [vmem:[#allocation4 + $0x2b8] sm:$0xf]
    %v4041 = vld [vmem:[#allocation4 + $0x2bc] sm:$0xf]
    %v4042 = vld [vmem:[#allocation4 + $0x2c0] sm:$0xf]
    %v4043 = vld [vmem:[#allocation4 + $0x2c4] sm:$0xf]
    %v4044 = vld [vmem:[#allocation4 + $0x2c8] sm:$0xf]
    %v4045 = vld [vmem:[#allocation4 + $0x2cc] sm:$0xf]
    %v4046 = vld [vmem:[#allocation4 + $0x2d0] sm:$0xf]
    %v4047 = vld [vmem:[#allocation4 + $0x2d4] sm:$0xf]
    %v4048 = vld [vmem:[#allocation4 + $0x2d8] sm:$0xf]
    %v4049 = vld [vmem:[#allocation4 + $0x2dc] sm:$0xf]
    %v4050 = vld [vmem:[#allocation4 + $0x2e0] sm:$0xf]
    %v4051 = vld [vmem:[#allocation4 + $0x2e4] sm:$0xf]
    %v4052 = vld [vmem:[#allocation4 + $0x2e8] sm:$0xf]
    %v4053 = vld [vmem:[#allocation4 + $0x2ec] sm:$0xf]
    %v4054 = vld [vmem:[#allocation4 + $0x2f0] sm:$0xf]
    %v4055 = vld [vmem:[#allocation4 + $0x2f4] sm:$0xf]
    %v4056 = vld [vmem:[#allocation4 + $0x2f8] sm:$0xf]
    %v4057 = vld [vmem:[#allocation4 + $0x2fc] sm:$0xf]
    %v4058 = vld [vmem:[#allocation4 + $0x300] sm:$0xf]
    %v4059 = vld [vmem:[#allocation4 + $0x304] sm:$0xf]
    %v4060 = vld [vmem:[#allocation4 + $0x308] sm:$0xf]
    %v4061 = vld [vmem:[#allocation4 + $0x30c] sm:$0xf]
    %v4062 = vld [vmem:[#allocation4 + $0x310] sm:$0xf]
    %v4063 = vld [vmem:[#allocation4 + $0x314] sm:$0xf]
    %v4064 = vld [vmem:[#allocation4 + $0x318] sm:$0xf]
    %v4065 = vld [vmem:[#allocation4 + $0x31c] sm:$0xf]
    %v4066 = vld [vmem:[#allocation4 + $0x320] sm:$0xf]
    %v4067 = vld [vmem:[#allocation4 + $0x324] sm:$0xf]
    %v4068 = vld [vmem:[#allocation4 + $0x328] sm:$0xf]
    %v4069 = vld [vmem:[#allocation4 + $0x32c] sm:$0xf]
    %v4070 = vld [vmem:[#allocation4 + $0x330] sm:$0xf]
    %v4071 = vld [vmem:[#allocation4 + $0x334] sm:$0xf]
    %v4072 = vld [vmem:[#allocation4 + $0x338] sm:$0xf]
    %v4073 = vld [vmem:[#allocation4 + $0x33c] sm:$0xf]
    %v4074 = vld [vmem:[#allocation4 + $0x340] sm:$0xf]
    %v4075 = vld [vmem:[#allocation4 + $0x344] sm:$0xf]
    %v4076 = vld [vmem:[#allocation4 + $0x348] sm:$0xf]
    %v4077 = vld [vmem:[#allocation4 + $0x34c] sm:$0xf]
    %v4078 = vld [vmem:[#allocation4 + $0x350] sm:$0xf]
    %v4079 = vld [vmem:[#allocation4 + $0x354] sm:$0xf]
    %v4080 = vld [vmem:[#allocation4 + $0x358] sm:$0xf]
    %v4081 = vld [vmem:[#allocation4 + $0x35c] sm:$0xf]
    %v4082 = vld [vmem:[#allocation4 + $0x360] sm:$0xf]
    %v4083 = vld [vmem:[#allocation4 + $0x364] sm:$0xf]
    %v4084 = vld [vmem:[#allocation4 + $0x368] sm:$0xf]
    %v4085 = vld [vmem:[#allocation4 + $0x36c] sm:$0xf]
    %v4086 = vld [vmem:[#allocation4 + $0x370] sm:$0xf]
    %v4087 = vld [vmem:[#allocation4 + $0x374] sm:$0xf]
    %v4088 = vld [vmem:[#allocation4 + $0x378] sm:$0xf]
    %v4089 = vld [vmem:[#allocation4 + $0x37c] sm:$0xf]
    %v4090 = vld [vmem:[#allocation4 + $0x380] sm:$0xf]
    %v4091 = vld [vmem:[#allocation4 + $0x384] sm:$0xf]
    %v4092 = vld [vmem:[#allocation4 + $0x388] sm:$0xf]
    %v4093 = vld [vmem:[#allocation4 + $0x38c] sm:$0xf]
    %v4094 = vld [vmem:[#allocation4 + $0x390] sm:$0xf]
    %v4095 = vld [vmem:[#allocation4 + $0x394] sm:$0xf]
    %v4096 = vld [vmem:[#allocation4 + $0x398] sm:$0xf]
    %v4097 = vld [vmem:[#allocation4 + $0x39c] sm:$0xf]
    %v4098 = vld [vmem:[#allocation4 + $0x3a0] sm:$0xf]
    %v4099 = vld [vmem:[#allocation4 + $0x3a4] sm:$0xf]
    %v4100 = vld [vmem:[#allocation4 + $0x3a8] sm:$0xf]
    %v4101 = vld [vmem:[#allocation4 + $0x3ac] sm:$0xf]
    %v4102 = vld [vmem:[#allocation4 + $0x3b0] sm:$0xf]
    %v4103 = vld [vmem:[#allocation4 + $0x3b4] sm:$0xf]
    %v4104 = vld [vmem:[#allocation4 + $0x3b8] sm:$0xf]
    %v4105 = vld [vmem:[#allocation4 + $0x3bc] sm:$0xf]
    %v4106 = vld [vmem:[#allocation4 + $0x3c0] sm:$0xf]
    %v4107 = vld [vmem:[#allocation4 + $0x3c4] sm:$0xf]
    %v4108 = vld [vmem:[#allocation4 + $0x3c8] sm:$0xf]
    %v4109 = vld [vmem:[#allocation4 + $0x3cc] sm:$0xf]
    %v4110 = vld [vmem:[#allocation4 + $0x3d0] sm:$0xf]
    %v4111 = vld [vmem:[#allocation4 + $0x3d4] sm:$0xf]
    %v4112 = vld [vmem:[#allocation4 + $0x3d8] sm:$0xf]
    %v4113 = vld [vmem:[#allocation4 + $0x3dc] sm:$0xf]
    %v4114 = vld [vmem:[#allocation4 + $0x3e0] sm:$0xf]
    %v4115 = vld [vmem:[#allocation4 + $0x3e4] sm:$0xf]
    %v4116 = vld [vmem:[#allocation4 + $0x3e8] sm:$0xf]
    %v4117 = vld [vmem:[#allocation4 + $0x3ec] sm:$0xf]
    %v4118 = vld [vmem:[#allocation4 + $0x3f0] sm:$0xf]
    %v4119 = vld [vmem:[#allocation4 + $0x3f4] sm:$0xf]
    %v4120 = vld [vmem:[#allocation4 + $0x3f8] sm:$0xf]
    %v4121 = vld [vmem:[#allocation4 + $0x3fc] sm:$0xf]
    %v4122 = vld [vmem:[#allocation4 + $0x400] sm:$0xf]
    %v4123 = vld [vmem:[#allocation4 + $0x404] sm:$0xf]
    %v4124 = vld [vmem:[#allocation4 + $0x408] sm:$0xf]
    %v4125 = vld [vmem:[#allocation4 + $0x40c] sm:$0xf]
    %v4126 = vld [vmem:[#allocation4 + $0x410] sm:$0xf]
    %v4127 = vld [vmem:[#allocation4 + $0x414] sm:$0xf]
    %v4128 = vld [vmem:[#allocation4 + $0x418] sm:$0xf]
    %v4129 = vld [vmem:[#allocation4 + $0x41c] sm:$0xf]
    %v4130 = vld [vmem:[#allocation4 + $0x420] sm:$0xf]
    %v4131 = vld [vmem:[#allocation4 + $0x424] sm:$0xf]
    %v4132 = vld [vmem:[#allocation4 + $0x428] sm:$0xf]
    %v4133 = vld [vmem:[#allocation4 + $0x42c] sm:$0xf]
    %v4134 = vld [vmem:[#allocation4 + $0x430] sm:$0xf]
    %v4135 = vld [vmem:[#allocation4 + $0x434] sm:$0xf]
    %v4136 = vld [vmem:[#allocation4 + $0x438] sm:$0xf]
    %v4137 = vld [vmem:[#allocation4 + $0x43c] sm:$0xf]
    %v4138 = vld [vmem:[#allocation4 + $0x440] sm:$0xf]
    %v4139 = vld [vmem:[#allocation4 + $0x444] sm:$0xf]
    %v4140 = vld [vmem:[#allocation4 + $0x448] sm:$0xf]
    %v4141 = vld [vmem:[#allocation4 + $0x44c] sm:$0xf]
    %v4142 = vld [vmem:[#allocation4 + $0x450] sm:$0xf]
    %v4143 = vld [vmem:[#allocation4 + $0x454] sm:$0xf]
    %v4144 = vld [vmem:[#allocation4 + $0x458] sm:$0xf]
    %v4145 = vld [vmem:[#allocation4 + $0x45c] sm:$0xf]
    %v4146 = vld [vmem:[#allocation4 + $0x460] sm:$0xf]
    %v4147 = vld [vmem:[#allocation4 + $0x464] sm:$0xf]
    %v4148 = vld [vmem:[#allocation4 + $0x468] sm:$0xf]
    %v4149 = vld [vmem:[#allocation4 + $0x46c] sm:$0xf]
    %v4150 = vld [vmem:[#allocation4 + $0x470] sm:$0xf]
    %v4151 = vld [vmem:[#allocation4 + $0x474] sm:$0xf]
    %v4152 = vld [vmem:[#allocation4 + $0x478] sm:$0xf]
    %v4153 = vld [vmem:[#allocation4 + $0x47c] sm:$0xf]
    %v4154 = vld [vmem:[%s6] sm:$0x1]
    %v4156 = vlaneseq
    %v4157 = vshrl.u32 %v4156, 7
    %v4158 = vsub.s32 0, %v4157
    %v4159 = vrot.slane %v4154, %v4158
    %v4449 = vunpack.c.l.b16 %v3866
    %v4450 = vunpack.c.l.b16 %v3867
    %v4451 = vunpack.c.l.b16 %v3868
    %v4452 = vunpack.c.l.b16 %v3869
    %v4453 = vunpack.c.l.b16 %v3870
    %v4454 = vunpack.c.l.b16 %v3871
    %v4455 = vunpack.c.l.b16 %v3872
    %v4456 = vunpack.c.l.b16 %v3873
    %v4457 = vunpack.c.l.b16 %v3874
    %v4458 = vunpack.c.l.b16 %v3875
    %v4459 = vunpack.c.l.b16 %v3876
    %v4460 = vunpack.c.l.b16 %v3877
    %v4461 = vunpack.c.l.b16 %v3878
    %v4462 = vunpack.c.l.b16 %v3879
    %v4463 = vunpack.c.l.b16 %v3880
    %v4464 = vunpack.c.l.b16 %v3881
    %v4465 = vunpack.c.l.b16 %v3882
    %v4466 = vunpack.c.l.b16 %v3883
    %v4467 = vunpack.c.l.b16 %v3884
    %v4468 = vunpack.c.l.b16 %v3885
    %v4469 = vunpack.c.l.b16 %v3886
    %v4470 = vunpack.c.l.b16 %v3887
    %v4471 = vunpack.c.l.b16 %v3888
    %v4472 = vunpack.c.l.b16 %v3889
    %v4473 = vunpack.c.l.b16 %v3890
    %v4474 = vunpack.c.l.b16 %v3891
    %v4475 = vunpack.c.l.b16 %v3892
    %v4476 = vunpack.c.l.b16 %v3893
    %v4477 = vunpack.c.l.b16 %v3894
    %v4478 = vunpack.c.l.b16 %v3895
    %v4479 = vunpack.c.l.b16 %v3896
    %v4480 = vunpack.c.l.b16 %v3897
    %v4481 = vunpack.c.l.b16 %v3898
    %v4482 = vunpack.c.l.b16 %v3899
    %v4483 = vunpack.c.l.b16 %v3900
    %v4484 = vunpack.c.l.b16 %v3901
    %v4485 = vunpack.c.l.b16 %v3902
    %v4486 = vunpack.c.l.b16 %v3903
    %v4487 = vunpack.c.l.b16 %v3904
    %v4488 = vunpack.c.l.b16 %v3905
    %v4489 = vunpack.c.l.b16 %v3906
    %v4490 = vunpack.c.l.b16 %v3907
    %v4491 = vunpack.c.l.b16 %v3908
    %v4492 = vunpack.c.l.b16 %v3909
    %v4493 = vunpack.c.l.b16 %v3910
    %v4494 = vunpack.c.l.b16 %v3911
    %v4495 = vunpack.c.l.b16 %v3912
    %v4496 = vunpack.c.l.b16 %v3913
    %v4497 = vunpack.c.l.b16 %v3914
    %v4498 = vunpack.c.l.b16 %v3915
    %v4499 = vunpack.c.l.b16 %v3916
    %v4500 = vunpack.c.l.b16 %v3917
    %v4501 = vunpack.c.l.b16 %v3918
    %v4502 = vunpack.c.l.b16 %v3919
    %v4503 = vunpack.c.l.b16 %v3920
    %v4504 = vunpack.c.l.b16 %v3921
    %v4505 = vunpack.c.l.b16 %v3922
    %v4506 = vunpack.c.l.b16 %v3923
    %v4507 = vunpack.c.l.b16 %v3924
    %v4508 = vunpack.c.l.b16 %v3925
    %v4509 = vunpack.c.l.b16 %v3926
    %v4510 = vunpack.c.l.b16 %v3927
    %v4511 = vunpack.c.l.b16 %v3928
    %v4512 = vunpack.c.l.b16 %v3929
    %v4513 = vunpack.c.l.b16 %v3930
    %v4514 = vunpack.c.l.b16 %v3931
    %v4515 = vunpack.c.l.b16 %v3932
    %v4516 = vunpack.c.l.b16 %v3933
    %v4517 = vunpack.c.l.b16 %v3934
    %v4518 = vunpack.c.l.b16 %v3935
    %v4519 = vunpack.c.l.b16 %v3936
    %v4520 = vunpack.c.l.b16 %v3937
    %v4521 = vunpack.c.l.b16 %v3938
    %v4522 = vunpack.c.l.b16 %v3939
    %v4523 = vunpack.c.l.b16 %v3940
    %v4524 = vunpack.c.l.b16 %v3941
    %v4525 = vunpack.c.l.b16 %v3942
    %v4526 = vunpack.c.l.b16 %v3943
    %v4527 = vunpack.c.l.b16 %v3944
    %v4528 = vunpack.c.l.b16 %v3945
    %v4529 = vunpack.c.l.b16 %v3946
    %v4530 = vunpack.c.l.b16 %v3947
    %v4531 = vunpack.c.l.b16 %v3948
    %v4532 = vunpack.c.l.b16 %v3949
    %v4533 = vunpack.c.l.b16 %v3950
    %v4534 = vunpack.c.l.b16 %v3951
    %v4535 = vunpack.c.l.b16 %v3952
    %v4536 = vunpack.c.l.b16 %v3953
    %v4537 = vunpack.c.l.b16 %v3954
    %v4538 = vunpack.c.l.b16 %v3955
    %v4539 = vunpack.c.l.b16 %v3956
    %v4540 = vunpack.c.l.b16 %v3957
    %v4541 = vunpack.c.l.b16 %v3958
    %v4542 = vunpack.c.l.b16 %v3959
    %v4543 = vunpack.c.l.b16 %v3960
    %v4544 = vunpack.c.l.b16 %v3961
    %v4545 = vunpack.c.l.b16 %v3962
    %v4546 = vunpack.c.l.b16 %v3963
    %v4547 = vunpack.c.l.b16 %v3964
    %v4548 = vunpack.c.l.b16 %v3965
    %v4549 = vunpack.c.l.b16 %v3966
    %v4550 = vunpack.c.l.b16 %v3967
    %v4551 = vunpack.c.l.b16 %v3968
    %v4552 = vunpack.c.l.b16 %v3969
    %v4553 = vunpack.c.l.b16 %v3970
    %v4554 = vunpack.c.l.b16 %v3971
    %v4555 = vunpack.c.l.b16 %v3972
    %v4556 = vunpack.c.l.b16 %v3973
    %v4557 = vunpack.c.l.b16 %v3974
    %v4558 = vunpack.c.l.b16 %v3975
    %v4559 = vunpack.c.l.b16 %v3976
    %v4560 = vunpack.c.l.b16 %v3977
    %v4561 = vunpack.c.l.b16 %v3978
    %v4562 = vunpack.c.l.b16 %v3979
    %v4563 = vunpack.c.l.b16 %v3980
    %v4564 = vunpack.c.l.b16 %v3981
    %v4565 = vunpack.c.l.b16 %v3982
    %v4566 = vunpack.c.l.b16 %v3983
    %v4567 = vunpack.c.l.b16 %v3984
    %v4568 = vunpack.c.l.b16 %v3985
    %v4569 = vunpack.c.l.b16 %v3986
    %v4570 = vunpack.c.l.b16 %v3987
    %v4571 = vunpack.c.l.b16 %v3988
    %v4572 = vunpack.c.l.b16 %v3989
    %v4573 = vunpack.c.l.b16 %v3990
    %v4574 = vunpack.c.l.b16 %v3991
    %v4575 = vunpack.c.l.b16 %v3992
    %v4576 = vunpack.c.l.b16 %v3993
    %v4577 = vunpack.c.l.b16 %v3994
    %v4578 = vunpack.c.l.b16 %v3995
    %v4579 = vunpack.c.l.b16 %v3996
    %v4580 = vunpack.c.l.b16 %v3997
    %v4581 = vunpack.c.l.b16 %v3998
    %v4582 = vunpack.c.l.b16 %v3999
    %v4583 = vunpack.c.l.b16 %v4000
    %v4584 = vunpack.c.l.b16 %v4001
    %v4585 = vunpack.c.l.b16 %v4002
    %v4586 = vunpack.c.l.b16 %v4003
    %v4587 = vunpack.c.l.b16 %v4004
    %v4588 = vunpack.c.l.b16 %v4005
    %v4589 = vunpack.c.l.b16 %v4006
    %v4590 = vunpack.c.l.b16 %v4007
    %v4591 = vunpack.c.l.b16 %v4008
    %v4592 = vunpack.c.l.b16 %v4009
    %v4593 = vunpack.c.l.b16 %v4010
    %v4594 = vunpack.c.l.b16 %v4011
    %v4595 = vunpack.c.l.b16 %v4012
    %v4596 = vunpack.c.l.b16 %v4013
    %v4597 = vunpack.c.l.b16 %v4014
    %v4598 = vunpack.c.l.b16 %v4015
    %v4599 = vunpack.c.l.b16 %v4016
    %v4600 = vunpack.c.l.b16 %v4017
    %v4601 = vunpack.c.l.b16 %v4018
    %v4602 = vunpack.c.l.b16 %v4019
    %v4603 = vunpack.c.l.b16 %v4020
    %v4604 = vunpack.c.l.b16 %v4021
    %v4605 = vunpack.c.l.b16 %v4022
    %v4606 = vunpack.c.l.b16 %v4023
    %v4607 = vunpack.c.l.b16 %v4024
    %v4608 = vunpack.c.l.b16 %v4025
    %v4609 = vunpack.c.l.b16 %v4026
    %v4610 = vunpack.c.l.b16 %v4027
    %v4611 = vunpack.c.l.b16 %v4028
    %v4612 = vunpack.c.l.b16 %v4029
    %v4613 = vunpack.c.l.b16 %v4030
    %v4614 = vunpack.c.l.b16 %v4031
    %v4615 = vunpack.c.l.b16 %v4032
    %v4616 = vunpack.c.l.b16 %v4033
    %v4617 = vunpack.c.l.b16 %v4034
    %v4618 = vunpack.c.l.b16 %v4035
    %v4619 = vunpack.c.l.b16 %v4036
    %v4620 = vunpack.c.l.b16 %v4037
    %v4621 = vunpack.c.l.b16 %v4038
    %v4622 = vunpack.c.l.b16 %v4039
    %v4623 = vunpack.c.l.b16 %v4040
    %v4624 = vunpack.c.l.b16 %v4041
    %v4625 = vunpack.c.l.b16 %v4042
    %v4626 = vunpack.c.l.b16 %v4043
    %v4627 = vunpack.c.l.b16 %v4044
    %v4628 = vunpack.c.l.b16 %v4045
    %v4629 = vunpack.c.l.b16 %v4046
    %v4630 = vunpack.c.l.b16 %v4047
    %v4631 = vunpack.c.l.b16 %v4048
    %v4632 = vunpack.c.l.b16 %v4049
    %v4633 = vunpack.c.l.b16 %v4050
    %v4634 = vunpack.c.l.b16 %v4051
    %v4635 = vunpack.c.l.b16 %v4052
    %v4636 = vunpack.c.l.b16 %v4053
    %v4637 = vunpack.c.l.b16 %v4054
    %v4638 = vunpack.c.l.b16 %v4055
    %v4639 = vunpack.c.l.b16 %v4056
    %v4640 = vunpack.c.l.b16 %v4057
    %v4641 = vunpack.c.l.b16 %v4058
    %v4642 = vunpack.c.l.b16 %v4059
    %v4643 = vunpack.c.l.b16 %v4060
    %v4644 = vunpack.c.l.b16 %v4061
    %v4645 = vunpack.c.l.b16 %v4062
    %v4646 = vunpack.c.l.b16 %v4063
    %v4647 = vunpack.c.l.b16 %v4064
    %v4648 = vunpack.c.l.b16 %v4065
    %v4649 = vunpack.c.l.b16 %v4066
    %v4650 = vunpack.c.l.b16 %v4067
    %v4651 = vunpack.c.l.b16 %v4068
    %v4652 = vunpack.c.l.b16 %v4069
    %v4653 = vunpack.c.l.b16 %v4070
    %v4654 = vunpack.c.l.b16 %v4071
    %v4655 = vunpack.c.l.b16 %v4072
    %v4656 = vunpack.c.l.b16 %v4073
    %v4657 = vunpack.c.l.b16 %v4074
    %v4658 = vunpack.c.l.b16 %v4075
    %v4659 = vunpack.c.l.b16 %v4076
    %v4660 = vunpack.c.l.b16 %v4077
    %v4661 = vunpack.c.l.b16 %v4078
    %v4662 = vunpack.c.l.b16 %v4079
    %v4663 = vunpack.c.l.b16 %v4080
    %v4664 = vunpack.c.l.b16 %v4081
    %v4665 = vunpack.c.l.b16 %v4082
    %v4666 = vunpack.c.l.b16 %v4083
    %v4667 = vunpack.c.l.b16 %v4084
    %v4668 = vunpack.c.l.b16 %v4085
    %v4669 = vunpack.c.l.b16 %v4086
    %v4670 = vunpack.c.l.b16 %v4087
    %v4671 = vunpack.c.l.b16 %v4088
    %v4672 = vunpack.c.l.b16 %v4089
    %v4673 = vunpack.c.l.b16 %v4090
    %v4674 = vunpack.c.l.b16 %v4091
    %v4675 = vunpack.c.l.b16 %v4092
    %v4676 = vunpack.c.l.b16 %v4093
    %v4677 = vunpack.c.l.b16 %v4094
    %v4678 = vunpack.c.l.b16 %v4095
    %v4679 = vunpack.c.l.b16 %v4096
    %v4680 = vunpack.c.l.b16 %v4097
    %v4681 = vunpack.c.l.b16 %v4098
    %v4682 = vunpack.c.l.b16 %v4099
    %v4683 = vunpack.c.l.b16 %v4100
    %v4684 = vunpack.c.l.b16 %v4101
    %v4685 = vunpack.c.l.b16 %v4102
    %v4686 = vunpack.c.l.b16 %v4103
    %v4687 = vunpack.c.l.b16 %v4104
    %v4688 = vunpack.c.l.b16 %v4105
    %v4689 = vunpack.c.l.b16 %v4106
    %v4690 = vunpack.c.l.b16 %v4107
    %v4691 = vunpack.c.l.b16 %v4108
    %v4692 = vunpack.c.l.b16 %v4109
    %v4693 = vunpack.c.l.b16 %v4110
    %v4694 = vunpack.c.l.b16 %v4111
    %v4695 = vunpack.c.l.b16 %v4112
    %v4696 = vunpack.c.l.b16 %v4113
    %v4697 = vunpack.c.l.b16 %v4114
    %v4698 = vunpack.c.l.b16 %v4115
    %v4699 = vunpack.c.l.b16 %v4116
    %v4700 = vunpack.c.l.b16 %v4117
    %v4701 = vunpack.c.l.b16 %v4118
    %v4702 = vunpack.c.l.b16 %v4119
    %v4703 = vunpack.c.l.b16 %v4120
    %v4704 = vunpack.c.l.b16 %v4121
    %v4705 = vunpack.c.l.b16 %v4122
    %v4706 = vunpack.c.l.b16 %v4123
    %v4707 = vunpack.c.l.b16 %v4124
    %v4708 = vunpack.c.l.b16 %v4125
    %v4709 = vunpack.c.l.b16 %v4126
    %v4710 = vunpack.c.l.b16 %v4127
    %v4711 = vunpack.c.l.b16 %v4128
    %v4712 = vunpack.c.l.b16 %v4129
    %v4713 = vunpack.c.l.b16 %v4130
    %v4714 = vunpack.c.l.b16 %v4131
    %v4715 = vunpack.c.l.b16 %v4132
    %v4716 = vunpack.c.l.b16 %v4133
    %v4717 = vunpack.c.l.b16 %v4134
    %v4718 = vunpack.c.l.b16 %v4135
    %v4719 = vunpack.c.l.b16 %v4136
    %v4720 = vunpack.c.l.b16 %v4137
    %v4721 = vunpack.c.l.b16 %v4138
    %v4722 = vunpack.c.l.b16 %v4139
    %v4723 = vunpack.c.l.b16 %v4140
    %v4724 = vunpack.c.l.b16 %v4141
    %v4725 = vunpack.c.l.b16 %v4142
    %v4726 = vunpack.c.l.b16 %v4143
    %v4727 = vunpack.c.l.b16 %v4144
    %v4728 = vunpack.c.l.b16 %v4145
    %v4729 = vunpack.c.l.b16 %v4146
    %v4730 = vunpack.c.l.b16 %v4147
    %v4731 = vunpack.c.l.b16 %v4148
    %v4732 = vunpack.c.l.b16 %v4149
    %v4733 = vunpack.c.l.b16 %v4150
    %v4734 = vunpack.c.l.b16 %v4151
    %v4735 = vunpack.c.l.b16 %v4152
    %v4736 = vunpack.c.l.b16 %v4153
    %v4737 = vpack.c.b16 %v4450, %v4449
    %v4738 = vpack.c.b16 %v4452, %v4451
    %v4739 = vpack.c.b16 %v4454, %v4453
    %v4740 = vpack.c.b16 %v4456, %v4455
    %v4741 = vpack.c.b16 %v4458, %v4457
    %v4742 = vpack.c.b16 %v4460, %v4459
    %v4743 = vpack.c.b16 %v4462, %v4461
    %v4744 = vpack.c.b16 %v4464, %v4463
    %v4745 = vpack.c.b16 %v4466, %v4465
    %v4746 = vpack.c.b16 %v4468, %v4467
    %v4747 = vpack.c.b16 %v4470, %v4469
    %v4748 = vpack.c.b16 %v4472, %v4471
    %v4749 = vpack.c.b16 %v4474, %v4473
    %v4750 = vpack.c.b16 %v4476, %v4475
    %v4751 = vpack.c.b16 %v4478, %v4477
    %v4752 = vpack.c.b16 %v4480, %v4479
    %v4753 = vpack.c.b16 %v4482, %v4481
    %v4754 = vpack.c.b16 %v4484, %v4483
    %v4755 = vpack.c.b16 %v4486, %v4485
    %v4756 = vpack.c.b16 %v4488, %v4487
    %v4757 = vpack.c.b16 %v4490, %v4489
    %v4758 = vpack.c.b16 %v4492, %v4491
    %v4759 = vpack.c.b16 %v4494, %v4493
    %v4760 = vpack.c.b16 %v4496, %v4495
    %v4761 = vpack.c.b16 %v4498, %v4497
    %v4762 = vpack.c.b16 %v4500, %v4499
    %v4763 = vpack.c.b16 %v4502, %v4501
    %v4764 = vpack.c.b16 %v4504, %v4503
    %v4765 = vpack.c.b16 %v4506, %v4505
    %v4766 = vpack.c.b16 %v4508, %v4507
    %v4767 = vpack.c.b16 %v4510, %v4509
    %v4768 = vpack.c.b16 %v4512, %v4511
    %v4769 = vpack.c.b16 %v4514, %v4513
    %v4770 = vpack.c.b16 %v4516, %v4515
    %v4771 = vpack.c.b16 %v4518, %v4517
    %v4772 = vpack.c.b16 %v4520, %v4519
    %v4773 = vpack.c.b16 %v4522, %v4521
    %v4774 = vpack.c.b16 %v4524, %v4523
    %v4775 = vpack.c.b16 %v4526, %v4525
    %v4776 = vpack.c.b16 %v4528, %v4527
    %v4777 = vpack.c.b16 %v4530, %v4529
    %v4778 = vpack.c.b16 %v4532, %v4531
    %v4779 = vpack.c.b16 %v4534, %v4533
    %v4780 = vpack.c.b16 %v4536, %v4535
    %v4781 = vpack.c.b16 %v4538, %v4537
    %v4782 = vpack.c.b16 %v4540, %v4539
    %v4783 = vpack.c.b16 %v4542, %v4541
    %v4784 = vpack.c.b16 %v4544, %v4543
    %v4785 = vpack.c.b16 %v4546, %v4545
    %v4786 = vpack.c.b16 %v4548, %v4547
    %v4787 = vpack.c.b16 %v4550, %v4549
    %v4788 = vpack.c.b16 %v4552, %v4551
    %v4789 = vpack.c.b16 %v4554, %v4553
    %v4790 = vpack.c.b16 %v4556, %v4555
    %v4791 = vpack.c.b16 %v4558, %v4557
    %v4792 = vpack.c.b16 %v4560, %v4559
    %v4793 = vpack.c.b16 %v4562, %v4561
    %v4794 = vpack.c.b16 %v4564, %v4563
    %v4795 = vpack.c.b16 %v4566, %v4565
    %v4796 = vpack.c.b16 %v4568, %v4567
    %v4797 = vpack.c.b16 %v4570, %v4569
    %v4798 = vpack.c.b16 %v4572, %v4571
    %v4799 = vpack.c.b16 %v4574, %v4573
    %v4800 = vpack.c.b16 %v4576, %v4575
    %v4801 = vpack.c.b16 %v4578, %v4577
    %v4802 = vpack.c.b16 %v4580, %v4579
    %v4803 = vpack.c.b16 %v4582, %v4581
    %v4804 = vpack.c.b16 %v4584, %v4583
    %v4805 = vpack.c.b16 %v4586, %v4585
    %v4806 = vpack.c.b16 %v4588, %v4587
    %v4807 = vpack.c.b16 %v4590, %v4589
    %v4808 = vpack.c.b16 %v4592, %v4591
    %v4809 = vpack.c.b16 %v4594, %v4593
    %v4810 = vpack.c.b16 %v4596, %v4595
    %v4811 = vpack.c.b16 %v4598, %v4597
    %v4812 = vpack.c.b16 %v4600, %v4599
    %v4813 = vpack.c.b16 %v4602, %v4601
    %v4814 = vpack.c.b16 %v4604, %v4603
    %v4815 = vpack.c.b16 %v4606, %v4605
    %v4816 = vpack.c.b16 %v4608, %v4607
    %v4817 = vpack.c.b16 %v4610, %v4609
    %v4818 = vpack.c.b16 %v4612, %v4611
    %v4819 = vpack.c.b16 %v4614, %v4613
    %v4820 = vpack.c.b16 %v4616, %v4615
    %v4821 = vpack.c.b16 %v4618, %v4617
    %v4822 = vpack.c.b16 %v4620, %v4619
    %v4823 = vpack.c.b16 %v4622, %v4621
    %v4824 = vpack.c.b16 %v4624, %v4623
    %v4825 = vpack.c.b16 %v4626, %v4625
    %v4826 = vpack.c.b16 %v4628, %v4627
    %v4827 = vpack.c.b16 %v4630, %v4629
    %v4828 = vpack.c.b16 %v4632, %v4631
    %v4829 = vpack.c.b16 %v4634, %v4633
    %v4830 = vpack.c.b16 %v4636, %v4635
    %v4831 = vpack.c.b16 %v4638, %v4637
    %v4832 = vpack.c.b16 %v4640, %v4639
    %v4833 = vpack.c.b16 %v4642, %v4641
    %v4834 = vpack.c.b16 %v4644, %v4643
    %v4835 = vpack.c.b16 %v4646, %v4645
    %v4836 = vpack.c.b16 %v4648, %v4647
    %v4837 = vpack.c.b16 %v4650, %v4649
    %v4838 = vpack.c.b16 %v4652, %v4651
    %v4839 = vpack.c.b16 %v4654, %v4653
    %v4840 = vpack.c.b16 %v4656, %v4655
    %v4841 = vpack.c.b16 %v4658, %v4657
    %v4842 = vpack.c.b16 %v4660, %v4659
    %v4843 = vpack.c.b16 %v4662, %v4661
    %v4844 = vpack.c.b16 %v4664, %v4663
    %v4845 = vpack.c.b16 %v4666, %v4665
    %v4846 = vpack.c.b16 %v4668, %v4667
    %v4847 = vpack.c.b16 %v4670, %v4669
    %v4848 = vpack.c.b16 %v4672, %v4671
    %v4849 = vpack.c.b16 %v4674, %v4673
    %v4850 = vpack.c.b16 %v4676, %v4675
    %v4851 = vpack.c.b16 %v4678, %v4677
    %v4852 = vpack.c.b16 %v4680, %v4679
    %v4853 = vpack.c.b16 %v4682, %v4681
    %v4854 = vpack.c.b16 %v4684, %v4683
    %v4855 = vpack.c.b16 %v4686, %v4685
    %v4856 = vpack.c.b16 %v4688, %v4687
    %v4857 = vpack.c.b16 %v4690, %v4689
    %v4858 = vpack.c.b16 %v4692, %v4691
    %v4859 = vpack.c.b16 %v4694, %v4693
    %v4860 = vpack.c.b16 %v4696, %v4695
    %v4861 = vpack.c.b16 %v4698, %v4697
    %v4862 = vpack.c.b16 %v4700, %v4699
    %v4863 = vpack.c.b16 %v4702, %v4701
    %v4864 = vpack.c.b16 %v4704, %v4703
    %v4865 = vpack.c.b16 %v4706, %v4705
    %v4866 = vpack.c.b16 %v4708, %v4707
    %v4867 = vpack.c.b16 %v4710, %v4709
    %v4868 = vpack.c.b16 %v4712, %v4711
    %v4869 = vpack.c.b16 %v4714, %v4713
    %v4870 = vpack.c.b16 %v4716, %v4715
    %v4871 = vpack.c.b16 %v4718, %v4717
    %v4872 = vpack.c.b16 %v4720, %v4719
    %v4873 = vpack.c.b16 %v4722, %v4721
    %v4874 = vpack.c.b16 %v4724, %v4723
    %v4875 = vpack.c.b16 %v4726, %v4725
    %v4876 = vpack.c.b16 %v4728, %v4727
    %v4877 = vpack.c.b16 %v4730, %v4729
    %v4878 = vpack.c.b16 %v4732, %v4731
    %v4879 = vpack.c.b16 %v4734, %v4733
    %v4880 = vpack.c.b16 %v4736, %v4735
    %5025 = vmatprep.subr.bf16.mxu0 0
    %5026 = vmatpush1.bf16.msra.mxu0 %v4744
    %5027 = vmatprep.subr.bf16.mxu0 0
    %5028 = vmatpush1.bf16.msra.mxu0 %v4743
    %5029 = vmatprep.subr.bf16.mxu0 0
    %5030 = vmatpush1.bf16.msra.mxu0 %v4742
    %5031 = vmatprep.subr.bf16.mxu0 0
    %5032 = vmatpush1.bf16.msra.mxu0 %v4741
    %5033 = vmatprep.subr.bf16.mxu0 0
    %5034 = vmatpush1.bf16.msra.mxu0 %v4740
    %5035 = vmatprep.subr.bf16.mxu0 0
    %5036 = vmatpush1.bf16.msra.mxu0 %v4739
    %5037 = vmatprep.subr.bf16.mxu0 0
    %5038 = vmatpush1.bf16.msra.mxu0 %v4738
    %5039 = vmatprep.subr.bf16.mxu0 0
    %5040 = vmatpush1.bf16.msra.mxu0 %v4737
    %5041 = vmatprep.subr.bf16.mxu0 0
    %5042 = vmatpush2.bf16.msra.mxu0 %v4752
    %5043 = vmatprep.subr.bf16.mxu0 0
    %5044 = vmatpush2.bf16.msra.mxu0 %v4751
    %5045 = vmatprep.subr.bf16.mxu0 0
    %5046 = vmatpush2.bf16.msra.mxu0 %v4750
    %5047 = vmatprep.subr.bf16.mxu0 0
    %5048 = vmatpush2.bf16.msra.mxu0 %v4749
    %5049 = vmatprep.subr.bf16.mxu0 0
    %5050 = vmatpush2.bf16.msra.mxu0 %v4748
    %5051 = vmatprep.subr.bf16.mxu0 0
    %5052 = vmatpush2.bf16.msra.mxu0 %v4747
    %5053 = vmatprep.subr.bf16.mxu0 0
    %5054 = vmatpush2.bf16.msra.mxu0 %v4746
    %5055 = vmatprep.subr.bf16.mxu0 0
    %5056 = vmatpush2.bf16.msra.mxu0 %v4745
    %5057 = vmatprep.mubr.bf16.mxu0 %v3849
    %5058 = vmatmul.mubr.bf16.gmra.mxu0 %v3848
    %v5059 = vpop.f32.mrf.mxu0
    %v5060 = vadd.f32 %v4159, %v5059
    %v5061 = vpop.f32.mrf.mxu0
    %v5062 = vpop.f32.mrf.mxu0
    %v5063 = vpop.f32.mrf.mxu0
    %5064 = vdwg.mxu0
    %5065 = vmatprep.subr.bf16.mxu0 0
    %5066 = vmatpush1.bf16.msra.mxu0 %v4760
    %5067 = vmatprep.subr.bf16.mxu0 0
    %5068 = vmatpush1.bf16.msra.mxu0 %v4759
    %5069 = vmatprep.subr.bf16.mxu0 0
    %5070 = vmatpush1.bf16.msra.mxu0 %v4758
    %5071 = vmatprep.subr.bf16.mxu0 0
    %5072 = vmatpush1.bf16.msra.mxu0 %v4757
    %5073 = vmatprep.subr.bf16.mxu0 0
    %5074 = vmatpush1.bf16.msra.mxu0 %v4756
    %5075 = vmatprep.subr.bf16.mxu0 0
    %5076 = vmatpush1.bf16.msra.mxu0 %v4755
    %5077 = vmatprep.subr.bf16.mxu0 0
    %5078 = vmatpush1.bf16.msra.mxu0 %v4754
    %5079 = vmatprep.subr.bf16.mxu0 0
    %5080 = vmatpush1.bf16.msra.mxu0 %v4753
    %5081 = vmatprep.subr.bf16.mxu0 0
    %5082 = vmatpush2.bf16.msra.mxu0 %v4768
    %5083 = vmatprep.subr.bf16.mxu0 0
    %5084 = vmatpush2.bf16.msra.mxu0 %v4767
    %5085 = vmatprep.subr.bf16.mxu0 0
    %5086 = vmatpush2.bf16.msra.mxu0 %v4766
    %5087 = vmatprep.subr.bf16.mxu0 0
    %5088 = vmatpush2.bf16.msra.mxu0 %v4765
    %5089 = vmatprep.subr.bf16.mxu0 0
    %5090 = vmatpush2.bf16.msra.mxu0 %v4764
    %5091 = vmatprep.subr.bf16.mxu0 0
    %5092 = vmatpush2.bf16.msra.mxu0 %v4763
    %5093 = vmatprep.subr.bf16.mxu0 0
    %5094 = vmatpush2.bf16.msra.mxu0 %v4762
    %5095 = vmatprep.subr.bf16.mxu0 0
    %5096 = vmatpush2.bf16.msra.mxu0 %v4761
    %5097 = vmatprep.mubr.bf16.mxu0 %v3851
    %5098 = vmatmul.mubr.bf16.gmra.mxu0 %v3850
    %v5099 = vpop.f32.mrf.mxu0
    %v5100 = vadd.f32 %v5060, %v5099
    %v5101 = vpop.f32.mrf.mxu0
    %v5102 = vpop.f32.mrf.mxu0
    %v5103 = vpop.f32.mrf.mxu0
    %5104 = vdwg.mxu0
    %5105 = vmatprep.subr.bf16.mxu0 0
    %5106 = vmatpush1.bf16.msra.mxu0 %v4776
    %5107 = vmatprep.subr.bf16.mxu0 0
    %5108 = vmatpush1.bf16.msra.mxu0 %v4775
    %5109 = vmatprep.subr.bf16.mxu0 0
    %5110 = vmatpush1.bf16.msra.mxu0 %v4774
    %5111 = vmatprep.subr.bf16.mxu0 0
    %5112 = vmatpush1.bf16.msra.mxu0 %v4773
    %5113 = vmatprep.subr.bf16.mxu0 0
    %5114 = vmatpush1.bf16.msra.mxu0 %v4772
    %5115 = vmatprep.subr.bf16.mxu0 0
    %5116 = vmatpush1.bf16.msra.mxu0 %v4771
    %5117 = vmatprep.subr.bf16.mxu0 0
    %5118 = vmatpush1.bf16.msra.mxu0 %v4770
    %5119 = vmatprep.subr.bf16.mxu0 0
    %5120 = vmatpush1.bf16.msra.mxu0 %v4769
    %5121 = vmatprep.subr.bf16.mxu0 0
    %5122 = vmatpush2.bf16.msra.mxu0 %v4784
    %5123 = vmatprep.subr.bf16.mxu0 0
    %5124 = vmatpush2.bf16.msra.mxu0 %v4783
    %5125 = vmatprep.subr.bf16.mxu0 0
    %5126 = vmatpush2.bf16.msra.mxu0 %v4782
    %5127 = vmatprep.subr.bf16.mxu0 0
    %5128 = vmatpush2.bf16.msra.mxu0 %v4781
    %5129 = vmatprep.subr.bf16.mxu0 0
    %5130 = vmatpush2.bf16.msra.mxu0 %v4780
    %5131 = vmatprep.subr.bf16.mxu0 0
    %5132 = vmatpush2.bf16.msra.mxu0 %v4779
    %5133 = vmatprep.subr.bf16.mxu0 0
    %5134 = vmatpush2.bf16.msra.mxu0 %v4778
    %5135 = vmatprep.subr.bf16.mxu0 0
    %5136 = vmatpush2.bf16.msra.mxu0 %v4777
    %5137 = vmatprep.mubr.bf16.mxu0 %v3853
    %5138 = vmatmul.mubr.bf16.gmra.mxu0 %v3852
    %v5139 = vpop.f32.mrf.mxu0
    %v5140 = vadd.f32 %v5100, %v5139
    %v5141 = vpop.f32.mrf.mxu0
    %v5142 = vpop.f32.mrf.mxu0
    %v5143 = vpop.f32.mrf.mxu0
    %5144 = vdwg.mxu0
    %5145 = vmatprep.subr.bf16.mxu0 0
    %5146 = vmatpush1.bf16.msra.mxu0 %v4792
    %5147 = vmatprep.subr.bf16.mxu0 0
    %5148 = vmatpush1.bf16.msra.mxu0 %v4791
    %5149 = vmatprep.subr.bf16.mxu0 0
    %5150 = vmatpush1.bf16.msra.mxu0 %v4790
    %5151 = vmatprep.subr.bf16.mxu0 0
    %5152 = vmatpush1.bf16.msra.mxu0 %v4789
    %5153 = vmatprep.subr.bf16.mxu0 0
    %5154 = vmatpush1.bf16.msra.mxu0 %v4788
    %5155 = vmatprep.subr.bf16.mxu0 0
    %5156 = vmatpush1.bf16.msra.mxu0 %v4787
    %5157 = vmatprep.subr.bf16.mxu0 0
    %5158 = vmatpush1.bf16.msra.mxu0 %v4786
    %5159 = vmatprep.subr.bf16.mxu0 0
    %5160 = vmatpush1.bf16.msra.mxu0 %v4785
    %5161 = vmatprep.subr.bf16.mxu0 0
    %5162 = vmatpush2.bf16.msra.mxu0 %v4800
    %5163 = vmatprep.subr.bf16.mxu0 0
    %5164 = vmatpush2.bf16.msra.mxu0 %v4799
    %5165 = vmatprep.subr.bf16.mxu0 0
    %5166 = vmatpush2.bf16.msra.mxu0 %v4798
    %5167 = vmatprep.subr.bf16.mxu0 0
    %5168 = vmatpush2.bf16.msra.mxu0 %v4797
    %5169 = vmatprep.subr.bf16.mxu0 0
    %5170 = vmatpush2.bf16.msra.mxu0 %v4796
    %5171 = vmatprep.subr.bf16.mxu0 0
    %5172 = vmatpush2.bf16.msra.mxu0 %v4795
    %5173 = vmatprep.subr.bf16.mxu0 0
    %5174 = vmatpush2.bf16.msra.mxu0 %v4794
    %5175 = vmatprep.subr.bf16.mxu0 0
    %5176 = vmatpush2.bf16.msra.mxu0 %v4793
    %5177 = vmatprep.mubr.bf16.mxu0 %v3855
    %5178 = vmatmul.mubr.bf16.gmra.mxu0 %v3854
    %v5179 = vpop.f32.mrf.mxu0
    %v5180 = vadd.f32 %v5140, %v5179
    %v5181 = vpop.f32.mrf.mxu0
    %v5182 = vpop.f32.mrf.mxu0
    %v5183 = vpop.f32.mrf.mxu0
    %5184 = vdwg.mxu0
    %5185 = vmatprep.subr.bf16.mxu0 0
    %5186 = vmatpush1.bf16.msra.mxu0 %v4808
    %5187 = vmatprep.subr.bf16.mxu0 0
    %5188 = vmatpush1.bf16.msra.mxu0 %v4807
    %5189 = vmatprep.subr.bf16.mxu0 0
    %5190 = vmatpush1.bf16.msra.mxu0 %v4806
    %5191 = vmatprep.subr.bf16.mxu0 0
    %5192 = vmatpush1.bf16.msra.mxu0 %v4805
    %5193 = vmatprep.subr.bf16.mxu0 0
    %5194 = vmatpush1.bf16.msra.mxu0 %v4804
    %5195 = vmatprep.subr.bf16.mxu0 0
    %5196 = vmatpush1.bf16.msra.mxu0 %v4803
    %5197 = vmatprep.subr.bf16.mxu0 0
    %5198 = vmatpush1.bf16.msra.mxu0 %v4802
    %5199 = vmatprep.subr.bf16.mxu0 0
    %5200 = vmatpush1.bf16.msra.mxu0 %v4801
    %5201 = vmatprep.subr.bf16.mxu0 0
    %5202 = vmatpush2.bf16.msra.mxu0 %v4816
    %5203 = vmatprep.subr.bf16.mxu0 0
    %5204 = vmatpush2.bf16.msra.mxu0 %v4815
    %5205 = vmatprep.subr.bf16.mxu0 0
    %5206 = vmatpush2.bf16.msra.mxu0 %v4814
    %5207 = vmatprep.subr.bf16.mxu0 0
    %5208 = vmatpush2.bf16.msra.mxu0 %v4813
    %5209 = vmatprep.subr.bf16.mxu0 0
    %5210 = vmatpush2.bf16.msra.mxu0 %v4812
    %5211 = vmatprep.subr.bf16.mxu0 0
    %5212 = vmatpush2.bf16.msra.mxu0 %v4811
    %5213 = vmatprep.subr.bf16.mxu0 0
    %5214 = vmatpush2.bf16.msra.mxu0 %v4810
    %5215 = vmatprep.subr.bf16.mxu0 0
    %5216 = vmatpush2.bf16.msra.mxu0 %v4809
    %5217 = vmatprep.mubr.bf16.mxu0 %v3857
    %5218 = vmatmul.mubr.bf16.gmra.mxu0 %v3856
    %v5219 = vpop.f32.mrf.mxu0
    %v5220 = vadd.f32 %v5180, %v5219
    %v5221 = vpop.f32.mrf.mxu0
    %v5222 = vpop.f32.mrf.mxu0
    %v5223 = vpop.f32.mrf.mxu0
    %5224 = vdwg.mxu0
    %5225 = vmatprep.subr.bf16.mxu0 0
    %5226 = vmatpush1.bf16.msra.mxu0 %v4824
    %5227 = vmatprep.subr.bf16.mxu0 0
    %5228 = vmatpush1.bf16.msra.mxu0 %v4823
    %5229 = vmatprep.subr.bf16.mxu0 0
    %5230 = vmatpush1.bf16.msra.mxu0 %v4822
    %5231 = vmatprep.subr.bf16.mxu0 0
    %5232 = vmatpush1.bf16.msra.mxu0 %v4821
    %5233 = vmatprep.subr.bf16.mxu0 0
    %5234 = vmatpush1.bf16.msra.mxu0 %v4820
    %5235 = vmatprep.subr.bf16.mxu0 0
    %5236 = vmatpush1.bf16.msra.mxu0 %v4819
    %5237 = vmatprep.subr.bf16.mxu0 0
    %5238 = vmatpush1.bf16.msra.mxu0 %v4818
    %5239 = vmatprep.subr.bf16.mxu0 0
    %5240 = vmatpush1.bf16.msra.mxu0 %v4817
    %5241 = vmatprep.subr.bf16.mxu0 0
    %5242 = vmatpush2.bf16.msra.mxu0 %v4832
    %5243 = vmatprep.subr.bf16.mxu0 0
    %5244 = vmatpush2.bf16.msra.mxu0 %v4831
    %5245 = vmatprep.subr.bf16.mxu0 0
    %5246 = vmatpush2.bf16.msra.mxu0 %v4830
    %5247 = vmatprep.subr.bf16.mxu0 0
    %5248 = vmatpush2.bf16.msra.mxu0 %v4829
    %5249 = vmatprep.subr.bf16.mxu0 0
    %5250 = vmatpush2.bf16.msra.mxu0 %v4828
    %5251 = vmatprep.subr.bf16.mxu0 0
    %5252 = vmatpush2.bf16.msra.mxu0 %v4827
    %5253 = vmatprep.subr.bf16.mxu0 0
    %5254 = vmatpush2.bf16.msra.mxu0 %v4826
    %5255 = vmatprep.subr.bf16.mxu0 0
    %5256 = vmatpush2.bf16.msra.mxu0 %v4825
    %5257 = vmatprep.mubr.bf16.mxu0 %v3859
    %5258 = vmatmul.mubr.bf16.gmra.mxu0 %v3858
    %v5259 = vpop.f32.mrf.mxu0
    %v5260 = vadd.f32 %v5220, %v5259
    %v5261 = vpop.f32.mrf.mxu0
    %v5262 = vpop.f32.mrf.mxu0
    %v5263 = vpop.f32.mrf.mxu0
    %5264 = vdwg.mxu0
    %5265 = vmatprep.subr.bf16.mxu0 0
    %5266 = vmatpush1.bf16.msra.mxu0 %v4840
    %5267 = vmatprep.subr.bf16.mxu0 0
    %5268 = vmatpush1.bf16.msra.mxu0 %v4839
    %5269 = vmatprep.subr.bf16.mxu0 0
    %5270 = vmatpush1.bf16.msra.mxu0 %v4838
    %5271 = vmatprep.subr.bf16.mxu0 0
    %5272 = vmatpush1.bf16.msra.mxu0 %v4837
    %5273 = vmatprep.subr.bf16.mxu0 0
    %5274 = vmatpush1.bf16.msra.mxu0 %v4836
    %5275 = vmatprep.subr.bf16.mxu0 0
    %5276 = vmatpush1.bf16.msra.mxu0 %v4835
    %5277 = vmatprep.subr.bf16.mxu0 0
    %5278 = vmatpush1.bf16.msra.mxu0 %v4834
    %5279 = vmatprep.subr.bf16.mxu0 0
    %5280 = vmatpush1.bf16.msra.mxu0 %v4833
    %5281 = vmatprep.subr.bf16.mxu0 0
    %5282 = vmatpush2.bf16.msra.mxu0 %v4848
    %5283 = vmatprep.subr.bf16.mxu0 0
    %5284 = vmatpush2.bf16.msra.mxu0 %v4847
    %5285 = vmatprep.subr.bf16.mxu0 0
    %5286 = vmatpush2.bf16.msra.mxu0 %v4846
    %5287 = vmatprep.subr.bf16.mxu0 0
    %5288 = vmatpush2.bf16.msra.mxu0 %v4845
    %5289 = vmatprep.subr.bf16.mxu0 0
    %5290 = vmatpush2.bf16.msra.mxu0 %v4844
    %5291 = vmatprep.subr.bf16.mxu0 0
    %5292 = vmatpush2.bf16.msra.mxu0 %v4843
    %5293 = vmatprep.subr.bf16.mxu0 0
    %5294 = vmatpush2.bf16.msra.mxu0 %v4842
    %5295 = vmatprep.subr.bf16.mxu0 0
    %5296 = vmatpush2.bf16.msra.mxu0 %v4841
    %5297 = vmatprep.mubr.bf16.mxu0 %v3861
    %5298 = vmatmul.mubr.bf16.gmra.mxu0 %v3860
    %v5299 = vpop.f32.mrf.mxu0
    %v5300 = vadd.f32 %v5260, %v5299
    %v5301 = vpop.f32.mrf.mxu0
    %v5302 = vpop.f32.mrf.mxu0
    %v5303 = vpop.f32.mrf.mxu0
    %5304 = vdwg.mxu0
    %5305 = vmatprep.subr.bf16.mxu0 0
    %5306 = vmatpush1.bf16.msra.mxu0 %v4856
    %5307 = vmatprep.subr.bf16.mxu0 0
    %5308 = vmatpush1.bf16.msra.mxu0 %v4855
    %5309 = vmatprep.subr.bf16.mxu0 0
    %5310 = vmatpush1.bf16.msra.mxu0 %v4854
    %5311 = vmatprep.subr.bf16.mxu0 0
    %5312 = vmatpush1.bf16.msra.mxu0 %v4853
    %5313 = vmatprep.subr.bf16.mxu0 0
    %5314 = vmatpush1.bf16.msra.mxu0 %v4852
    %5315 = vmatprep.subr.bf16.mxu0 0
    %5316 = vmatpush1.bf16.msra.mxu0 %v4851
    %5317 = vmatprep.subr.bf16.mxu0 0
    %5318 = vmatpush1.bf16.msra.mxu0 %v4850
    %5319 = vmatprep.subr.bf16.mxu0 0
    %5320 = vmatpush1.bf16.msra.mxu0 %v4849
    %5321 = vmatprep.subr.bf16.mxu0 0
    %5322 = vmatpush2.bf16.msra.mxu0 %v4864
    %5323 = vmatprep.subr.bf16.mxu0 0
    %5324 = vmatpush2.bf16.msra.mxu0 %v4863
    %5325 = vmatprep.subr.bf16.mxu0 0
    %5326 = vmatpush2.bf16.msra.mxu0 %v4862
    %5327 = vmatprep.subr.bf16.mxu0 0
    %5328 = vmatpush2.bf16.msra.mxu0 %v4861
    %5329 = vmatprep.subr.bf16.mxu0 0
    %5330 = vmatpush2.bf16.msra.mxu0 %v4860
    %5331 = vmatprep.subr.bf16.mxu0 0
    %5332 = vmatpush2.bf16.msra.mxu0 %v4859
    %5333 = vmatprep.subr.bf16.mxu0 0
    %5334 = vmatpush2.bf16.msra.mxu0 %v4858
    %5335 = vmatprep.subr.bf16.mxu0 0
    %5336 = vmatpush2.bf16.msra.mxu0 %v4857
    %5337 = vmatprep.mubr.bf16.mxu0 %v3863
    %5338 = vmatmul.mubr.bf16.gmra.mxu0 %v3862
    %v5339 = vpop.f32.mrf.mxu0
    %v5340 = vadd.f32 %v5300, %v5339
    %v5341 = vpop.f32.mrf.mxu0
    %v5342 = vpop.f32.mrf.mxu0
    %v5343 = vpop.f32.mrf.mxu0
    %5344 = vdwg.mxu0
    %5345 = vmatprep.subr.bf16.mxu0 0
    %5346 = vmatpush1.bf16.msra.mxu0 %v4872
    %5347 = vmatprep.subr.bf16.mxu0 0
    %5348 = vmatpush1.bf16.msra.mxu0 %v4871
    %5349 = vmatprep.subr.bf16.mxu0 0
    %5350 = vmatpush1.bf16.msra.mxu0 %v4870
    %5351 = vmatprep.subr.bf16.mxu0 0
    %5352 = vmatpush1.bf16.msra.mxu0 %v4869
    %5353 = vmatprep.subr.bf16.mxu0 0
    %5354 = vmatpush1.bf16.msra.mxu0 %v4868
    %5355 = vmatprep.subr.bf16.mxu0 0
    %5356 = vmatpush1.bf16.msra.mxu0 %v4867
    %5357 = vmatprep.subr.bf16.mxu0 0
    %5358 = vmatpush1.bf16.msra.mxu0 %v4866
    %5359 = vmatprep.subr.bf16.mxu0 0
    %5360 = vmatpush1.bf16.msra.mxu0 %v4865
    %5361 = vmatprep.subr.bf16.mxu0 0
    %5362 = vmatpush2.bf16.msra.mxu0 %v4880
    %5363 = vmatprep.subr.bf16.mxu0 0
    %5364 = vmatpush2.bf16.msra.mxu0 %v4879
    %5365 = vmatprep.subr.bf16.mxu0 0
    %5366 = vmatpush2.bf16.msra.mxu0 %v4878
    %5367 = vmatprep.subr.bf16.mxu0 0
    %5368 = vmatpush2.bf16.msra.mxu0 %v4877
    %5369 = vmatprep.subr.bf16.mxu0 0
    %5370 = vmatpush2.bf16.msra.mxu0 %v4876
    %5371 = vmatprep.subr.bf16.mxu0 0
    %5372 = vmatpush2.bf16.msra.mxu0 %v4875
    %5373 = vmatprep.subr.bf16.mxu0 0
    %5374 = vmatpush2.bf16.msra.mxu0 %v4874
    %5375 = vmatprep.subr.bf16.mxu0 0
    %5376 = vmatpush2.bf16.msra.mxu0 %v4873
    %5377 = vmatprep.mubr.bf16.mxu0 %v3865
    %5378 = vmatmul.mubr.bf16.gmra.mxu0 %v3864
    %v5379 = vpop.f32.mrf.mxu0
    %v5380 = vadd.f32 %v5340, %v5379
    %v5381 = vpop.f32.mrf.mxu0
    %v5382 = vpop.f32.mrf.mxu0
    %v5383 = vpop.f32.mrf.mxu0
    %5384 = vdwg.mxu0
    %v5385 = vmax.f32 %v5380, 0.0
    %v5386 = vpack.c.bf16 %v5385, %v5385
    %v5387 = vld [vmem:[%s7] sm:$0xf]
    %v5388 = vld [vmem:[%s7 + $0x4] sm:$0xf]
    %v5389 = vld [vmem:[%s7 + $0x8] sm:$0xf]
    %v5390 = vld [vmem:[%s7 + $0xc] sm:$0xf]
    %v5391 = vld [vmem:[%s7 + $0x10] sm:$0xf]
    %v5392 = vld [vmem:[%s7 + $0x14] sm:$0xf]
    %v5393 = vld [vmem:[%s7 + $0x18] sm:$0xf]
    %v5394 = vld [vmem:[%s7 + $0x1c] sm:$0xf]
    %v5395 = vld [vmem:[%s7 + $0x20] sm:$0xf]
    %v5396 = vld [vmem:[%s7 + $0x24] sm:$0xf]
    %v5397 = vld [vmem:[%s7 + $0x28] sm:$0xf]
    %v5398 = vld [vmem:[%s7 + $0x2c] sm:$0xf]
    %v5399 = vld [vmem:[%s7 + $0x30] sm:$0xf]
    %v5400 = vld [vmem:[%s7 + $0x34] sm:$0xf]
    %v5401 = vld [vmem:[%s7 + $0x38] sm:$0xf]
    %v5402 = vld [vmem:[%s7 + $0x3c] sm:$0xf]
    %v5403 = vld [vmem:[%s8] sm:$0x1]
    %v5405 = vlaneseq
    %v5406 = vshrl.u32 %v5405, 7
    %v5407 = vsub.s32 0, %v5406
    %v5408 = vrot.slane %v5403, %v5407
    %v5426 = vunpack.c.l.b16 %v5387
    %v5427 = vunpack.c.l.b16 %v5388
    %v5428 = vunpack.c.l.b16 %v5389
    %v5429 = vunpack.c.l.b16 %v5390
    %v5430 = vunpack.c.l.b16 %v5391
    %v5431 = vunpack.c.l.b16 %v5392
    %v5432 = vunpack.c.l.b16 %v5393
    %v5433 = vunpack.c.l.b16 %v5394
    %v5434 = vunpack.c.l.b16 %v5395
    %v5435 = vunpack.c.l.b16 %v5396
    %v5436 = vunpack.c.l.b16 %v5397
    %v5437 = vunpack.c.l.b16 %v5398
    %v5438 = vunpack.c.l.b16 %v5399
    %v5439 = vunpack.c.l.b16 %v5400
    %v5440 = vunpack.c.l.b16 %v5401
    %v5441 = vunpack.c.l.b16 %v5402
    %v5442 = vpack.c.b16 %v5427, %v5426
    %v5443 = vpack.c.b16 %v5429, %v5428
    %v5444 = vpack.c.b16 %v5431, %v5430
    %v5445 = vpack.c.b16 %v5433, %v5432
    %v5446 = vpack.c.b16 %v5435, %v5434
    %v5447 = vpack.c.b16 %v5437, %v5436
    %v5448 = vpack.c.b16 %v5439, %v5438
    %v5449 = vpack.c.b16 %v5441, %v5440
    %5458 = vmatprep.subr.bf16.mxu0 0
    %5459 = vmatpush1.bf16.msra.mxu0 %v5449
    %5460 = vmatprep.subr.bf16.mxu0 0
    %5461 = vmatpush1.bf16.msra.mxu0 %v5448
    %5462 = vmatprep.subr.bf16.mxu0 0
    %5463 = vmatpush1.bf16.msra.mxu0 %v5447
    %5464 = vmatprep.subr.bf16.mxu0 0
    %5465 = vmatpush1.bf16.msra.mxu0 %v5446
    %5466 = vmatprep.subr.bf16.mxu0 0
    %5467 = vmatpush1.bf16.msra.mxu0 %v5445
    %5468 = vmatprep.subr.bf16.mxu0 0
    %5469 = vmatpush1.bf16.msra.mxu0 %v5444
    %5470 = vmatprep.subr.bf16.mxu0 0
    %5471 = vmatpush1.bf16.msra.mxu0 %v5443
    %5472 = vmatprep.subr.bf16.mxu0 0
    %5473 = vmatpush1.bf16.msra.mxu0 %v5442
    %5474 = vmatprep.subr.bf16.mxu0 0
    %5475 = vmatpush2.bf16.msra.mxu0 0
    %5476 = vmatprep.subr.bf16.mxu0 0
    %5477 = vmatpush2.bf16.msra.mxu0 0
    %5478 = vmatprep.subr.bf16.mxu0 0
    %5479 = vmatpush2.bf16.msra.mxu0 0
    %5480 = vmatprep.subr.bf16.mxu0 0
    %5481 = vmatpush2.bf16.msra.mxu0 0
    %5482 = vmatprep.subr.bf16.mxu0 0
    %5483 = vmatpush2.bf16.msra.mxu0 0
    %5484 = vmatprep.subr.bf16.mxu0 0
    %5485 = vmatpush2.bf16.msra.mxu0 0
    %5486 = vmatprep.subr.bf16.mxu0 0
    %5487 = vmatpush2.bf16.msra.mxu0 0
    %5488 = vmatprep.subr.bf16.mxu0 0
    %5489 = vmatpush2.bf16.msra.mxu0 0
    %5490 = vmatprep.mubr.bf16.mxu0 0
    %5491 = vmatmul.mubr.bf16.gmra.mxu0 %v5386
    %v5492 = vpop.f32.mrf.mxu0
    %v5493 = vadd.f32 %v5408, %v5492
    %v5494 = vpop.f32.mrf.mxu0
    %v5495 = vpop.f32.mrf.mxu0
    %v5496 = vpop.f32.mrf.mxu0
    %5497 = vdwg.mxu0
    %vm5498 = vcmask 41984
    %5499 = vst.msk [vmem:[#allocation7] sm:$0x3] %vm5498, %v5493
    // Predicated region
    $region42: #{convnet_forward.1} parent=1 // pred_check
      _
    $region43: #{convnet_forward.1} parent=1 // pred_check_branch
      %5501 = sbr.rel (0) target = $region45
    $region44: #{convnet_forward.1} parent=1 // pred_region
      %s5503 = ssub.s32 32, 32
      %5504 = vsyncadd [#allocation6], %s5503
      %s5506 = sshll.u32 [#allocation7], 4
      %s5507 = int_to_ptr.vmem [resolvable:$true] %s5506
      %5509 = dma.vmem_to_hbm [thread:$0]  %s5507, 32, %s9, [#allocation6]
    $region45: #{convnet_forward.1} parent=1 // pred_fallthru
      _
    // Predicated region
    $region46: #{convnet_forward.1} parent=1 // pred_check
      _
    $region47: #{convnet_forward.1} parent=1 // pred_check_branch
      %5511 = sbr.rel (0) target = $region49
    $region48: #{convnet_forward.1} parent=1 // pred_region
      %5512 = dma.done [#allocation6], 32
    $region49: #{convnet_forward.1} parent=1 // pred_fallthru
      _
    %5513 = vsyncpa [#allocation5], 1
    %5514 = vsyncpa [#allocation6], 1

</llo_original>
